<compile_context>
chip_gen: v7x
topology: tpu7x:2x2x1
jax: 0.10.0
libtpu: 0.0.40
codegen_flags: <defaults>
</compile_context>

<pallas_src>
import functools
import math

import jax
import jax.numpy as jnp
from jax.experimental import pallas as pl
from jax.experimental.pallas import tpu as pltpu

LANE = 128
_EPS = 1e-5


def _round_up(x, m):
    return (x + m - 1) // m * m


# ---------------------------------------------------------------------------
# Fused 3x3 Conv + bias + InstanceNorm(affine) + ReLU kernel
# ---------------------------------------------------------------------------
def _conv3x3_in_relu_kernel(x_ref, w_ref, b_ref, g_ref, bt_ref, mask_ref,
                            o_ref, xp_ref, col_ref, *, H, W, eps):
    """One batch element x one Cout tile.

    x_ref   : (1, H, W, Cin)        bf16 input (channels padded to 128k)
    w_ref   : (9*Cin, TCout)        bf16 weights, rows ordered (dy*3+dx, cin)
    b_ref   : (1, TCout)            f32 conv bias
    g_ref   : (1, TCout)            f32 InstanceNorm gamma
    bt_ref  : (1, TCout)            f32 InstanceNorm beta
    mask_ref: (Mpad, 1)             f32 validity mask over flattened rows
    o_ref   : (1, H, W, TCout)      bf16 output
    xp_ref  : (Ppad, Cin) f32       zero-padded input, flattened over (H+2,W+2)
    col_ref : (Mpad, 9*Cin) bf16    im2col slab
    """
    Cin = x_ref.shape[-1]
    Wp = W + 2
    Mpad = col_ref.shape[0]

    # 1) Build the zero-padded input in VMEM (halo handled in-kernel; no HBM pad).
    xp_ref[...] = jnp.zeros_like(xp_ref)
    for h in range(H):
        xp_ref[pl.ds((h + 1) * Wp + 1, W), :] = (
            x_ref[0, h, :, :].astype(jnp.float32))

    # 2) im2col slab: tap t = dy*3+dx occupies lane block [t*Cin, (t+1)*Cin).
    #    Each tap is one contiguous sublane-shifted copy (no reshapes/relayouts).
    for dy in range(3):
        for dx in range(3):
            t = dy * 3 + dx
            col_ref[:, t * Cin:(t + 1) * Cin] = (
                xp_ref[pl.ds(dy * Wp + dx, Mpad), :].astype(jnp.bfloat16))

    # 3) Single wide-K matmul on the MXU (bf16 in, f32 accumulate) + bias.
    acc = jnp.dot(col_ref[...], w_ref[...],
                  preferred_element_type=jnp.float32) + b_ref[0]

    # 4) One-pass InstanceNorm statistics (sum & sum-of-squares) in f32 over
    #    the H*W valid pixels (the 2 extra full-width columns are masked out).
    valid = mask_ref[...]                       # (Mpad, 1), 1.0 on valid rows
    am = acc * valid
    inv_cnt = 1.0 / float(H * W)
    mean = jnp.sum(am, axis=0, keepdims=True) * inv_cnt
    var = jnp.sum(am * am, axis=0, keepdims=True) * inv_cnt - mean * mean
    var = jnp.maximum(var, 0.0)
    scale = g_ref[0] * jax.lax.rsqrt(var + eps)
    shift = bt_ref[0] - mean * scale
    y = jnp.maximum(acc * scale + shift, 0.0)

    # 5) Store only the valid columns of each image row (lane-dense Cout).
    for h in range(H):
        o_ref[0, h, :, :] = y[h * Wp:h * Wp + W, :].astype(o_ref.dtype)


@jax.jit
def _conv3x3_in_relu_pallas(x, w, b, g, bt):
    """x: (N,H,W,Cin_p) bf16 -> (N,H,W,Cout_p) bf16."""
    N, H, W, Cin_p = x.shape
    Cout_p = w.shape[1]
    Wp = W + 2
    M = H * Wp
    Mpad = _round_up(max(M, 8), 8)
    P_pad = _round_up((H + 2) * Wp + 16, 8)
    TCout = min(Cout_p, 256)
    n_ct = Cout_p // TCout

    # Validity mask over the full-width flattened output rows.
    r = jnp.arange(Mpad, dtype=jnp.int32)
    mask = (((r % Wp) < W) & (r < M)).astype(jnp.float32).reshape(Mpad, 1)

    # VMEM budget: double-buffered operands + scratch + f32 temporaries, with
    # headroom; capped safely below v7x's 64 MiB physical VMEM.
    vmem_bytes = 2 * (H * W * Cin_p * 2 + 9 * Cin_p * TCout * 2
                      + H * W * TCout * 2 + 3 * TCout * 4 + Mpad * 4)
    vmem_bytes += P_pad * Cin_p * 4 + Mpad * 9 * Cin_p * 2 + 2 * Mpad * TCout * 4
    vmem_limit = int(min(max(vmem_bytes + (8 << 20), 20 << 20), 56 << 20))

    kern = functools.partial(_conv3x3_in_relu_kernel, H=H, W=W, eps=_EPS)
    return pl.pallas_call(
        kern,
        out_shape=jax.ShapeDtypeStruct((N, H, W, Cout_p), jnp.bfloat16),
        grid=(N, n_ct),
        in_specs=[
            pl.BlockSpec((1, H, W, Cin_p), lambda n, j: (n, 0, 0, 0)),
            pl.BlockSpec((9 * Cin_p, TCout), lambda n, j: (0, j)),
            pl.BlockSpec((1, TCout), lambda n, j: (0, j)),
            pl.BlockSpec((1, TCout), lambda n, j: (0, j)),
            pl.BlockSpec((1, TCout), lambda n, j: (0, j)),
            pl.BlockSpec((Mpad, 1), lambda n, j: (0, 0)),
        ],
        out_specs=pl.BlockSpec((1, H, W, TCout), lambda n, j: (n, 0, 0, j)),
        scratch_shapes=[
            pltpu.VMEM((P_pad, Cin_p), jnp.float32),       # padded input
            pltpu.VMEM((Mpad, 9 * Cin_p), jnp.bfloat16),   # im2col slab
        ],
        compiler_params=pltpu.CompilerParams(
            dimension_semantics=("parallel", "parallel"),
            vmem_limit_bytes=vmem_limit),
    )(x, w, b, g, bt, mask)


# ---------------------------------------------------------------------------
# Final 1x1 Conv + tanh kernel
# ---------------------------------------------------------------------------
def _conv1x1_tanh_kernel(x_ref, w_ref, b_ref, o_ref):
    H, W, Cin = x_ref.shape[1], x_ref.shape[2], x_ref.shape[3]
    Cout = o_ref.shape[-1]
    xv = x_ref[0].reshape(H * W, Cin)
    acc = jnp.dot(xv, w_ref[...], preferred_element_type=jnp.float32) + b_ref[0]
    o_ref[0] = jnp.tanh(acc).reshape(H, W, Cout)


@jax.jit
def _conv1x1_tanh_pallas(x, w, b):
    N, H, W, Cin_p = x.shape
    Cout_p = w.shape[1]
    return pl.pallas_call(
        _conv1x1_tanh_kernel,
        out_shape=jax.ShapeDtypeStruct((N, H, W, Cout_p), jnp.float32),
        grid=(N,),
        in_specs=[
            pl.BlockSpec((1, H, W, Cin_p), lambda n: (n, 0, 0, 0)),
            pl.BlockSpec((Cin_p, Cout_p), lambda n: (0, 0)),
            pl.BlockSpec((1, Cout_p), lambda n: (0, 0)),
        ],
        out_specs=pl.BlockSpec((1, H, W, Cout_p), lambda n: (n, 0, 0, 0)),
        compiler_params=pltpu.CompilerParams(
            dimension_semantics=("parallel",),
            vmem_limit_bytes=32 << 20),
    )(x, w, b)


# ---------------------------------------------------------------------------
# Layer wrappers (carry true-channel NHWC bf16 activations)
# ---------------------------------------------------------------------------
def pallas_conv3x3_in_relu(x, p):
    assert x.shape[-1] == p["cin"], (x.shape, p["cin"])
    cin_p = _round_up(p["cin"], LANE)
    if p["cin"] < cin_p:
        x = jnp.pad(x, ((0, 0), (0, 0), (0, 0), (0, cin_p - p["cin"])))
    y = _conv3x3_in_relu_pallas(x, p["w"], p["b"], p["g"], p["bt"])
    if p["cout"] < y.shape[-1]:
        y = y[..., :p["cout"]]
    return y


def pallas_conv1x1_tanh(x, p):
    assert x.shape[-1] == p["cin"], (x.shape, p["cin"])
    cin_p = _round_up(p["cin"], LANE)
    if p["cin"] < cin_p:
        x = jnp.pad(x, ((0, 0), (0, 0), (0, 0), (0, cin_p - p["cin"])))
    y = _conv1x1_tanh_pallas(x, p["w"], p["b"])
    return y[..., :p["cout"]]


# ---------------------------------------------------------------------------
# U-Net plumbing (pure data movement, done with jnp in the wrapper)
# ---------------------------------------------------------------------------
def _maxpool2x2(x):
    n, h, w, c = x.shape
    return x.reshape(n, h // 2, 2, w // 2, 2, c).max(axis=(2, 4))


def _upsample2x(x):                       # nn.Upsample(scale_factor=2), nearest
    return jnp.repeat(jnp.repeat(x, 2, axis=1), 2, axis=2)


def _block(x, layers, layer_fn):
    for p in layers:
        x = layer_fn(x, p)
    return x


def unet_forward(x_nchw, params, conv_fn, conv1x1_fn):
    x = jnp.transpose(x_nchw, (0, 2, 3, 1)).astype(jnp.bfloat16)     # NCHW->NHWC
    x1 = _block(x, params["Conv1"], conv_fn)
    x2 = _block(_maxpool2x2(x1), params["Conv2"], conv_fn)
    x3 = _block(_maxpool2x2(x2), params["Conv3"], conv_fn)
    x4 = _block(_maxpool2x2(x3), params["Conv4"], conv_fn)
    x5 = _block(_maxpool2x2(x4), params["Conv5"], conv_fn)

    d5 = _block(_upsample2x(x5), params["Up5"], conv_fn)
    d5 = _block(jnp.concatenate([x4, d5], axis=-1), params["Up_conv5"], conv_fn)
    d4 = _block(_upsample2x(d5), params["Up4"], conv_fn)
    d4 = _block(jnp.concatenate([x3, d4], axis=-1), params["Up_conv4"], conv_fn)
    d3 = _block(_upsample2x(d4), params["Up3"], conv_fn)
    d3 = _block(jnp.concatenate([x2, d3], axis=-1), params["Up_conv3"], conv_fn)
    d2 = _block(_upsample2x(d3), params["Up2"], conv_fn)
    d2 = _block(jnp.concatenate([x1, d2], axis=-1), params["Up_conv2"], conv_fn)

    d1 = conv1x1_fn(d2, params["Conv_1x1"])
    return jnp.transpose(d1, (0, 3, 1, 2))                           # NHWC->NCHW


# ---------------------------------------------------------------------------
# Parameter construction (PyTorch-style init, pre-packed for the kernels)
# ---------------------------------------------------------------------------
def _init_conv3x3(key, cin, cout):
    k1, k2, k3, k4 = jax.random.split(key, 4)
    bound = 1.0 / math.sqrt(cin * 9.0)
    w = jax.random.uniform(k1, (3, 3, cin, cout), jnp.float32, -bound, bound)
    b = jax.random.uniform(k2, (cout,), jnp.float32, -bound, bound)
    g = jax.random.uniform(k3, (cout,), jnp.float32, 0.5, 1.5)
    bt = jax.random.uniform(k4, (cout,), jnp.float32, -0.5, 0.5)
    cin_p, cout_p = _round_up(cin, LANE), _round_up(cout, LANE)
    wp = jnp.zeros((3, 3, cin_p, cout_p), jnp.float32).at[:, :, :cin, :cout].set(w)
    wp = wp.reshape(9 * cin_p, cout_p).astype(jnp.bfloat16)
    bp = jnp.zeros((1, cout_p), jnp.float32).at[0, :cout].set(b)
    gp = jnp.zeros((1, cout_p), jnp.float32).at[0, :cout].set(g)
    btp = jnp.zeros((1, cout_p), jnp.float32).at[0, :cout].set(bt)
    return dict(cin=cin, cout=cout, w=wp, b=bp, g=gp, bt=btp,
                w_raw=w, b_raw=b, g_raw=g, bt_raw=bt)


def _init_conv1x1(key, cin, cout):
    k1, k2 = jax.random.split(key)
    bound = 1.0 / math.sqrt(float(cin))
    w = jax.random.uniform(k1, (cin, cout), jnp.float32, -bound, bound)
    b = jax.random.uniform(k2, (cout,), jnp.float32, -bound, bound)
    cin_p, cout_p = _round_up(cin, LANE), _round_up(cout, LANE)
    wp = jnp.zeros((cin_p, cout_p), jnp.float32).at[:cin, :cout].set(w)
    wp = wp.astype(jnp.bfloat16)
    bp = jnp.zeros((1, cout_p), jnp.float32).at[0, :cout].set(b)
    return dict(cin=cin, cout=cout, w=wp, b=bp, w_raw=w, b_raw=b)


def init_unet_params(key, in_ch, out_ch):
    keys = iter(jax.random.split(key, 24))

    def cb(cin, cout):
        return [_init_conv3x3(next(keys), cin, cout),
                _init_conv3x3(next(keys), cout, cout)]

    def uc(cin, cout):
        return [_init_conv3x3(next(keys), cin, cout)]

    return {
        "Conv1": cb(in_ch, 64), "Conv2": cb(64, 128), "Conv3": cb(128, 256),
        "Conv4": cb(256, 512), "Conv5": cb(512, 1024),
        "Up5": uc(1024, 512), "Up_conv5": cb(1024, 512),
        "Up4": uc(512, 256), "Up_conv4": cb(512, 256),
        "Up3": uc(256, 128), "Up_conv3": cb(256, 128),
        "Up2": uc(128, 64), "Up_conv2": cb(128, 64),
        "Conv_1x1": _init_conv1x1(next(keys), 64, out_ch),
    }


# ---------------------------------------------------------------------------
# Pure-JAX reference layers (same bf16/f32 dtype flow) for correctness check
# ---------------------------------------------------------------------------
def ref_conv3x3_in_relu(x, p):
    w = p["w_raw"].astype(jnp.bfloat16)
    y = jax.lax.conv_general_dilated(
        x, w, window_strides=(1, 1), padding="SAME",
        dimension_numbers=("NHWC", "HWIO", "NHWC"),
        preferred_element_type=jnp.float32)
    y = y + p["b_raw"]
    mean = jnp.mean(y, axis=(1, 2), keepdims=True)
    var = jnp.mean(jnp.square(y - mean), axis=(1, 2), keepdims=True)
    y = (y - mean) * jax.lax.rsqrt(var + _EPS) * p["g_raw"] + p["bt_raw"]
    return jnp.maximum(y, 0.0).astype(jnp.bfloat16)


def ref_conv1x1_tanh(x, p):
    n, h, w, c = x.shape
    wm = p["w_raw"].astype(jnp.bfloat16)
    y = jnp.dot(x.reshape(n * h * w, c), wm,
                preferred_element_type=jnp.float32) + p["b_raw"]
    return jnp.tanh(y).reshape(n, h, w, p["cout"])


# ---------------------------------------------------------------------------
if __name__ == "__main__":
    N, IN_CH, OUT_CH, H, W = 2, 4, 3, 16, 16

    key = jax.random.PRNGKey(0)
    kx, kp = jax.random.split(key)
    x = jax.random.normal(kx, (N, IN_CH, H, W), jnp.float32)   # NCHW (PyTorch)
    params = init_unet_params(kp, IN_CH, OUT_CH)

    out = unet_forward(x, params, pallas_conv3x3_in_relu, pallas_conv1x1_tanh)
    out = jax.block_until_ready(out)

    ref = unet_forward(x, params, ref_conv3x3_in_relu, ref_conv1x1_tanh)
    ref = jax.block_until_ready(ref)

    assert out.shape == (N, OUT_CH, H, W), out.shape
    assert bool(jnp.isfinite(out).all()), "non-finite values in kernel output"
    err = float(jnp.max(jnp.abs(out - ref)))
    assert err < 5e-2, f"max abs err vs reference: {err}"
    print("KERNEL_OK")
</pallas_src>

<mosaic_0001>
module attributes {stable_mosaic.version = 11 : i64} {
  func.func @_conv3x3_in_relu_kernel(%arg0: i32, %arg1: i32, %arg2: memref<1x16x16x128xbf16, #tpu.memory_space<vmem>>, %arg3: memref<1152x128xbf16, #tpu.memory_space<vmem>>, %arg4: memref<1x128xf32, #tpu.memory_space<vmem>>, %arg5: memref<1x128xf32, #tpu.memory_space<vmem>>, %arg6: memref<1x128xf32, #tpu.memory_space<vmem>>, %arg7: memref<288x1xf32, #tpu.memory_space<vmem>>, %arg8: memref<1x16x16x128xbf16, #tpu.memory_space<vmem>>, %arg9: memref<344x128xf32, #tpu.memory_space<vmem>>, %arg10: memref<288x1152xbf16, #tpu.memory_space<vmem>>) attributes {dimension_semantics = [#tpu.dimension_semantics<parallel>, #tpu.dimension_semantics<parallel>], iteration_bounds = array<i64: 2, 1>, scalar_prefetch = 0 : i64, scratch_operands = 2 : i64, tpu.core_type = #tpu.core_type<tc>, window_params = [{transform_indices = @transform_0, window_bounds = array<i64: 1, 16, 16, 128>}, {transform_indices = @transform_1, window_bounds = array<i64: 1152, 128>}, {transform_indices = @transform_2, window_bounds = array<i64: 1, 128>}, {transform_indices = @transform_3, window_bounds = array<i64: 1, 128>}, {transform_indices = @transform_4, window_bounds = array<i64: 1, 128>}, {pipeline_mode = #tpu.pipeline_mode<synchronous>, transform_indices = @transform_5, window_bounds = array<i64: 288, 1>}, {transform_indices = @transform_6, window_bounds = array<i64: 1, 16, 16, 128>}]} {
    %cst = arith.constant 0.000000e+00 : f32
    %0 = vector.broadcast %cst : f32 to vector<344x128xf32>
    %c0 = arith.constant 0 : index
    %c0_0 = arith.constant 0 : index
    %1 = vector.load %arg9[%c0, %c0_0] : memref<344x128xf32, #tpu.memory_space<vmem>>, vector<344x128xf32>
    tpu.vector_store %arg9[%c0, %c0_0], %0 {strides = array<i32>} : memref<344x128xf32, #tpu.memory_space<vmem>>, vector<344x128xf32>,
    %c0_1 = arith.constant 0 : index
    %c0_2 = arith.constant 0 : index
    %c0_3 = arith.constant 0 : index
    %c0_4 = arith.constant 0 : index
    %2 = vector.load %arg2[%c0_1, %c0_2, %c0_3, %c0_4] : memref<1x16x16x128xbf16, #tpu.memory_space<vmem>>, vector<1x1x16x128xbf16>
    %3 = vector.shape_cast %2 : vector<1x1x16x128xbf16> to vector<16x128xbf16>
    %4 = arith.extf %3 : vector<16x128xbf16> to vector<16x128xf32>
    %c19 = arith.constant 19 : index
    %c0_5 = arith.constant 0 : index
    %5 = vector.load %arg9[%c19, %c0_5] : memref<344x128xf32, #tpu.memory_space<vmem>>, vector<16x128xf32>
    tpu.vector_store %arg9[%c19, %c0_5], %4 {strides = array<i32>} : memref<344x128xf32, #tpu.memory_space<vmem>>, vector<16x128xf32>,
    %c0_6 = arith.constant 0 : index
    %c1 = arith.constant 1 : index
    %c0_7 = arith.constant 0 : index
    %c0_8 = arith.constant 0 : index
    %6 = vector.load %arg2[%c0_6, %c1, %c0_7, %c0_8] : memref<1x16x16x128xbf16, #tpu.memory_space<vmem>>, vector<1x1x16x128xbf16>
    %7 = vector.shape_cast %6 : vector<1x1x16x128xbf16> to vector<16x128xbf16>
    %8 = arith.extf %7 : vector<16x128xbf16> to vector<16x128xf32>
    %c37 = arith.constant 37 : index
    %c0_9 = arith.constant 0 : index
    %9 = vector.load %arg9[%c37, %c0_9] : memref<344x128xf32, #tpu.memory_space<vmem>>, vector<16x128xf32>
    tpu.vector_store %arg9[%c37, %c0_9], %8 {strides = array<i32>} : memref<344x128xf32, #tpu.memory_space<vmem>>, vector<16x128xf32>,
    %c0_10 = arith.constant 0 : index
    %c2 = arith.constant 2 : index
    %c0_11 = arith.constant 0 : index
    %c0_12 = arith.constant 0 : index
    %10 = vector.load %arg2[%c0_10, %c2, %c0_11, %c0_12] : memref<1x16x16x128xbf16, #tpu.memory_space<vmem>>, vector<1x1x16x128xbf16>
    %11 = vector.shape_cast %10 : vector<1x1x16x128xbf16> to vector<16x128xbf16>
    %12 = arith.extf %11 : vector<16x128xbf16> to vector<16x128xf32>
    %c55 = arith.constant 55 : index
    %c0_13 = arith.constant 0 : index
    %13 = vector.load %arg9[%c55, %c0_13] : memref<344x128xf32, #tpu.memory_space<vmem>>, vector<16x128xf32>
    tpu.vector_store %arg9[%c55, %c0_13], %12 {strides = array<i32>} : memref<344x128xf32, #tpu.memory_space<vmem>>, vector<16x128xf32>,
    %c0_14 = arith.constant 0 : index
    %c3 = arith.constant 3 : index
    %c0_15 = arith.constant 0 : index
    %c0_16 = arith.constant 0 : index
    %14 = vector.load %arg2[%c0_14, %c3, %c0_15, %c0_16] : memref<1x16x16x128xbf16, #tpu.memory_space<vmem>>, vector<1x1x16x128xbf16>
    %15 = vector.shape_cast %14 : vector<1x1x16x128xbf16> to vector<16x128xbf16>
    %16 = arith.extf %15 : vector<16x128xbf16> to vector<16x128xf32>
    %c73 = arith.constant 73 : index
    %c0_17 = arith.constant 0 : index
    %17 = vector.load %arg9[%c73, %c0_17] : memref<344x128xf32, #tpu.memory_space<vmem>>, vector<16x128xf32>
    tpu.vector_store %arg9[%c73, %c0_17], %16 {strides = array<i32>} : memref<344x128xf32, #tpu.memory_space<vmem>>, vector<16x128xf32>,
    %c0_18 = arith.constant 0 : index
    %c4 = arith.constant 4 : index
    %c0_19 = arith.constant 0 : index
    %c0_20 = arith.constant 0 : index
    %18 = vector.load %arg2[%c0_18, %c4, %c0_19, %c0_20] : memref<1x16x16x128xbf16, #tpu.memory_space<vmem>>, vector<1x1x16x128xbf16>
    %19 = vector.shape_cast %18 : vector<1x1x16x128xbf16> to vector<16x128xbf16>
    %20 = arith.extf %19 : vector<16x128xbf16> to vector<16x128xf32>
    %c91 = arith.constant 91 : index
    %c0_21 = arith.constant 0 : index
    %21 = vector.load %arg9[%c91, %c0_21] : memref<344x128xf32, #tpu.memory_space<vmem>>, vector<16x128xf32>
    tpu.vector_store %arg9[%c91, %c0_21], %20 {strides = array<i32>} : memref<344x128xf32, #tpu.memory_space<vmem>>, vector<16x128xf32>,
    %c0_22 = arith.constant 0 : index
    %c5 = arith.constant 5 : index
    %c0_23 = arith.constant 0 : index
    %c0_24 = arith.constant 0 : index
    %22 = vector.load %arg2[%c0_22, %c5, %c0_23, %c0_24] : memref<1x16x16x128xbf16, #tpu.memory_space<vmem>>, vector<1x1x16x128xbf16>
    %23 = vector.shape_cast %22 : vector<1x1x16x128xbf16> to vector<16x128xbf16>
    %24 = arith.extf %23 : vector<16x128xbf16> to vector<16x128xf32>
    %c109 = arith.constant 109 : index
    %c0_25 = arith.constant 0 : index
    %25 = vector.load %arg9[%c109, %c0_25] : memref<344x128xf32, #tpu.memory_space<vmem>>, vector<16x128xf32>
    tpu.vector_store %arg9[%c109, %c0_25], %24 {strides = array<i32>} : memref<344x128xf32, #tpu.memory_space<vmem>>, vector<16x128xf32>,
    %c0_26 = arith.constant 0 : index
    %c6 = arith.constant 6 : index
    %c0_27 = arith.constant 0 : index
    %c0_28 = arith.constant 0 : index
    %26 = vector.load %arg2[%c0_26, %c6, %c0_27, %c0_28] : memref<1x16x16x128xbf16, #tpu.memory_space<vmem>>, vector<1x1x16x128xbf16>
    %27 = vector.shape_cast %26 : vector<1x1x16x128xbf16> to vector<16x128xbf16>
    %28 = arith.extf %27 : vector<16x128xbf16> to vector<16x128xf32>
    %c127 = arith.constant 127 : index
    %c0_29 = arith.constant 0 : index
    %29 = vector.load %arg9[%c127, %c0_29] : memref<344x128xf32, #tpu.memory_space<vmem>>, vector<16x128xf32>
    tpu.vector_store %arg9[%c127, %c0_29], %28 {strides = array<i32>} : memref<344x128xf32, #tpu.memory_space<vmem>>, vector<16x128xf32>,
    %c0_30 = arith.constant 0 : index
    %c7 = arith.constant 7 : index
    %c0_31 = arith.constant 0 : index
    %c0_32 = arith.constant 0 : index
    %30 = vector.load %arg2[%c0_30, %c7, %c0_31, %c0_32] : memref<1x16x16x128xbf16, #tpu.memory_space<vmem>>, vector<1x1x16x128xbf16>
    %31 = vector.shape_cast %30 : vector<1x1x16x128xbf16> to vector<16x128xbf16>
    %32 = arith.extf %31 : vector<16x128xbf16> to vector<16x128xf32>
    %c145 = arith.constant 145 : index
    %c0_33 = arith.constant 0 : index
    %33 = vector.load %arg9[%c145, %c0_33] : memref<344x128xf32, #tpu.memory_space<vmem>>, vector<16x128xf32>
    tpu.vector_store %arg9[%c145, %c0_33], %32 {strides = array<i32>} : memref<344x128xf32, #tpu.memory_space<vmem>>, vector<16x128xf32>,
    %c0_34 = arith.constant 0 : index
    %c8 = arith.constant 8 : index
    %c0_35 = arith.constant 0 : index
    %c0_36 = arith.constant 0 : index
    %34 = vector.load %arg2[%c0_34, %c8, %c0_35, %c0_36] : memref<1x16x16x128xbf16, #tpu.memory_space<vmem>>, vector<1x1x16x128xbf16>
    %35 = vector.shape_cast %34 : vector<1x1x16x128xbf16> to vector<16x128xbf16>
    %36 = arith.extf %35 : vector<16x128xbf16> to vector<16x128xf32>
    %c163 = arith.constant 163 : index
    %c0_37 = arith.constant 0 : index
    %37 = vector.load %arg9[%c163, %c0_37] : memref<344x128xf32, #tpu.memory_space<vmem>>, vector<16x128xf32>
    tpu.vector_store %arg9[%c163, %c0_37], %36 {strides = array<i32>} : memref<344x128xf32, #tpu.memory_space<vmem>>, vector<16x128xf32>,
    %c0_38 = arith.constant 0 : index
    %c9 = arith.constant 9 : index
    %c0_39 = arith.constant 0 : index
    %c0_40 = arith.constant 0 : index
    %38 = vector.load %arg2[%c0_38, %c9, %c0_39, %c0_40] : memref<1x16x16x128xbf16, #tpu.memory_space<vmem>>, vector<1x1x16x128xbf16>
    %39 = vector.shape_cast %38 : vector<1x1x16x128xbf16> to vector<16x128xbf16>
    %40 = arith.extf %39 : vector<16x128xbf16> to vector<16x128xf32>
    %c181 = arith.constant 181 : index
    %c0_41 = arith.constant 0 : index
    %41 = vector.load %arg9[%c181, %c0_41] : memref<344x128xf32, #tpu.memory_space<vmem>>, vector<16x128xf32>
    tpu.vector_store %arg9[%c181, %c0_41], %40 {strides = array<i32>} : memref<344x128xf32, #tpu.memory_space<vmem>>, vector<16x128xf32>,
    %c0_42 = arith.constant 0 : index
    %c10 = arith.constant 10 : index
    %c0_43 = arith.constant 0 : index
    %c0_44 = arith.constant 0 : index
    %42 = vector.load %arg2[%c0_42, %c10, %c0_43, %c0_44] : memref<1x16x16x128xbf16, #tpu.memory_space<vmem>>, vector<1x1x16x128xbf16>
    %43 = vector.shape_cast %42 : vector<1x1x16x128xbf16> to vector<16x128xbf16>
    %44 = arith.extf %43 : vector<16x128xbf16> to vector<16x128xf32>
    %c199 = arith.constant 199 : index
    %c0_45 = arith.constant 0 : index
    %45 = vector.load %arg9[%c199, %c0_45] : memref<344x128xf32, #tpu.memory_space<vmem>>, vector<16x128xf32>
    tpu.vector_store %arg9[%c199, %c0_45], %44 {strides = array<i32>} : memref<344x128xf32, #tpu.memory_space<vmem>>, vector<16x128xf32>,
    %c0_46 = arith.constant 0 : index
    %c11 = arith.constant 11 : index
    %c0_47 = arith.constant 0 : index
    %c0_48 = arith.constant 0 : index
    %46 = vector.load %arg2[%c0_46, %c11, %c0_47, %c0_48] : memref<1x16x16x128xbf16, #tpu.memory_space<vmem>>, vector<1x1x16x128xbf16>
    %47 = vector.shape_cast %46 : vector<1x1x16x128xbf16> to vector<16x128xbf16>
    %48 = arith.extf %47 : vector<16x128xbf16> to vector<16x128xf32>
    %c217 = arith.constant 217 : index
    %c0_49 = arith.constant 0 : index
    %49 = vector.load %arg9[%c217, %c0_49] : memref<344x128xf32, #tpu.memory_space<vmem>>, vector<16x128xf32>
    tpu.vector_store %arg9[%c217, %c0_49], %48 {strides = array<i32>} : memref<344x128xf32, #tpu.memory_space<vmem>>, vector<16x128xf32>,
    %c0_50 = arith.constant 0 : index
    %c12 = arith.constant 12 : index
    %c0_51 = arith.constant 0 : index
    %c0_52 = arith.constant 0 : index
    %50 = vector.load %arg2[%c0_50, %c12, %c0_51, %c0_52] : memref<1x16x16x128xbf16, #tpu.memory_space<vmem>>, vector<1x1x16x128xbf16>
    %51 = vector.shape_cast %50 : vector<1x1x16x128xbf16> to vector<16x128xbf16>
    %52 = arith.extf %51 : vector<16x128xbf16> to vector<16x128xf32>
    %c235 = arith.constant 235 : index
    %c0_53 = arith.constant 0 : index
    %53 = vector.load %arg9[%c235, %c0_53] : memref<344x128xf32, #tpu.memory_space<vmem>>, vector<16x128xf32>
    tpu.vector_store %arg9[%c235, %c0_53], %52 {strides = array<i32>} : memref<344x128xf32, #tpu.memory_space<vmem>>, vector<16x128xf32>,
    %c0_54 = arith.constant 0 : index
    %c13 = arith.constant 13 : index
    %c0_55 = arith.constant 0 : index
    %c0_56 = arith.constant 0 : index
    %54 = vector.load %arg2[%c0_54, %c13, %c0_55, %c0_56] : memref<1x16x16x128xbf16, #tpu.memory_space<vmem>>, vector<1x1x16x128xbf16>
    %55 = vector.shape_cast %54 : vector<1x1x16x128xbf16> to vector<16x128xbf16>
    %56 = arith.extf %55 : vector<16x128xbf16> to vector<16x128xf32>
    %c253 = arith.constant 253 : index
    %c0_57 = arith.constant 0 : index
    %57 = vector.load %arg9[%c253, %c0_57] : memref<344x128xf32, #tpu.memory_space<vmem>>, vector<16x128xf32>
    tpu.vector_store %arg9[%c253, %c0_57], %56 {strides = array<i32>} : memref<344x128xf32, #tpu.memory_space<vmem>>, vector<16x128xf32>,
    %c0_58 = arith.constant 0 : index
    %c14 = arith.constant 14 : index
    %c0_59 = arith.constant 0 : index
    %c0_60 = arith.constant 0 : index
    %58 = vector.load %arg2[%c0_58, %c14, %c0_59, %c0_60] : memref<1x16x16x128xbf16, #tpu.memory_space<vmem>>, vector<1x1x16x128xbf16>
    %59 = vector.shape_cast %58 : vector<1x1x16x128xbf16> to vector<16x128xbf16>
    %60 = arith.extf %59 : vector<16x128xbf16> to vector<16x128xf32>
    %c271 = arith.constant 271 : index
    %c0_61 = arith.constant 0 : index
    %61 = vector.load %arg9[%c271, %c0_61] : memref<344x128xf32, #tpu.memory_space<vmem>>, vector<16x128xf32>
    tpu.vector_store %arg9[%c271, %c0_61], %60 {strides = array<i32>} : memref<344x128xf32, #tpu.memory_space<vmem>>, vector<16x128xf32>,
    %c0_62 = arith.constant 0 : index
    %c15 = arith.constant 15 : index
    %c0_63 = arith.constant 0 : index
    %c0_64 = arith.constant 0 : index
    %62 = vector.load %arg2[%c0_62, %c15, %c0_63, %c0_64] : memref<1x16x16x128xbf16, #tpu.memory_space<vmem>>, vector<1x1x16x128xbf16>
    %63 = vector.shape_cast %62 : vector<1x1x16x128xbf16> to vector<16x128xbf16>
    %64 = arith.extf %63 : vector<16x128xbf16> to vector<16x128xf32>
    %c289 = arith.constant 289 : index
    %c0_65 = arith.constant 0 : index
    %65 = vector.load %arg9[%c289, %c0_65] : memref<344x128xf32, #tpu.memory_space<vmem>>, vector<16x128xf32>
    tpu.vector_store %arg9[%c289, %c0_65], %64 {strides = array<i32>} : memref<344x128xf32, #tpu.memory_space<vmem>>, vector<16x128xf32>,
    %c0_66 = arith.constant 0 : index
    %c0_67 = arith.constant 0 : index
    %66 = vector.load %arg9[%c0_66, %c0_67] : memref<344x128xf32, #tpu.memory_space<vmem>>, vector<288x128xf32>
    %67 = arith.truncf %66 : vector<288x128xf32> to vector<288x128xbf16>
    %c0_68 = arith.constant 0 : index
    %c0_69 = arith.constant 0 : index
    %68 = vector.load %arg10[%c0_68, %c0_69] : memref<288x1152xbf16, #tpu.memory_space<vmem>>, vector<288x128xbf16>
    tpu.vector_store %arg10[%c0_68, %c0_69], %67 {strides = array<i32>} : memref<288x1152xbf16, #tpu.memory_space<vmem>>, vector<288x128xbf16>,
    %c1_70 = arith.constant 1 : index
    %c0_71 = arith.constant 0 : index
    %69 = vector.load %arg9[%c1_70, %c0_71] : memref<344x128xf32, #tpu.memory_space<vmem>>, vector<288x128xf32>
    %70 = arith.truncf %69 : vector<288x128xf32> to vector<288x128xbf16>
    %c0_72 = arith.constant 0 : index
    %c128 = arith.constant 128 : index
    %71 = vector.load %arg10[%c0_72, %c128] : memref<288x1152xbf16, #tpu.memory_space<vmem>>, vector<288x128xbf16>
    tpu.vector_store %arg10[%c0_72, %c128], %70 {strides = array<i32>} : memref<288x1152xbf16, #tpu.memory_space<vmem>>, vector<288x128xbf16>,
    %c2_73 = arith.constant 2 : index
    %c0_74 = arith.constant 0 : index
    %72 = vector.load %arg9[%c2_73, %c0_74] : memref<344x128xf32, #tpu.memory_space<vmem>>, vector<288x128xf32>
    %73 = arith.truncf %72 : vector<288x128xf32> to vector<288x128xbf16>
    %c0_75 = arith.constant 0 : index
    %c256 = arith.constant 256 : index
    %74 = vector.load %arg10[%c0_75, %c256] : memref<288x1152xbf16, #tpu.memory_space<vmem>>, vector<288x128xbf16>
    tpu.vector_store %arg10[%c0_75, %c256], %73 {strides = array<i32>} : memref<288x1152xbf16, #tpu.memory_space<vmem>>, vector<288x128xbf16>,
    %c18 = arith.constant 18 : index
    %c0_76 = arith.constant 0 : index
    %75 = vector.load %arg9[%c18, %c0_76] : memref<344x128xf32, #tpu.memory_space<vmem>>, vector<288x128xf32>
    %76 = arith.truncf %75 : vector<288x128xf32> to vector<288x128xbf16>
    %c0_77 = arith.constant 0 : index
    %c384 = arith.constant 384 : index
    %77 = vector.load %arg10[%c0_77, %c384] : memref<288x1152xbf16, #tpu.memory_space<vmem>>, vector<288x128xbf16>
    tpu.vector_store %arg10[%c0_77, %c384], %76 {strides = array<i32>} : memref<288x1152xbf16, #tpu.memory_space<vmem>>, vector<288x128xbf16>,
    %c19_78 = arith.constant 19 : index
    %c0_79 = arith.constant 0 : index
    %78 = vector.load %arg9[%c19_78, %c0_79] : memref<344x128xf32, #tpu.memory_space<vmem>>, vector<288x128xf32>
    %79 = arith.truncf %78 : vector<288x128xf32> to vector<288x128xbf16>
    %c0_80 = arith.constant 0 : index
    %c512 = arith.constant 512 : index
    %80 = vector.load %arg10[%c0_80, %c512] : memref<288x1152xbf16, #tpu.memory_space<vmem>>, vector<288x128xbf16>
    tpu.vector_store %arg10[%c0_80, %c512], %79 {strides = array<i32>} : memref<288x1152xbf16, #tpu.memory_space<vmem>>, vector<288x128xbf16>,
    %c20 = arith.constant 20 : index
    %c0_81 = arith.constant 0 : index
    %81 = vector.load %arg9[%c20, %c0_81] : memref<344x128xf32, #tpu.memory_space<vmem>>, vector<288x128xf32>
    %82 = arith.truncf %81 : vector<288x128xf32> to vector<288x128xbf16>
    %c0_82 = arith.constant 0 : index
    %c640 = arith.constant 640 : index
    %83 = vector.load %arg10[%c0_82, %c640] : memref<288x1152xbf16, #tpu.memory_space<vmem>>, vector<288x128xbf16>
    tpu.vector_store %arg10[%c0_82, %c640], %82 {strides = array<i32>} : memref<288x1152xbf16, #tpu.memory_space<vmem>>, vector<288x128xbf16>,
    %c36 = arith.constant 36 : index
    %c0_83 = arith.constant 0 : index
    %84 = vector.load %arg9[%c36, %c0_83] : memref<344x128xf32, #tpu.memory_space<vmem>>, vector<288x128xf32>
    %85 = arith.truncf %84 : vector<288x128xf32> to vector<288x128xbf16>
    %c0_84 = arith.constant 0 : index
    %c768 = arith.constant 768 : index
    %86 = vector.load %arg10[%c0_84, %c768] : memref<288x1152xbf16, #tpu.memory_space<vmem>>, vector<288x128xbf16>
    tpu.vector_store %arg10[%c0_84, %c768], %85 {strides = array<i32>} : memref<288x1152xbf16, #tpu.memory_space<vmem>>, vector<288x128xbf16>,
    %c37_85 = arith.constant 37 : index
    %c0_86 = arith.constant 0 : index
    %87 = vector.load %arg9[%c37_85, %c0_86] : memref<344x128xf32, #tpu.memory_space<vmem>>, vector<288x128xf32>
    %88 = arith.truncf %87 : vector<288x128xf32> to vector<288x128xbf16>
    %c0_87 = arith.constant 0 : index
    %c896 = arith.constant 896 : index
    %89 = vector.load %arg10[%c0_87, %c896] : memref<288x1152xbf16, #tpu.memory_space<vmem>>, vector<288x128xbf16>
    tpu.vector_store %arg10[%c0_87, %c896], %88 {strides = array<i32>} : memref<288x1152xbf16, #tpu.memory_space<vmem>>, vector<288x128xbf16>,
    %c38 = arith.constant 38 : index
    %c0_88 = arith.constant 0 : index
    %90 = vector.load %arg9[%c38, %c0_88] : memref<344x128xf32, #tpu.memory_space<vmem>>, vector<288x128xf32>
    %91 = arith.truncf %90 : vector<288x128xf32> to vector<288x128xbf16>
    %c0_89 = arith.constant 0 : index
    %c1024 = arith.constant 1024 : index
    %92 = vector.load %arg10[%c0_89, %c1024] : memref<288x1152xbf16, #tpu.memory_space<vmem>>, vector<288x128xbf16>
    tpu.vector_store %arg10[%c0_89, %c1024], %91 {strides = array<i32>} : memref<288x1152xbf16, #tpu.memory_space<vmem>>, vector<288x128xbf16>,
    %c0_90 = arith.constant 0 : index
    %c0_91 = arith.constant 0 : index
    %93 = vector.load %arg10[%c0_90, %c0_91] : memref<288x1152xbf16, #tpu.memory_space<vmem>>, vector<288x1152xbf16>
    %c0_92 = arith.constant 0 : index
    %c0_93 = arith.constant 0 : index
    %94 = vector.load %arg3[%c0_92, %c0_93] : memref<1152x128xbf16, #tpu.memory_space<vmem>>, vector<1152x128xbf16>
    %cst_94 = arith.constant dense<0.000000e+00> : vector<288x128xf32>
    %95 = tpu.matmul %93, %94, %cst_94 {dimension_numbers = #tpu.dot_dimension_numbers<[1], [0], [0], [1], [0, 0, 1, 1], [], []>} : vector<288x1152xbf16>, vector<1152x128xbf16>, vector<288x128xf32> -> vector<288x128xf32>
    %c0_95 = arith.constant 0 : index
    %c0_96 = arith.constant 0 : index
    %96 = vector.load %arg4[%c0_95, %c0_96] : memref<1x128xf32, #tpu.memory_space<vmem>>, vector<1x128xf32>
    %97 = vector.shape_cast %96 : vector<1x128xf32> to vector<128xf32>
    %98 = vector.shape_cast %97 : vector<128xf32> to vector<1x128xf32>
    %99 = vector.broadcast %98 : vector<1x128xf32> to vector<288x128xf32>
    %100 = arith.addf %95, %99 : vector<288x128xf32>
    %c0_97 = arith.constant 0 : index
    %c0_98 = arith.constant 0 : index
    %101 = vector.load %arg7[%c0_97, %c0_98] : memref<288x1xf32, #tpu.memory_space<vmem>>, vector<288x1xf32>
    %102 = vector.broadcast %101 : vector<288x1xf32> to vector<288x128xf32>
    %103 = arith.mulf %100, %102 : vector<288x128xf32>
    %cst_99 = arith.constant dense<0.000000e+00> : vector<128xf32>
    %104 = vector.multi_reduction <add>, %103, %cst_99 [0] : vector<288x128xf32> to vector<128xf32>
    %105 = vector.shape_cast %104 : vector<128xf32> to vector<1x128xf32>
    %cst_100 = arith.constant 3.906250e-03 : f32
    %106 = vector.broadcast %cst_100 : f32 to vector<1x128xf32>
    %107 = arith.mulf %105, %106 : vector<1x128xf32>
    %108 = arith.mulf %103, %103 : vector<288x128xf32>
    %cst_101 = arith.constant dense<0.000000e+00> : vector<128xf32>
    %109 = vector.multi_reduction <add>, %108, %cst_101 [0] : vector<288x128xf32> to vector<128xf32>
    %110 = vector.shape_cast %109 : vector<128xf32> to vector<1x128xf32>
    %cst_102 = arith.constant 3.906250e-03 : f32
    %111 = vector.broadcast %cst_102 : f32 to vector<1x128xf32>
    %112 = arith.mulf %110, %111 : vector<1x128xf32>
    %113 = arith.mulf %107, %107 : vector<1x128xf32>
    %114 = arith.subf %112, %113 : vector<1x128xf32>
    %cst_103 = arith.constant 0.000000e+00 : f32
    %115 = vector.broadcast %cst_103 : f32 to vector<1x128xf32>
    %116 = arith.maximumf %114, %115 : vector<1x128xf32>
    %c0_104 = arith.constant 0 : index
    %c0_105 = arith.constant 0 : index
    %117 = vector.load %arg5[%c0_104, %c0_105] : memref<1x128xf32, #tpu.memory_space<vmem>>, vector<1x128xf32>
    %118 = vector.shape_cast %117 : vector<1x128xf32> to vector<128xf32>
    %cst_106 = arith.constant 9.99999974E-6 : f32
    %119 = vector.broadcast %cst_106 : f32 to vector<1x128xf32>
    %120 = arith.addf %116, %119 : vector<1x128xf32>
    %121 = math.rsqrt %120 : vector<1x128xf32>
    %122 = vector.shape_cast %118 : vector<128xf32> to vector<1x128xf32>
    %123 = arith.mulf %122, %121 : vector<1x128xf32>
    %c0_107 = arith.constant 0 : index
    %c0_108 = arith.constant 0 : index
    %124 = vector.load %arg6[%c0_107, %c0_108] : memref<1x128xf32, #tpu.memory_space<vmem>>, vector<1x128xf32>
    %125 = vector.shape_cast %124 : vector<1x128xf32> to vector<128xf32>
    %126 = arith.mulf %107, %123 : vector<1x128xf32>
    %127 = vector.shape_cast %125 : vector<128xf32> to vector<1x128xf32>
    %128 = arith.subf %127, %126 : vector<1x128xf32>
    %129 = vector.broadcast %123 : vector<1x128xf32> to vector<288x128xf32>
    %130 = arith.mulf %100, %129 : vector<288x128xf32>
    %131 = vector.broadcast %128 : vector<1x128xf32> to vector<288x128xf32>
    %132 = arith.addf %130, %131 : vector<288x128xf32>
    %cst_109 = arith.constant 0.000000e+00 : f32
    %133 = vector.broadcast %cst_109 : f32 to vector<288x128xf32>
    %134 = arith.maximumf %132, %133 : vector<288x128xf32>
    %135 = vector.extract_strided_slice %134 {offsets = [0, 0], sizes = [16, 128], strides = [1, 1]} : vector<288x128xf32> to vector<16x128xf32>
    %136 = arith.truncf %135 : vector<16x128xf32> to vector<16x128xbf16>
    %c0_110 = arith.constant 0 : index
    %c0_111 = arith.constant 0 : index
    %c0_112 = arith.constant 0 : index
    %c0_113 = arith.constant 0 : index
    %137 = vector.load %arg8[%c0_110, %c0_111, %c0_112, %c0_113] : memref<1x16x16x128xbf16, #tpu.memory_space<vmem>>, vector<1x1x16x128xbf16>
    %138 = vector.shape_cast %137 : vector<1x1x16x128xbf16> to vector<16x128xbf16>
    %139 = vector.shape_cast %136 : vector<16x128xbf16> to vector<1x1x16x128xbf16>
    tpu.vector_store %arg8[%c0_110, %c0_111, %c0_112, %c0_113], %139 {strides = array<i32>} : memref<1x16x16x128xbf16, #tpu.memory_space<vmem>>, vector<1x1x16x128xbf16>,
    %140 = vector.extract_strided_slice %134 {offsets = [18, 0], sizes = [16, 128], strides = [1, 1]} : vector<288x128xf32> to vector<16x128xf32>
    %141 = arith.truncf %140 : vector<16x128xf32> to vector<16x128xbf16>
    %c0_114 = arith.constant 0 : index
    %c1_115 = arith.constant 1 : index
    %c0_116 = arith.constant 0 : index
    %c0_117 = arith.constant 0 : index
    %142 = vector.load %arg8[%c0_114, %c1_115, %c0_116, %c0_117] : memref<1x16x16x128xbf16, #tpu.memory_space<vmem>>, vector<1x1x16x128xbf16>
    %143 = vector.shape_cast %142 : vector<1x1x16x128xbf16> to vector<16x128xbf16>
    %144 = vector.shape_cast %141 : vector<16x128xbf16> to vector<1x1x16x128xbf16>
    tpu.vector_store %arg8[%c0_114, %c1_115, %c0_116, %c0_117], %144 {strides = array<i32>} : memref<1x16x16x128xbf16, #tpu.memory_space<vmem>>, vector<1x1x16x128xbf16>,
    %145 = vector.extract_strided_slice %134 {offsets = [36, 0], sizes = [16, 128], strides = [1, 1]} : vector<288x128xf32> to vector<16x128xf32>
    %146 = arith.truncf %145 : vector<16x128xf32> to vector<16x128xbf16>
    %c0_118 = arith.constant 0 : index
    %c2_119 = arith.constant 2 : index
    %c0_120 = arith.constant 0 : index
    %c0_121 = arith.constant 0 : index
    %147 = vector.load %arg8[%c0_118, %c2_119, %c0_120, %c0_121] : memref<1x16x16x128xbf16, #tpu.memory_space<vmem>>, vector<1x1x16x128xbf16>
    %148 = vector.shape_cast %147 : vector<1x1x16x128xbf16> to vector<16x128xbf16>
    %149 = vector.shape_cast %146 : vector<16x128xbf16> to vector<1x1x16x128xbf16>
    tpu.vector_store %arg8[%c0_118, %c2_119, %c0_120, %c0_121], %149 {strides = array<i32>} : memref<1x16x16x128xbf16, #tpu.memory_space<vmem>>, vector<1x1x16x128xbf16>,
    %150 = vector.extract_strided_slice %134 {offsets = [54, 0], sizes = [16, 128], strides = [1, 1]} : vector<288x128xf32> to vector<16x128xf32>
    %151 = arith.truncf %150 : vector<16x128xf32> to vector<16x128xbf16>
    %c0_122 = arith.constant 0 : index
    %c3_123 = arith.constant 3 : index
    %c0_124 = arith.constant 0 : index
    %c0_125 = arith.constant 0 : index
    %152 = vector.load %arg8[%c0_122, %c3_123, %c0_124, %c0_125] : memref<1x16x16x128xbf16, #tpu.memory_space<vmem>>, vector<1x1x16x128xbf16>
    %153 = vector.shape_cast %152 : vector<1x1x16x128xbf16> to vector<16x128xbf16>
    %154 = vector.shape_cast %151 : vector<16x128xbf16> to vector<1x1x16x128xbf16>
    tpu.vector_store %arg8[%c0_122, %c3_123, %c0_124, %c0_125], %154 {strides = array<i32>} : memref<1x16x16x128xbf16, #tpu.memory_space<vmem>>, vector<1x1x16x128xbf16>,
    %155 = vector.extract_strided_slice %134 {offsets = [72, 0], sizes = [16, 128], strides = [1, 1]} : vector<288x128xf32> to vector<16x128xf32>
    %156 = arith.truncf %155 : vector<16x128xf32> to vector<16x128xbf16>
    %c0_126 = arith.constant 0 : index
    %c4_127 = arith.constant 4 : index
    %c0_128 = arith.constant 0 : index
    %c0_129 = arith.constant 0 : index
    %157 = vector.load %arg8[%c0_126, %c4_127, %c0_128, %c0_129] : memref<1x16x16x128xbf16, #tpu.memory_space<vmem>>, vector<1x1x16x128xbf16>
    %158 = vector.shape_cast %157 : vector<1x1x16x128xbf16> to vector<16x128xbf16>
    %159 = vector.shape_cast %156 : vector<16x128xbf16> to vector<1x1x16x128xbf16>
    tpu.vector_store %arg8[%c0_126, %c4_127, %c0_128, %c0_129], %159 {strides = array<i32>} : memref<1x16x16x128xbf16, #tpu.memory_space<vmem>>, vector<1x1x16x128xbf16>,
    %160 = vector.extract_strided_slice %134 {offsets = [90, 0], sizes = [16, 128], strides = [1, 1]} : vector<288x128xf32> to vector<16x128xf32>
    %161 = arith.truncf %160 : vector<16x128xf32> to vector<16x128xbf16>
    %c0_130 = arith.constant 0 : index
    %c5_131 = arith.constant 5 : index
    %c0_132 = arith.constant 0 : index
    %c0_133 = arith.constant 0 : index
    %162 = vector.load %arg8[%c0_130, %c5_131, %c0_132, %c0_133] : memref<1x16x16x128xbf16, #tpu.memory_space<vmem>>, vector<1x1x16x128xbf16>
    %163 = vector.shape_cast %162 : vector<1x1x16x128xbf16> to vector<16x128xbf16>
    %164 = vector.shape_cast %161 : vector<16x128xbf16> to vector<1x1x16x128xbf16>
    tpu.vector_store %arg8[%c0_130, %c5_131, %c0_132, %c0_133], %164 {strides = array<i32>} : memref<1x16x16x128xbf16, #tpu.memory_space<vmem>>, vector<1x1x16x128xbf16>,
    %165 = vector.extract_strided_slice %134 {offsets = [108, 0], sizes = [16, 128], strides = [1, 1]} : vector<288x128xf32> to vector<16x128xf32>
    %166 = arith.truncf %165 : vector<16x128xf32> to vector<16x128xbf16>
    %c0_134 = arith.constant 0 : index
    %c6_135 = arith.constant 6 : index
    %c0_136 = arith.constant 0 : index
    %c0_137 = arith.constant 0 : index
    %167 = vector.load %arg8[%c0_134, %c6_135, %c0_136, %c0_137] : memref<1x16x16x128xbf16, #tpu.memory_space<vmem>>, vector<1x1x16x128xbf16>
    %168 = vector.shape_cast %167 : vector<1x1x16x128xbf16> to vector<16x128xbf16>
    %169 = vector.shape_cast %166 : vector<16x128xbf16> to vector<1x1x16x128xbf16>
    tpu.vector_store %arg8[%c0_134, %c6_135, %c0_136, %c0_137], %169 {strides = array<i32>} : memref<1x16x16x128xbf16, #tpu.memory_space<vmem>>, vector<1x1x16x128xbf16>,
    %170 = vector.extract_strided_slice %134 {offsets = [126, 0], sizes = [16, 128], strides = [1, 1]} : vector<288x128xf32> to vector<16x128xf32>
    %171 = arith.truncf %170 : vector<16x128xf32> to vector<16x128xbf16>
    %c0_138 = arith.constant 0 : index
    %c7_139 = arith.constant 7 : index
    %c0_140 = arith.constant 0 : index
    %c0_141 = arith.constant 0 : index
    %172 = vector.load %arg8[%c0_138, %c7_139, %c0_140, %c0_141] : memref<1x16x16x128xbf16, #tpu.memory_space<vmem>>, vector<1x1x16x128xbf16>
    %173 = vector.shape_cast %172 : vector<1x1x16x128xbf16> to vector<16x128xbf16>
    %174 = vector.shape_cast %171 : vector<16x128xbf16> to vector<1x1x16x128xbf16>
    tpu.vector_store %arg8[%c0_138, %c7_139, %c0_140, %c0_141], %174 {strides = array<i32>} : memref<1x16x16x128xbf16, #tpu.memory_space<vmem>>, vector<1x1x16x128xbf16>,
    %175 = vector.extract_strided_slice %134 {offsets = [144, 0], sizes = [16, 128], strides = [1, 1]} : vector<288x128xf32> to vector<16x128xf32>
    %176 = arith.truncf %175 : vector<16x128xf32> to vector<16x128xbf16>
    %c0_142 = arith.constant 0 : index
    %c8_143 = arith.constant 8 : index
    %c0_144 = arith.constant 0 : index
    %c0_145 = arith.constant 0 : index
    %177 = vector.load %arg8[%c0_142, %c8_143, %c0_144, %c0_145] : memref<1x16x16x128xbf16, #tpu.memory_space<vmem>>, vector<1x1x16x128xbf16>
    %178 = vector.shape_cast %177 : vector<1x1x16x128xbf16> to vector<16x128xbf16>
    %179 = vector.shape_cast %176 : vector<16x128xbf16> to vector<1x1x16x128xbf16>
    tpu.vector_store %arg8[%c0_142, %c8_143, %c0_144, %c0_145], %179 {strides = array<i32>} : memref<1x16x16x128xbf16, #tpu.memory_space<vmem>>, vector<1x1x16x128xbf16>,
    %180 = vector.extract_strided_slice %134 {offsets = [162, 0], sizes = [16, 128], strides = [1, 1]} : vector<288x128xf32> to vector<16x128xf32>
    %181 = arith.truncf %180 : vector<16x128xf32> to vector<16x128xbf16>
    %c0_146 = arith.constant 0 : index
    %c9_147 = arith.constant 9 : index
    %c0_148 = arith.constant 0 : index
    %c0_149 = arith.constant 0 : index
    %182 = vector.load %arg8[%c0_146, %c9_147, %c0_148, %c0_149] : memref<1x16x16x128xbf16, #tpu.memory_space<vmem>>, vector<1x1x16x128xbf16>
    %183 = vector.shape_cast %182 : vector<1x1x16x128xbf16> to vector<16x128xbf16>
    %184 = vector.shape_cast %181 : vector<16x128xbf16> to vector<1x1x16x128xbf16>
    tpu.vector_store %arg8[%c0_146, %c9_147, %c0_148, %c0_149], %184 {strides = array<i32>} : memref<1x16x16x128xbf16, #tpu.memory_space<vmem>>, vector<1x1x16x128xbf16>,
    %185 = vector.extract_strided_slice %134 {offsets = [180, 0], sizes = [16, 128], strides = [1, 1]} : vector<288x128xf32> to vector<16x128xf32>
    %186 = arith.truncf %185 : vector<16x128xf32> to vector<16x128xbf16>
    %c0_150 = arith.constant 0 : index
    %c10_151 = arith.constant 10 : index
    %c0_152 = arith.constant 0 : index
    %c0_153 = arith.constant 0 : index
    %187 = vector.load %arg8[%c0_150, %c10_151, %c0_152, %c0_153] : memref<1x16x16x128xbf16, #tpu.memory_space<vmem>>, vector<1x1x16x128xbf16>
    %188 = vector.shape_cast %187 : vector<1x1x16x128xbf16> to vector<16x128xbf16>
    %189 = vector.shape_cast %186 : vector<16x128xbf16> to vector<1x1x16x128xbf16>
    tpu.vector_store %arg8[%c0_150, %c10_151, %c0_152, %c0_153], %189 {strides = array<i32>} : memref<1x16x16x128xbf16, #tpu.memory_space<vmem>>, vector<1x1x16x128xbf16>,
    %190 = vector.extract_strided_slice %134 {offsets = [198, 0], sizes = [16, 128], strides = [1, 1]} : vector<288x128xf32> to vector<16x128xf32>
    %191 = arith.truncf %190 : vector<16x128xf32> to vector<16x128xbf16>
    %c0_154 = arith.constant 0 : index
    %c11_155 = arith.constant 11 : index
    %c0_156 = arith.constant 0 : index
    %c0_157 = arith.constant 0 : index
    %192 = vector.load %arg8[%c0_154, %c11_155, %c0_156, %c0_157] : memref<1x16x16x128xbf16, #tpu.memory_space<vmem>>, vector<1x1x16x128xbf16>
    %193 = vector.shape_cast %192 : vector<1x1x16x128xbf16> to vector<16x128xbf16>
    %194 = vector.shape_cast %191 : vector<16x128xbf16> to vector<1x1x16x128xbf16>
    tpu.vector_store %arg8[%c0_154, %c11_155, %c0_156, %c0_157], %194 {strides = array<i32>} : memref<1x16x16x128xbf16, #tpu.memory_space<vmem>>, vector<1x1x16x128xbf16>,
    %195 = vector.extract_strided_slice %134 {offsets = [216, 0], sizes = [16, 128], strides = [1, 1]} : vector<288x128xf32> to vector<16x128xf32>
    %196 = arith.truncf %195 : vector<16x128xf32> to vector<16x128xbf16>
    %c0_158 = arith.constant 0 : index
    %c12_159 = arith.constant 12 : index
    %c0_160 = arith.constant 0 : index
    %c0_161 = arith.constant 0 : index
    %197 = vector.load %arg8[%c0_158, %c12_159, %c0_160, %c0_161] : memref<1x16x16x128xbf16, #tpu.memory_space<vmem>>, vector<1x1x16x128xbf16>
    %198 = vector.shape_cast %197 : vector<1x1x16x128xbf16> to vector<16x128xbf16>
    %199 = vector.shape_cast %196 : vector<16x128xbf16> to vector<1x1x16x128xbf16>
    tpu.vector_store %arg8[%c0_158, %c12_159, %c0_160, %c0_161], %199 {strides = array<i32>} : memref<1x16x16x128xbf16, #tpu.memory_space<vmem>>, vector<1x1x16x128xbf16>,
    %200 = vector.extract_strided_slice %134 {offsets = [234, 0], sizes = [16, 128], strides = [1, 1]} : vector<288x128xf32> to vector<16x128xf32>
    %201 = arith.truncf %200 : vector<16x128xf32> to vector<16x128xbf16>
    %c0_162 = arith.constant 0 : index
    %c13_163 = arith.constant 13 : index
    %c0_164 = arith.constant 0 : index
    %c0_165 = arith.constant 0 : index
    %202 = vector.load %arg8[%c0_162, %c13_163, %c0_164, %c0_165] : memref<1x16x16x128xbf16, #tpu.memory_space<vmem>>, vector<1x1x16x128xbf16>
    %203 = vector.shape_cast %202 : vector<1x1x16x128xbf16> to vector<16x128xbf16>
    %204 = vector.shape_cast %201 : vector<16x128xbf16> to vector<1x1x16x128xbf16>
    tpu.vector_store %arg8[%c0_162, %c13_163, %c0_164, %c0_165], %204 {strides = array<i32>} : memref<1x16x16x128xbf16, #tpu.memory_space<vmem>>, vector<1x1x16x128xbf16>,
    %205 = vector.extract_strided_slice %134 {offsets = [252, 0], sizes = [16, 128], strides = [1, 1]} : vector<288x128xf32> to vector<16x128xf32>
    %206 = arith.truncf %205 : vector<16x128xf32> to vector<16x128xbf16>
    %c0_166 = arith.constant 0 : index
    %c14_167 = arith.constant 14 : index
    %c0_168 = arith.constant 0 : index
    %c0_169 = arith.constant 0 : index
    %207 = vector.load %arg8[%c0_166, %c14_167, %c0_168, %c0_169] : memref<1x16x16x128xbf16, #tpu.memory_space<vmem>>, vector<1x1x16x128xbf16>
    %208 = vector.shape_cast %207 : vector<1x1x16x128xbf16> to vector<16x128xbf16>
    %209 = vector.shape_cast %206 : vector<16x128xbf16> to vector<1x1x16x128xbf16>
    tpu.vector_store %arg8[%c0_166, %c14_167, %c0_168, %c0_169], %209 {strides = array<i32>} : memref<1x16x16x128xbf16, #tpu.memory_space<vmem>>, vector<1x1x16x128xbf16>,
    %210 = vector.extract_strided_slice %134 {offsets = [270, 0], sizes = [16, 128], strides = [1, 1]} : vector<288x128xf32> to vector<16x128xf32>
    %211 = arith.truncf %210 : vector<16x128xf32> to vector<16x128xbf16>
    %c0_170 = arith.constant 0 : index
    %c15_171 = arith.constant 15 : index
    %c0_172 = arith.constant 0 : index
    %c0_173 = arith.constant 0 : index
    %212 = vector.load %arg8[%c0_170, %c15_171, %c0_172, %c0_173] : memref<1x16x16x128xbf16, #tpu.memory_space<vmem>>, vector<1x1x16x128xbf16>
    %213 = vector.shape_cast %212 : vector<1x1x16x128xbf16> to vector<16x128xbf16>
    %214 = vector.shape_cast %211 : vector<16x128xbf16> to vector<1x1x16x128xbf16>
    tpu.vector_store %arg8[%c0_170, %c15_171, %c0_172, %c0_173], %214 {strides = array<i32>} : memref<1x16x16x128xbf16, #tpu.memory_space<vmem>>, vector<1x1x16x128xbf16>,
    return
  }
  func.func @transform_0(%arg0: i32, %arg1: i32) -> (i32, i32, i32, i32) {
    %c0_i32 = arith.constant 0 : i32
    %c0_i32_0 = arith.constant 0 : i32
    %c0_i32_1 = arith.constant 0 : i32
    %c0_i32_2 = arith.constant 0 : i32
    return %arg0, %c0_i32, %c0_i32_0, %c0_i32_1 : i32, i32, i32, i32
  }
  func.func @transform_1(%arg0: i32, %arg1: i32) -> (i32, i32) {
    %c0_i32 = arith.constant 0 : i32
    %c0_i32_0 = arith.constant 0 : i32
    return %c0_i32, %arg1 : i32, i32
  }
  func.func @transform_2(%arg0: i32, %arg1: i32) -> (i32, i32) {
    %c0_i32 = arith.constant 0 : i32
    %c0_i32_0 = arith.constant 0 : i32
    return %c0_i32, %arg1 : i32, i32
  }
  func.func @transform_3(%arg0: i32, %arg1: i32) -> (i32, i32) {
    %c0_i32 = arith.constant 0 : i32
    %c0_i32_0 = arith.constant 0 : i32
    return %c0_i32, %arg1 : i32, i32
  }
  func.func @transform_4(%arg0: i32, %arg1: i32) -> (i32, i32) {
    %c0_i32 = arith.constant 0 : i32
    %c0_i32_0 = arith.constant 0 : i32
    return %c0_i32, %arg1 : i32, i32
  }
  func.func @transform_5(%arg0: i32, %arg1: i32) -> (i32, i32) {
    %c0_i32 = arith.constant 0 : i32
    %c0_i32_0 = arith.constant 0 : i32
    %c0_i32_1 = arith.constant 0 : i32
    return %c0_i32, %c0_i32_0 : i32, i32
  }
  func.func @transform_6(%arg0: i32, %arg1: i32) -> (i32, i32, i32, i32) {
    %c0_i32 = arith.constant 0 : i32
    %c0_i32_0 = arith.constant 0 : i32
    %c0_i32_1 = arith.constant 0 : i32
    return %arg0, %c0_i32, %c0_i32_0, %arg1 : i32, i32, i32, i32
  }
}

</mosaic_0001>

<llo_original>
// kernel: _conv3x3_in_relu_pallas.1
$region0: #{_conv3x3_in_relu_pallas.1}
  #allocation0 [shape = 'u32[]', space=smem, size = 0x4, offset = 0x4, fixed_abs, tag = 'smem constant byte address 0x4 - core index']
  #allocation1 [shape = 'u32[144,128]{1,0:T(1,128)}', space=vmem, size = 0x12000, scoped, tag = 'internal scratch']
  #allocation2 [shape = 'f32[344,128]{1,0:T(8,128)}', space=vmem, size = 0x2b000, scoped, tag = 'scratch operand']
  #allocation3 [shape = 'bf16[288,1152]{1,0:T(16,128)(2,1)}', space=vmem, size = 0xa2000, scoped, tag = 'scratch operand']
  %s0 = inlined_call_operand.vmem [shape: bf16[2,16,16,128], index: 0, kind: input, shape index: {}]
  %s1 = inlined_call_operand.hbm [shape: bf16[1152,128], index: 1, kind: input, shape index: {}]
  %s2 = inlined_call_operand.vmem [shape: f32[1,128], index: 2, kind: input, shape index: {}]
  %s3 = inlined_call_operand.vmem [shape: f32[1,128], index: 3, kind: input, shape index: {}]
  %s4 = inlined_call_operand.vmem [shape: f32[1,128], index: 4, kind: input, shape index: {}]
  %s5 = inlined_call_operand.vmem [shape: f32[288,1], index: 5, kind: input, shape index: {}]
  %s6 = inlined_call_operand.hbm [shape: bf16[2,16,16,128], index: 6, kind: output, shape index: {}]
  %s7 = sld [smem:[#allocation0]]
  $region61: #{_conv3x3_in_relu_pallas.1} parent=0
    _
  %s9 = ssub.s32 1, %s7
  %s10 = scalar_select 0, %s9, %s7
  $region1: #{_conv3x3_in_relu_pallas.1} parent=0
    #allocation4 [shape = 'u8[294912]{0}', space=vmem, size = 0x48000, scoped, tag = 'input window, operand 1, single buffered']
    #allocation5 [shape = 's32[2]{0}', space=sflag, size = 0x8, scoped, tag = 'scoped memory for _conv3x3_in_relu_pallas.1']
    #allocation6 [shape = 's32[2]{0}', space=sflag, size = 0x8, scoped, tag = 'scoped memory for _conv3x3_in_relu_pallas.1']
    #allocation7 [shape = 'u8[131072]{0}', space=vmem, size = 0x20000, scoped, tag = 'output window, operand 0']
    %11 = vsyncpa [#allocation5], 0
    %12 = vsyncpa [#allocation6], 0
    %s13 = scalar_lea.sflag [#allocation6], 1
    %14 = vsyncpa %s13, 0
    loop: start=0, step=1, limit=4
    $region2: #{_conv3x3_in_relu_pallas.1} parent=1 // loop_pre_header
      _
    $region3: #{_conv3x3_in_relu_pallas.1} parent=1 // loop_header
      %s16 = sphi 0, %s20
      %p17 = scmp.ge.s32.totalorder %s16, 4
      %s23 = sphi 0, %s35
      %s24 = sphi 0, %s31
      %s25 = sphi 0, %s23
      %s26 = sphi 0, %s24
      %s27 = sphi 0, %s25
      %s28 = sphi 0, %s26
      %s38 = sphi 0, %s40
      %s41 = sphi 0, %s38
      %s42 = sphi 0, %s41
      %s58 = sphi 0, %s42
      %s64 = sphi 0, %s66
      %s67 = sphi 0, %s64
      %s68 = sphi 0, %s67
      %s84 = sphi 0, %s68
      %s90 = sphi 0, %s92
      %s93 = sphi 0, %s90
      %s94 = sphi 0, %s93
      %s110 = sphi 0, %s94
      %s116 = sphi 0, %s118
      %s119 = sphi 0, %s116
      %s120 = sphi 0, %s119
      %s136 = sphi 0, %s120
      %s142 = sphi 0, %s144
      %s145 = sphi 0, %s142
      %s146 = sphi 0, %s145
      %s162 = sphi 0, %s146
      %s166 = sphi 0, %s166
      %s168 = sphi 0, %s166
      %s169 = sphi 0, %s168
      %s183 = sphi 0, %s169
      %s191 = sphi 0, %s193
      %s194 = sphi 0, %s191
      %s195 = sphi 0, %s194
      %s211 = sphi 0, %s195
    $region4: #{_conv3x3_in_relu_pallas.1} parent=1 // loop_header_branch
      %19 = sbr.rel (%p17) target = $region8
    $region5: #{_conv3x3_in_relu_pallas.1} parent=1 // loop_body
      %s21 = ssub.s32 %s16, 1
      %s22 = ssub.s32 %s16, 2
      %s29 = sadd.s32 1, %s24
      %p30 = scmp.ge.s32.totalorder %s29, 1
      %s31 = scalar_select %p30, 0, %s29
      %s32 = sadd.s32 1, %s23
      %s33 = scalar_select %p30, %s32, %s23
      %p34 = scmp.ge.s32.totalorder %s33, 2
      %s35 = scalar_select %p34, 0, %s33
      %s36 = ssub.s32 %s23, %s35
      %p37 = scmp.eq.s32.totalorder %s36, 0
      %s39 = sadd.s32 %s38, 1
      %s40 = scalar_select %p37, %s38, %s39
      %p43 = pneg %p37
      %p44 = scmp.eq.s32.totalorder %s16, 1
      %p45 = por %p43, %p44
      %p46 = scmp.ne.s32.totalorder %s38, %s41
      %p47 = scmp.eq.s32.totalorder %s16, 0
      %p48 = por %p46, %p47
      %p49 = scmp.ne.s32.totalorder %s38, %s41
      %p50 = scmp.eq.s32.totalorder %s21, 1
      %p51 = por %p49, %p50
      %p52 = scmp.ne.s32.totalorder %s41, %s42
      %p53 = scmp.eq.s32.totalorder %s21, 0
      %p54 = por %p52, %p53
      %p55 = scmp.ne.s32.totalorder %s41, %s42
      %p56 = scmp.eq.s32.totalorder %s22, 1
      %p57 = por %p55, %p56
      %p59 = scmp.ne.s32.totalorder %s42, %s58
      %p60 = scmp.eq.s32.totalorder %s22, 0
      %p61 = por %p59, %p60
      %s62 = ssub.s32 %s24, %s31
      %p63 = scmp.eq.s32.totalorder %s62, 0
      %s65 = sadd.s32 %s64, 1
      %s66 = scalar_select %p63, %s64, %s65
      %p69 = pneg %p63
      %p70 = scmp.eq.s32.totalorder %s16, 1
      %p71 = por %p69, %p70
      %p72 = scmp.ne.s32.totalorder %s64, %s67
      %p73 = scmp.eq.s32.totalorder %s16, 0
      %p74 = por %p72, %p73
      %p75 = scmp.ne.s32.totalorder %s64, %s67
      %p76 = scmp.eq.s32.totalorder %s21, 1
      %p77 = por %p75, %p76
      %p78 = scmp.ne.s32.totalorder %s67, %s68
      %p79 = scmp.eq.s32.totalorder %s21, 0
      %p80 = por %p78, %p79
      %p81 = scmp.ne.s32.totalorder %s67, %s68
      %p82 = scmp.eq.s32.totalorder %s22, 1
      %p83 = por %p81, %p82
      %p85 = scmp.ne.s32.totalorder %s68, %s84
      %p86 = scmp.eq.s32.totalorder %s22, 0
      %p87 = por %p85, %p86
      %s88 = ssub.s32 %s24, %s31
      %p89 = scmp.eq.s32.totalorder %s88, 0
      %s91 = sadd.s32 %s90, 1
      %s92 = scalar_select %p89, %s90, %s91
      %p95 = pneg %p89
      %p96 = scmp.eq.s32.totalorder %s16, 1
      %p97 = por %p95, %p96
      %p98 = scmp.ne.s32.totalorder %s90, %s93
      %p99 = scmp.eq.s32.totalorder %s16, 0
      %p100 = por %p98, %p99
      %p101 = scmp.ne.s32.totalorder %s90, %s93
      %p102 = scmp.eq.s32.totalorder %s21, 1
      %p103 = por %p101, %p102
      %p104 = scmp.ne.s32.totalorder %s93, %s94
      %p105 = scmp.eq.s32.totalorder %s21, 0
      %p106 = por %p104, %p105
      %p107 = scmp.ne.s32.totalorder %s93, %s94
      %p108 = scmp.eq.s32.totalorder %s22, 1
      %p109 = por %p107, %p108
      %p111 = scmp.ne.s32.totalorder %s94, %s110
      %p112 = scmp.eq.s32.totalorder %s22, 0
      %p113 = por %p111, %p112
      %s114 = ssub.s32 %s24, %s31
      %p115 = scmp.eq.s32.totalorder %s114, 0
      %s117 = sadd.s32 %s116, 1
      %s118 = scalar_select %p115, %s116, %s117
      %p121 = pneg %p115
      %p122 = scmp.eq.s32.totalorder %s16, 1
      %p123 = por %p121, %p122
      %p124 = scmp.ne.s32.totalorder %s116, %s119
      %p125 = scmp.eq.s32.totalorder %s16, 0
      %p126 = por %p124, %p125
      %p127 = scmp.ne.s32.totalorder %s116, %s119
      %p128 = scmp.eq.s32.totalorder %s21, 1
      %p129 = por %p127, %p128
      %p130 = scmp.ne.s32.totalorder %s119, %s120
      %p131 = scmp.eq.s32.totalorder %s21, 0
      %p132 = por %p130, %p131
      %p133 = scmp.ne.s32.totalorder %s119, %s120
      %p134 = scmp.eq.s32.totalorder %s22, 1
      %p135 = por %p133, %p134
      %p137 = scmp.ne.s32.totalorder %s120, %s136
      %p138 = scmp.eq.s32.totalorder %s22, 0
      %p139 = por %p137, %p138
      %s140 = ssub.s32 %s24, %s31
      %p141 = scmp.eq.s32.totalorder %s140, 0
      %s143 = sadd.s32 %s142, 1
      %s144 = scalar_select %p141, %s142, %s143
      %p147 = pneg %p141
      %p148 = scmp.eq.s32.totalorder %s16, 1
      %p149 = por %p147, %p148
      %p150 = scmp.ne.s32.totalorder %s142, %s145
      %p151 = scmp.eq.s32.totalorder %s16, 0
      %p152 = por %p150, %p151
      %p153 = scmp.ne.s32.totalorder %s142, %s145
      %p154 = scmp.eq.s32.totalorder %s21, 1
      %p155 = por %p153, %p154
      %p156 = scmp.ne.s32.totalorder %s145, %s146
      %p157 = scmp.eq.s32.totalorder %s21, 0
      %p158 = por %p156, %p157
      %p159 = scmp.ne.s32.totalorder %s145, %s146
      %p160 = scmp.eq.s32.totalorder %s22, 1
      %p161 = por %p159, %p160
      %p163 = scmp.ne.s32.totalorder %s146, %s162
      %p164 = scmp.eq.s32.totalorder %s22, 0
      %p165 = por %p163, %p164
      %s167 = sadd.s32 %s166, 1
      %p170 = scmp.eq.s32.totalorder %s16, 1
      %p171 = scmp.ne.s32.totalorder %s166, %s168
      %p172 = scmp.eq.s32.totalorder %s16, 0
      %p173 = por %p171, %p172
      %p174 = scmp.ne.s32.totalorder %s166, %s168
      %p175 = scmp.eq.s32.totalorder %s21, 1
      %p176 = por %p174, %p175
      %p177 = scmp.ne.s32.totalorder %s168, %s169
      %p178 = scmp.eq.s32.totalorder %s21, 0
      %p179 = por %p177, %p178
      %p180 = scmp.ne.s32.totalorder %s168, %s169
      %p181 = scmp.eq.s32.totalorder %s22, 1
      %p182 = por %p180, %p181
      %p184 = scmp.ne.s32.totalorder %s169, %s183
      %p185 = scmp.eq.s32.totalorder %s22, 0
      %p186 = por %p184, %p185
      %s187 = ssub.s32 %s23, %s35
      %s188 = ssub.s32 %s24, %s31
      %s189 = sor.u32 %s187, %s188
      %p190 = scmp.eq.s32.totalorder %s189, 0
      %s192 = sadd.s32 %s191, 1
      %s193 = scalar_select %p190, %s191, %s192
      %p196 = pneg %p190
      %p197 = scmp.eq.s32.totalorder %s16, 1
      %p198 = por %p196, %p197
      %p199 = scmp.ne.s32.totalorder %s191, %s194
      %p200 = scmp.eq.s32.totalorder %s16, 0
      %p201 = por %p199, %p200
      %p202 = scmp.ne.s32.totalorder %s191, %s194
      %p203 = scmp.eq.s32.totalorder %s21, 1
      %p204 = por %p202, %p203
      %p205 = scmp.ne.s32.totalorder %s194, %s195
      %p206 = scmp.eq.s32.totalorder %s21, 0
      %p207 = por %p205, %p206
      %p208 = scmp.ne.s32.totalorder %s194, %s195
      %p209 = scmp.eq.s32.totalorder %s22, 1
      %p210 = por %p208, %p209
      %p212 = scmp.ne.s32.totalorder %s195, %s211
      %p213 = scmp.eq.s32.totalorder %s22, 0
      %p214 = por %p212, %p213
      %p215 = scmp.le.s32.totalorder 1, %s16
      %p216 = scmp.lt.s32.totalorder %s16, 3
      %p217 = pnand %p215, %p216
      %p218 = pneg %p217
      // Predicated region
      $region9: #{_conv3x3_in_relu_pallas.1} parent=5 // pred_check
        _
      $region10: #{_conv3x3_in_relu_pallas.1} parent=5 // pred_check_branch
        %220 = sbr.rel (%p217) target = $region12
      $region11: #{_conv3x3_in_relu_pallas.1} parent=5 // pred_region
        %s221 = ssub.s32 %s16, 1
        // Predicated region
        $region13: #{_conv3x3_in_relu_pallas.1} parent=11 // pred_check
          %p222 = pneg %p80
        $region14: #{_conv3x3_in_relu_pallas.1} parent=11 // pred_check_branch
          %224 = sbr.rel (%p222) target = $region16
        $region15: #{_conv3x3_in_relu_pallas.1} parent=11 // pred_region
          %s226 = ssub.s32 9216, 9216
          %227 = vsyncadd [#allocation5], %s226
          %s228 = smul.addr %s26, 64
          %s229 = scalar_lea.hbm %s1, %s228
          %s230 = sshll.u32 [#allocation4], 4
          %s231 = int_to_ptr.vmem [resolvable:$true] %s230
          %236 = dma.hbm_to_vmem [thread:$0]  %s229, 9216, %s231, [#allocation5], 64, 64, 4
        $region16: #{_conv3x3_in_relu_pallas.1} parent=11 // pred_fallthru
          _
        // Predicated region
        $region17: #{_conv3x3_in_relu_pallas.1} parent=11 // pred_check
          %p237 = pneg %p106
        $region18: #{_conv3x3_in_relu_pallas.1} parent=11 // pred_check_branch
          %239 = sbr.rel (%p237) target = $region20
        $region19: #{_conv3x3_in_relu_pallas.1} parent=11 // pred_region
          %p240 = scmp.lt.s32.totalorder %s26, 0
          %s241 = scalar_select %p240, %s26, 0
          %s242 = scalar_lea.vmem %s2, %s241
        $region20: #{_conv3x3_in_relu_pallas.1} parent=11 // pred_fallthru
          _
        // Predicated region
        $region21: #{_conv3x3_in_relu_pallas.1} parent=11 // pred_check
          %p243 = pneg %p132
        $region22: #{_conv3x3_in_relu_pallas.1} parent=11 // pred_check_branch
          %245 = sbr.rel (%p243) target = $region24
        $region23: #{_conv3x3_in_relu_pallas.1} parent=11 // pred_region
          %p246 = scmp.lt.s32.totalorder %s26, 0
          %s247 = scalar_select %p246, %s26, 0
          %s248 = scalar_lea.vmem %s3, %s247
        $region24: #{_conv3x3_in_relu_pallas.1} parent=11 // pred_fallthru
          _
        // Predicated region
        $region25: #{_conv3x3_in_relu_pallas.1} parent=11 // pred_check
          %p249 = pneg %p158
        $region26: #{_conv3x3_in_relu_pallas.1} parent=11 // pred_check_branch
          %251 = sbr.rel (%p249) target = $region28
        $region27: #{_conv3x3_in_relu_pallas.1} parent=11 // pred_region
          %p252 = scmp.lt.s32.totalorder %s26, 0
          %s253 = scalar_select %p252, %s26, 0
          %s254 = scalar_lea.vmem %s4, %s253
        $region28: #{_conv3x3_in_relu_pallas.1} parent=11 // pred_fallthru
          _
        // Predicated region
        $region29: #{_conv3x3_in_relu_pallas.1} parent=11 // pred_check
          %p255 = pneg %p179
        $region30: #{_conv3x3_in_relu_pallas.1} parent=11 // pred_check_branch
          %257 = sbr.rel (%p255) target = $region32
        $region31: #{_conv3x3_in_relu_pallas.1} parent=11 // pred_region
          _
        $region32: #{_conv3x3_in_relu_pallas.1} parent=11 // pred_fallthru
          _
      $region12: #{_conv3x3_in_relu_pallas.1} parent=5 // pred_fallthru
        _
      %p258 = scmp.lt.s32.totalorder %s16, 2
      // Predicated region
      $region33: #{_conv3x3_in_relu_pallas.1} parent=5 // pred_check
        %p259 = pneg %p258
      $region34: #{_conv3x3_in_relu_pallas.1} parent=5 // pred_check_branch
        %261 = sbr.rel (%p259) target = $region36
      $region35: #{_conv3x3_in_relu_pallas.1} parent=5 // pred_region
        // Predicated region
        $region37: #{_conv3x3_in_relu_pallas.1} parent=35 // pred_check
          %p262 = pneg %p48
        $region38: #{_conv3x3_in_relu_pallas.1} parent=35 // pred_check_branch
          %264 = sbr.rel (%p262) target = $region40
        $region39: #{_conv3x3_in_relu_pallas.1} parent=35 // pred_region
          %p265 = scmp.lt.s32.totalorder %s23, 1
          %s266 = scalar_select %p265, %s23, 1
          %s267 = smul.addr %s266, 32
          %s268 = smul.addr %s267, 4
          %s269 = scalar_lea.vmem %s0, %s268
        $region40: #{_conv3x3_in_relu_pallas.1} parent=35 // pred_fallthru
          _
      $region36: #{_conv3x3_in_relu_pallas.1} parent=5 // pred_fallthru
        _
      %p270 = scmp.le.s32.totalorder 1, %s16
      %p271 = scmp.lt.s32.totalorder %s16, 3
      %p272 = pnand %p270, %p271
      %p273 = pneg %p272
      // Predicated region
      $region41: #{_conv3x3_in_relu_pallas.1} parent=5 // pred_check
        _
      $region42: #{_conv3x3_in_relu_pallas.1} parent=5 // pred_check_branch
        %275 = sbr.rel (%p272) target = $region44
      $region43: #{_conv3x3_in_relu_pallas.1} parent=5 // pred_region
        %s276 = ssub.s32 %s16, 1
        // Predicated region
        $region45: #{_conv3x3_in_relu_pallas.1} parent=43 // pred_check
          %p277 = pneg %p80
        $region46: #{_conv3x3_in_relu_pallas.1} parent=43 // pred_check_branch
          %279 = sbr.rel (%p277) target = $region48
        $region47: #{_conv3x3_in_relu_pallas.1} parent=43 // pred_region
          %280 = dma.done [#allocation5], 9216
        $region48: #{_conv3x3_in_relu_pallas.1} parent=43 // pred_fallthru
          _
        %p281 = scmp.lt.s32.totalorder %s25, 1
        %s282 = scalar_select %p281, %s25, 1
        %s283 = smul.addr %s282, 32
        %s284 = smul.addr %s283, 4
        %s285 = scalar_lea.vmem %s0, %s284
        %p286 = pneg %p54
        %p287 = pneg %p51
        %p288 = pneg %p80
        %p289 = pneg %p77
        %p290 = scmp.lt.s32.totalorder %s26, 0
        %s291 = scalar_select %p290, %s26, 0
        %s292 = scalar_lea.vmem %s2, %s291
        %p293 = pneg %p106
        %p294 = pneg %p103
        %p295 = scmp.lt.s32.totalorder %s26, 0
        %s296 = scalar_select %p295, %s26, 0
        %s297 = scalar_lea.vmem %s3, %s296
        %p298 = pneg %p132
        %p299 = pneg %p129
        %p300 = scmp.lt.s32.totalorder %s26, 0
        %s301 = scalar_select %p300, %s26, 0
        %s302 = scalar_lea.vmem %s4, %s301
        %p303 = pneg %p158
        %p304 = pneg %p155
        %p305 = pneg %p179
        %p306 = pneg %p176
        %p307 = pneg %p207
        %p308 = pneg %p204
        %s309 = sand.u32 %s194, 1
        %s310 = scalar_lea.sflag [#allocation6], %s309
        %s311 = sand.u32 %s194, 1
        %s312 = smul.addr %s311, 128
        %s313 = scalar_lea.vmem [#allocation7], %s312
        %p314 = scmp.lt.s32.totalorder %s25, 1
        %s315 = scalar_select %p314, %s25, 1
        %s316 = smul.addr %s315, 32
        %s317 = smul.addr %s316, 4
        %s318 = scalar_lea.vmem %s0, %s317
        %p319 = scmp.lt.s32.totalorder %s26, 0
        %s320 = scalar_select %p319, %s26, 0
        %s321 = scalar_lea.vmem %s2, %s320
        %p322 = scmp.lt.s32.totalorder %s26, 0
        %s323 = scalar_select %p322, %s26, 0
        %s324 = scalar_lea.vmem %s3, %s323
        %p325 = scmp.lt.s32.totalorder %s26, 0
        %s326 = scalar_select %p325, %s26, 0
        %s327 = scalar_lea.vmem %s4, %s326
        %329 = vst [vmem:[#allocation2] sm:$0xff] 0.0
        %330 = vst [vmem:[#allocation2 + $0x8] sm:$0xff] 0.0
        %331 = vst [vmem:[#allocation2 + $0x10] sm:$0xff] 0.0
        %332 = vst [vmem:[#allocation2 + $0x18] sm:$0xff] 0.0
        %333 = vst [vmem:[#allocation2 + $0x20] sm:$0xff] 0.0
        %334 = vst [vmem:[#allocation2 + $0x28] sm:$0xff] 0.0
        %335 = vst [vmem:[#allocation2 + $0x30] sm:$0xff] 0.0
        %336 = vst [vmem:[#allocation2 + $0x38] sm:$0xff] 0.0
        %337 = vst [vmem:[#allocation2 + $0x40] sm:$0xff] 0.0
        %338 = vst [vmem:[#allocation2 + $0x48] sm:$0xff] 0.0
        %339 = vst [vmem:[#allocation2 + $0x50] sm:$0xff] 0.0
        %340 = vst [vmem:[#allocation2 + $0x58] sm:$0xff] 0.0
        %341 = vst [vmem:[#allocation2 + $0x60] sm:$0xff] 0.0
        %342 = vst [vmem:[#allocation2 + $0x68] sm:$0xff] 0.0
        %343 = vst [vmem:[#allocation2 + $0x70] sm:$0xff] 0.0
        %344 = vst [vmem:[#allocation2 + $0x78] sm:$0xff] 0.0
        %345 = vst [vmem:[#allocation2 + $0x80] sm:$0xff] 0.0
        %346 = vst [vmem:[#allocation2 + $0x88] sm:$0xff] 0.0
        %347 = vst [vmem:[#allocation2 + $0x90] sm:$0xff] 0.0
        %348 = vst [vmem:[#allocation2 + $0x98] sm:$0xff] 0.0
        %349 = vst [vmem:[#allocation2 + $0xa0] sm:$0xff] 0.0
        %350 = vst [vmem:[#allocation2 + $0xa8] sm:$0xff] 0.0
        %351 = vst [vmem:[#allocation2 + $0xb0] sm:$0xff] 0.0
        %352 = vst [vmem:[#allocation2 + $0xb8] sm:$0xff] 0.0
        %353 = vst [vmem:[#allocation2 + $0xc0] sm:$0xff] 0.0
        %354 = vst [vmem:[#allocation2 + $0xc8] sm:$0xff] 0.0
        %355 = vst [vmem:[#allocation2 + $0xd0] sm:$0xff] 0.0
        %356 = vst [vmem:[#allocation2 + $0xd8] sm:$0xff] 0.0
        %357 = vst [vmem:[#allocation2 + $0xe0] sm:$0xff] 0.0
        %358 = vst [vmem:[#allocation2 + $0xe8] sm:$0xff] 0.0
        %359 = vst [vmem:[#allocation2 + $0xf0] sm:$0xff] 0.0
        %360 = vst [vmem:[#allocation2 + $0xf8] sm:$0xff] 0.0
        %361 = vst [vmem:[#allocation2 + $0x100] sm:$0xff] 0.0
        %362 = vst [vmem:[#allocation2 + $0x108] sm:$0xff] 0.0
        %363 = vst [vmem:[#allocation2 + $0x110] sm:$0xff] 0.0
        %364 = vst [vmem:[#allocation2 + $0x118] sm:$0xff] 0.0
        %365 = vst [vmem:[#allocation2 + $0x120] sm:$0xff] 0.0
        %366 = vst [vmem:[#allocation2 + $0x128] sm:$0xff] 0.0
        %367 = vst [vmem:[#allocation2 + $0x130] sm:$0xff] 0.0
        %368 = vst [vmem:[#allocation2 + $0x138] sm:$0xff] 0.0
        %369 = vst [vmem:[#allocation2 + $0x140] sm:$0xff] 0.0
        %370 = vst [vmem:[#allocation2 + $0x148] sm:$0xff] 0.0
        %371 = vst [vmem:[#allocation2 + $0x150] sm:$0xff] 0.0
        %v372 = vld [vmem:[%s318] sm:$0xf]
        %v373 = vld [vmem:[%s318 + $0x4] sm:$0xf]
        %v374 = vunpack.c.l.bf16 %v372
        %v375 = vunpack.c.l.bf16 %v373
        %376 = vst [vmem:[#allocation2 + $0x13] sm:$0xff] %v374
        %377 = vst [vmem:[#allocation2 + $0x1b] sm:$0xff] %v375
        %s378 = scalar_lea.vmem %s318, 8
        %v379 = vld [vmem:[%s378] sm:$0xf]
        %v380 = vld [vmem:[%s378 + $0x4] sm:$0xf]
        %v381 = vunpack.c.l.bf16 %v379
        %v382 = vunpack.c.l.bf16 %v380
        %383 = vst [vmem:[#allocation2 + $0x25] sm:$0xff] %v381
        %384 = vst [vmem:[#allocation2 + $0x2d] sm:$0xff] %v382
        %s385 = scalar_lea.vmem %s318, 16
        %v386 = vld [vmem:[%s385] sm:$0xf]
        %v387 = vld [vmem:[%s385 + $0x4] sm:$0xf]
        %v388 = vunpack.c.l.bf16 %v386
        %v389 = vunpack.c.l.bf16 %v387
        %390 = vst [vmem:[#allocation2 + $0x37] sm:$0xff] %v388
        %391 = vst [vmem:[#allocation2 + $0x3f] sm:$0xff] %v389
        %s392 = scalar_lea.vmem %s318, 24
        %v393 = vld [vmem:[%s392] sm:$0xf]
        %v394 = vld [vmem:[%s392 + $0x4] sm:$0xf]
        %v395 = vunpack.c.l.bf16 %v393
        %v396 = vunpack.c.l.bf16 %v394
        %397 = vst [vmem:[#allocation2 + $0x49] sm:$0xff] %v395
        %398 = vst [vmem:[#allocation2 + $0x51] sm:$0xff] %v396
        %s399 = scalar_lea.vmem %s318, 32
        %v400 = vld [vmem:[%s399] sm:$0xf]
        %v401 = vld [vmem:[%s399 + $0x4] sm:$0xf]
        %v402 = vunpack.c.l.bf16 %v400
        %v403 = vunpack.c.l.bf16 %v401
        %404 = vst [vmem:[#allocation2 + $0x5b] sm:$0xff] %v402
        %405 = vst [vmem:[#allocation2 + $0x63] sm:$0xff] %v403
        %s406 = scalar_lea.vmem %s318, 40
        %v407 = vld [vmem:[%s406] sm:$0xf]
        %v408 = vld [vmem:[%s406 + $0x4] sm:$0xf]
        %v409 = vunpack.c.l.bf16 %v407
        %v410 = vunpack.c.l.bf16 %v408
        %411 = vst [vmem:[#allocation2 + $0x6d] sm:$0xff] %v409
        %412 = vst [vmem:[#allocation2 + $0x75] sm:$0xff] %v410
        %s413 = scalar_lea.vmem %s318, 48
        %v414 = vld [vmem:[%s413] sm:$0xf]
        %v415 = vld [vmem:[%s413 + $0x4] sm:$0xf]
        %v416 = vunpack.c.l.bf16 %v414
        %v417 = vunpack.c.l.bf16 %v415
        %418 = vst [vmem:[#allocation2 + $0x7f] sm:$0xff] %v416
        %419 = vst [vmem:[#allocation2 + $0x87] sm:$0xff] %v417
        %s420 = scalar_lea.vmem %s318, 56
        %v421 = vld [vmem:[%s420] sm:$0xf]
        %v422 = vld [vmem:[%s420 + $0x4] sm:$0xf]
        %v423 = vunpack.c.l.bf16 %v421
        %v424 = vunpack.c.l.bf16 %v422
        %425 = vst [vmem:[#allocation2 + $0x91] sm:$0xff] %v423
        %426 = vst [vmem:[#allocation2 + $0x99] sm:$0xff] %v424
        %s427 = scalar_lea.vmem %s318, 64
        %v428 = vld [vmem:[%s427] sm:$0xf]
        %v429 = vld [vmem:[%s427 + $0x4] sm:$0xf]
        %v430 = vunpack.c.l.bf16 %v428
        %v431 = vunpack.c.l.bf16 %v429
        %432 = vst [vmem:[#allocation2 + $0xa3] sm:$0xff] %v430
        %433 = vst [vmem:[#allocation2 + $0xab] sm:$0xff] %v431
        %s434 = scalar_lea.vmem %s318, 72
        %v435 = vld [vmem:[%s434] sm:$0xf]
        %v436 = vld [vmem:[%s434 + $0x4] sm:$0xf]
        %v437 = vunpack.c.l.bf16 %v435
        %v438 = vunpack.c.l.bf16 %v436
        %439 = vst [vmem:[#allocation2 + $0xb5] sm:$0xff] %v437
        %440 = vst [vmem:[#allocation2 + $0xbd] sm:$0xff] %v438
        %s441 = scalar_lea.vmem %s318, 80
        %v442 = vld [vmem:[%s441] sm:$0xf]
        %v443 = vld [vmem:[%s441 + $0x4] sm:$0xf]
        %v444 = vunpack.c.l.bf16 %v442
        %v445 = vunpack.c.l.bf16 %v443
        %446 = vst [vmem:[#allocation2 + $0xc7] sm:$0xff] %v444
        %447 = vst [vmem:[#allocation2 + $0xcf] sm:$0xff] %v445
        %s448 = scalar_lea.vmem %s318, 88
        %v449 = vld [vmem:[%s448] sm:$0xf]
        %v450 = vld [vmem:[%s448 + $0x4] sm:$0xf]
        %v451 = vunpack.c.l.bf16 %v449
        %v452 = vunpack.c.l.bf16 %v450
        %453 = vst [vmem:[#allocation2 + $0xd9] sm:$0xff] %v451
        %454 = vst [vmem:[#allocation2 + $0xe1] sm:$0xff] %v452
        %s455 = scalar_lea.vmem %s318, 96
        %v456 = vld [vmem:[%s455] sm:$0xf]
        %v457 = vld [vmem:[%s455 + $0x4] sm:$0xf]
        %v458 = vunpack.c.l.bf16 %v456
        %v459 = vunpack.c.l.bf16 %v457
        %460 = vst [vmem:[#allocation2 + $0xeb] sm:$0xff] %v458
        %461 = vst [vmem:[#allocation2 + $0xf3] sm:$0xff] %v459
        %s462 = scalar_lea.vmem %s318, 104
        %v463 = vld [vmem:[%s462] sm:$0xf]
        %v464 = vld [vmem:[%s462 + $0x4] sm:$0xf]
        %v465 = vunpack.c.l.bf16 %v463
        %v466 = vunpack.c.l.bf16 %v464
        %467 = vst [vmem:[#allocation2 + $0xfd] sm:$0xff] %v465
        %468 = vst [vmem:[#allocation2 + $0x105] sm:$0xff] %v466
        %s469 = scalar_lea.vmem %s318, 112
        %v470 = vld [vmem:[%s469] sm:$0xf]
        %v471 = vld [vmem:[%s469 + $0x4] sm:$0xf]
        %v472 = vunpack.c.l.bf16 %v470
        %v473 = vunpack.c.l.bf16 %v471
        %474 = vst [vmem:[#allocation2 + $0x10f] sm:$0xff] %v472
        %475 = vst [vmem:[#allocation2 + $0x117] sm:$0xff] %v473
        %s476 = scalar_lea.vmem %s318, 120
        %v477 = vld [vmem:[%s476] sm:$0xf]
        %v478 = vld [vmem:[%s476 + $0x4] sm:$0xf]
        %v479 = vunpack.c.l.bf16 %v477
        %v480 = vunpack.c.l.bf16 %v478
        %481 = vst [vmem:[#allocation2 + $0x121] sm:$0xff] %v479
        %482 = vst [vmem:[#allocation2 + $0x129] sm:$0xff] %v480
        %v483 = vld [vmem:[#allocation2] sm:$0xff]
        %v484 = vld [vmem:[#allocation2 + $0x8] sm:$0xff]
        %v485 = vld [vmem:[#allocation2 + $0x10] sm:$0xff]
        %v486 = vld [vmem:[#allocation2 + $0x18] sm:$0xff]
        %v487 = vld [vmem:[#allocation2 + $0x20] sm:$0xff]
        %v488 = vld [vmem:[#allocation2 + $0x28] sm:$0xff]
        %v489 = vld [vmem:[#allocation2 + $0x30] sm:$0xff]
        %v490 = vld [vmem:[#allocation2 + $0x38] sm:$0xff]
        %v491 = vld [vmem:[#allocation2 + $0x40] sm:$0xff]
        %v492 = vld [vmem:[#allocation2 + $0x48] sm:$0xff]
        %v493 = vld [vmem:[#allocation2 + $0x50] sm:$0xff]
        %v494 = vld [vmem:[#allocation2 + $0x58] sm:$0xff]
        %v495 = vld [vmem:[#allocation2 + $0x60] sm:$0xff]
        %v496 = vld [vmem:[#allocation2 + $0x68] sm:$0xff]
        %v497 = vld [vmem:[#allocation2 + $0x70] sm:$0xff]
        %v498 = vld [vmem:[#allocation2 + $0x78] sm:$0xff]
        %v499 = vld [vmem:[#allocation2 + $0x80] sm:$0xff]
        %v500 = vld [vmem:[#allocation2 + $0x88] sm:$0xff]
        %v501 = vld [vmem:[#allocation2 + $0x90] sm:$0xff]
        %v502 = vld [vmem:[#allocation2 + $0x98] sm:$0xff]
        %v503 = vld [vmem:[#allocation2 + $0xa0] sm:$0xff]
        %v504 = vld [vmem:[#allocation2 + $0xa8] sm:$0xff]
        %v505 = vld [vmem:[#allocation2 + $0xb0] sm:$0xff]
        %v506 = vld [vmem:[#allocation2 + $0xb8] sm:$0xff]
        %v507 = vld [vmem:[#allocation2 + $0xc0] sm:$0xff]
        %v508 = vld [vmem:[#allocation2 + $0xc8] sm:$0xff]
        %v509 = vld [vmem:[#allocation2 + $0xd0] sm:$0xff]
        %v510 = vld [vmem:[#allocation2 + $0xd8] sm:$0xff]
        %v511 = vld [vmem:[#allocation2 + $0xe0] sm:$0xff]
        %v512 = vld [vmem:[#allocation2 + $0xe8] sm:$0xff]
        %v513 = vld [vmem:[#allocation2 + $0xf0] sm:$0xff]
        %v514 = vld [vmem:[#allocation2 + $0xf8] sm:$0xff]
        %v515 = vld [vmem:[#allocation2 + $0x100] sm:$0xff]
        %v516 = vld [vmem:[#allocation2 + $0x108] sm:$0xff]
        %v517 = vld [vmem:[#allocation2 + $0x110] sm:$0xff]
        %v518 = vld [vmem:[#allocation2 + $0x118] sm:$0xff]
        %v519 = vpack.c.bf16 %v484, %v483
        %v520 = vpack.c.bf16 %v486, %v485
        %v521 = vpack.c.bf16 %v488, %v487
        %v522 = vpack.c.bf16 %v490, %v489
        %v523 = vpack.c.bf16 %v492, %v491
        %v524 = vpack.c.bf16 %v494, %v493
        %v525 = vpack.c.bf16 %v496, %v495
        %v526 = vpack.c.bf16 %v498, %v497
        %v527 = vpack.c.bf16 %v500, %v499
        %v528 = vpack.c.bf16 %v502, %v501
        %v529 = vpack.c.bf16 %v504, %v503
        %v530 = vpack.c.bf16 %v506, %v505
        %v531 = vpack.c.bf16 %v508, %v507
        %v532 = vpack.c.bf16 %v510, %v509
        %v533 = vpack.c.bf16 %v512, %v511
        %v534 = vpack.c.bf16 %v514, %v513
        %v535 = vpack.c.bf16 %v516, %v515
        %v536 = vpack.c.bf16 %v518, %v517
        %537 = vst [vmem:[#allocation3] sm:$0xff] %v519
        %538 = vst [vmem:[#allocation3 + $0x48] sm:$0xff] %v520
        %539 = vst [vmem:[#allocation3 + $0x90] sm:$0xff] %v521
        %540 = vst [vmem:[#allocation3 + $0xd8] sm:$0xff] %v522
        %541 = vst [vmem:[#allocation3 + $0x120] sm:$0xff] %v523
        %542 = vst [vmem:[#allocation3 + $0x168] sm:$0xff] %v524
        %543 = vst [vmem:[#allocation3 + $0x1b0] sm:$0xff] %v525
        %544 = vst [vmem:[#allocation3 + $0x1f8] sm:$0xff] %v526
        %545 = vst [vmem:[#allocation3 + $0x240] sm:$0xff] %v527
        %546 = vst [vmem:[#allocation3 + $0x288] sm:$0xff] %v528
        %547 = vst [vmem:[#allocation3 + $0x2d0] sm:$0xff] %v529
        %548 = vst [vmem:[#allocation3 + $0x318] sm:$0xff] %v530
        %549 = vst [vmem:[#allocation3 + $0x360] sm:$0xff] %v531
        %550 = vst [vmem:[#allocation3 + $0x3a8] sm:$0xff] %v532
        %551 = vst [vmem:[#allocation3 + $0x3f0] sm:$0xff] %v533
        %552 = vst [vmem:[#allocation3 + $0x438] sm:$0xff] %v534
        %553 = vst [vmem:[#allocation3 + $0x480] sm:$0xff] %v535
        %554 = vst [vmem:[#allocation3 + $0x4c8] sm:$0xff] %v536
        %v555 = vld [vmem:[#allocation2 + $0x1] sm:$0xff]
        %v556 = vld [vmem:[#allocation2 + $0x9] sm:$0xff]
        %v557 = vld [vmem:[#allocation2 + $0x11] sm:$0xff]
        %v558 = vld [vmem:[#allocation2 + $0x19] sm:$0xff]
        %v559 = vld [vmem:[#allocation2 + $0x21] sm:$0xff]
        %v560 = vld [vmem:[#allocation2 + $0x29] sm:$0xff]
        %v561 = vld [vmem:[#allocation2 + $0x31] sm:$0xff]
        %v562 = vld [vmem:[#allocation2 + $0x39] sm:$0xff]
        %v563 = vld [vmem:[#allocation2 + $0x41] sm:$0xff]
        %v564 = vld [vmem:[#allocation2 + $0x49] sm:$0xff]
        %v565 = vld [vmem:[#allocation2 + $0x51] sm:$0xff]
        %v566 = vld [vmem:[#allocation2 + $0x59] sm:$0xff]
        %v567 = vld [vmem:[#allocation2 + $0x61] sm:$0xff]
        %v568 = vld [vmem:[#allocation2 + $0x69] sm:$0xff]
        %v569 = vld [vmem:[#allocation2 + $0x71] sm:$0xff]
        %v570 = vld [vmem:[#allocation2 + $0x79] sm:$0xff]
        %v571 = vld [vmem:[#allocation2 + $0x81] sm:$0xff]
        %v572 = vld [vmem:[#allocation2 + $0x89] sm:$0xff]
        %v573 = vld [vmem:[#allocation2 + $0x91] sm:$0xff]
        %v574 = vld [vmem:[#allocation2 + $0x99] sm:$0xff]
        %v575 = vld [vmem:[#allocation2 + $0xa1] sm:$0xff]
        %v576 = vld [vmem:[#allocation2 + $0xa9] sm:$0xff]
        %v577 = vld [vmem:[#allocation2 + $0xb1] sm:$0xff]
        %v578 = vld [vmem:[#allocation2 + $0xb9] sm:$0xff]
        %v579 = vld [vmem:[#allocation2 + $0xc1] sm:$0xff]
        %v580 = vld [vmem:[#allocation2 + $0xc9] sm:$0xff]
        %v581 = vld [vmem:[#allocation2 + $0xd1] sm:$0xff]
        %v582 = vld [vmem:[#allocation2 + $0xd9] sm:$0xff]
        %v583 = vld [vmem:[#allocation2 + $0xe1] sm:$0xff]
        %v584 = vld [vmem:[#allocation2 + $0xe9] sm:$0xff]
        %v585 = vld [vmem:[#allocation2 + $0xf1] sm:$0xff]
        %v586 = vld [vmem:[#allocation2 + $0xf9] sm:$0xff]
        %v587 = vld [vmem:[#allocation2 + $0x101] sm:$0xff]
        %v588 = vld [vmem:[#allocation2 + $0x109] sm:$0xff]
        %v589 = vld [vmem:[#allocation2 + $0x111] sm:$0xff]
        %v590 = vld [vmem:[#allocation2 + $0x119] sm:$0xff]
        %v591 = vpack.c.bf16 %v556, %v555
        %v592 = vpack.c.bf16 %v558, %v557
        %v593 = vpack.c.bf16 %v560, %v559
        %v594 = vpack.c.bf16 %v562, %v561
        %v595 = vpack.c.bf16 %v564, %v563
        %v596 = vpack.c.bf16 %v566, %v565
        %v597 = vpack.c.bf16 %v568, %v567
        %v598 = vpack.c.bf16 %v570, %v569
        %v599 = vpack.c.bf16 %v572, %v571
        %v600 = vpack.c.bf16 %v574, %v573
        %v601 = vpack.c.bf16 %v576, %v575
        %v602 = vpack.c.bf16 %v578, %v577
        %v603 = vpack.c.bf16 %v580, %v579
        %v604 = vpack.c.bf16 %v582, %v581
        %v605 = vpack.c.bf16 %v584, %v583
        %v606 = vpack.c.bf16 %v586, %v585
        %v607 = vpack.c.bf16 %v588, %v587
        %v608 = vpack.c.bf16 %v590, %v589
        %609 = vst [vmem:[#allocation3 + $0x8] sm:$0xff] %v591
        %610 = vst [vmem:[#allocation3 + $0x50] sm:$0xff] %v592
        %611 = vst [vmem:[#allocation3 + $0x98] sm:$0xff] %v593
        %612 = vst [vmem:[#allocation3 + $0xe0] sm:$0xff] %v594
        %613 = vst [vmem:[#allocation3 + $0x128] sm:$0xff] %v595
        %614 = vst [vmem:[#allocation3 + $0x170] sm:$0xff] %v596
        %615 = vst [vmem:[#allocation3 + $0x1b8] sm:$0xff] %v597
        %616 = vst [vmem:[#allocation3 + $0x200] sm:$0xff] %v598
        %617 = vst [vmem:[#allocation3 + $0x248] sm:$0xff] %v599
        %618 = vst [vmem:[#allocation3 + $0x290] sm:$0xff] %v600
        %619 = vst [vmem:[#allocation3 + $0x2d8] sm:$0xff] %v601
        %620 = vst [vmem:[#allocation3 + $0x320] sm:$0xff] %v602
        %621 = vst [vmem:[#allocation3 + $0x368] sm:$0xff] %v603
        %622 = vst [vmem:[#allocation3 + $0x3b0] sm:$0xff] %v604
        %623 = vst [vmem:[#allocation3 + $0x3f8] sm:$0xff] %v605
        %624 = vst [vmem:[#allocation3 + $0x440] sm:$0xff] %v606
        %625 = vst [vmem:[#allocation3 + $0x488] sm:$0xff] %v607
        %626 = vst [vmem:[#allocation3 + $0x4d0] sm:$0xff] %v608
        %v627 = vld [vmem:[#allocation2 + $0x2] sm:$0xff]
        %v628 = vld [vmem:[#allocation2 + $0xa] sm:$0xff]
        %v629 = vld [vmem:[#allocation2 + $0x12] sm:$0xff]
        %v630 = vld [vmem:[#allocation2 + $0x1a] sm:$0xff]
        %v631 = vld [vmem:[#allocation2 + $0x22] sm:$0xff]
        %v632 = vld [vmem:[#allocation2 + $0x2a] sm:$0xff]
        %v633 = vld [vmem:[#allocation2 + $0x32] sm:$0xff]
        %v634 = vld [vmem:[#allocation2 + $0x3a] sm:$0xff]
        %v635 = vld [vmem:[#allocation2 + $0x42] sm:$0xff]
        %v636 = vld [vmem:[#allocation2 + $0x4a] sm:$0xff]
        %v637 = vld [vmem:[#allocation2 + $0x52] sm:$0xff]
        %v638 = vld [vmem:[#allocation2 + $0x5a] sm:$0xff]
        %v639 = vld [vmem:[#allocation2 + $0x62] sm:$0xff]
        %v640 = vld [vmem:[#allocation2 + $0x6a] sm:$0xff]
        %v641 = vld [vmem:[#allocation2 + $0x72] sm:$0xff]
        %v642 = vld [vmem:[#allocation2 + $0x7a] sm:$0xff]
        %v643 = vld [vmem:[#allocation2 + $0x82] sm:$0xff]
        %v644 = vld [vmem:[#allocation2 + $0x8a] sm:$0xff]
        %v645 = vld [vmem:[#allocation2 + $0x92] sm:$0xff]
        %v646 = vld [vmem:[#allocation2 + $0x9a] sm:$0xff]
        %v647 = vld [vmem:[#allocation2 + $0xa2] sm:$0xff]
        %v648 = vld [vmem:[#allocation2 + $0xaa] sm:$0xff]
        %v649 = vld [vmem:[#allocation2 + $0xb2] sm:$0xff]
        %v650 = vld [vmem:[#allocation2 + $0xba] sm:$0xff]
        %v651 = vld [vmem:[#allocation2 + $0xc2] sm:$0xff]
        %v652 = vld [vmem:[#allocation2 + $0xca] sm:$0xff]
        %v653 = vld [vmem:[#allocation2 + $0xd2] sm:$0xff]
        %v654 = vld [vmem:[#allocation2 + $0xda] sm:$0xff]
        %v655 = vld [vmem:[#allocation2 + $0xe2] sm:$0xff]
        %v656 = vld [vmem:[#allocation2 + $0xea] sm:$0xff]
        %v657 = vld [vmem:[#allocation2 + $0xf2] sm:$0xff]
        %v658 = vld [vmem:[#allocation2 + $0xfa] sm:$0xff]
        %v659 = vld [vmem:[#allocation2 + $0x102] sm:$0xff]
        %v660 = vld [vmem:[#allocation2 + $0x10a] sm:$0xff]
        %v661 = vld [vmem:[#allocation2 + $0x112] sm:$0xff]
        %v662 = vld [vmem:[#allocation2 + $0x11a] sm:$0xff]
        %v663 = vpack.c.bf16 %v628, %v627
        %v664 = vpack.c.bf16 %v630, %v629
        %v665 = vpack.c.bf16 %v632, %v631
        %v666 = vpack.c.bf16 %v634, %v633
        %v667 = vpack.c.bf16 %v636, %v635
        %v668 = vpack.c.bf16 %v638, %v637
        %v669 = vpack.c.bf16 %v640, %v639
        %v670 = vpack.c.bf16 %v642, %v641
        %v671 = vpack.c.bf16 %v644, %v643
        %v672 = vpack.c.bf16 %v646, %v645
        %v673 = vpack.c.bf16 %v648, %v647
        %v674 = vpack.c.bf16 %v650, %v649
        %v675 = vpack.c.bf16 %v652, %v651
        %v676 = vpack.c.bf16 %v654, %v653
        %v677 = vpack.c.bf16 %v656, %v655
        %v678 = vpack.c.bf16 %v658, %v657
        %v679 = vpack.c.bf16 %v660, %v659
        %v680 = vpack.c.bf16 %v662, %v661
        %681 = vst [vmem:[#allocation3 + $0x10] sm:$0xff] %v663
        %682 = vst [vmem:[#allocation3 + $0x58] sm:$0xff] %v664
        %683 = vst [vmem:[#allocation3 + $0xa0] sm:$0xff] %v665
        %684 = vst [vmem:[#allocation3 + $0xe8] sm:$0xff] %v666
        %685 = vst [vmem:[#allocation3 + $0x130] sm:$0xff] %v667
        %686 = vst [vmem:[#allocation3 + $0x178] sm:$0xff] %v668
        %687 = vst [vmem:[#allocation3 + $0x1c0] sm:$0xff] %v669
        %688 = vst [vmem:[#allocation3 + $0x208] sm:$0xff] %v670
        %689 = vst [vmem:[#allocation3 + $0x250] sm:$0xff] %v671
        %690 = vst [vmem:[#allocation3 + $0x298] sm:$0xff] %v672
        %691 = vst [vmem:[#allocation3 + $0x2e0] sm:$0xff] %v673
        %692 = vst [vmem:[#allocation3 + $0x328] sm:$0xff] %v674
        %693 = vst [vmem:[#allocation3 + $0x370] sm:$0xff] %v675
        %694 = vst [vmem:[#allocation3 + $0x3b8] sm:$0xff] %v676
        %695 = vst [vmem:[#allocation3 + $0x400] sm:$0xff] %v677
        %696 = vst [vmem:[#allocation3 + $0x448] sm:$0xff] %v678
        %697 = vst [vmem:[#allocation3 + $0x490] sm:$0xff] %v679
        %698 = vst [vmem:[#allocation3 + $0x4d8] sm:$0xff] %v680
        %v699 = vld [vmem:[#allocation2 + $0x12] sm:$0xff]
        %v700 = vld [vmem:[#allocation2 + $0x1a] sm:$0xff]
        %v701 = vld [vmem:[#allocation2 + $0x22] sm:$0xff]
        %v702 = vld [vmem:[#allocation2 + $0x2a] sm:$0xff]
        %v703 = vld [vmem:[#allocation2 + $0x32] sm:$0xff]
        %v704 = vld [vmem:[#allocation2 + $0x3a] sm:$0xff]
        %v705 = vld [vmem:[#allocation2 + $0x42] sm:$0xff]
        %v706 = vld [vmem:[#allocation2 + $0x4a] sm:$0xff]
        %v707 = vld [vmem:[#allocation2 + $0x52] sm:$0xff]
        %v708 = vld [vmem:[#allocation2 + $0x5a] sm:$0xff]
        %v709 = vld [vmem:[#allocation2 + $0x62] sm:$0xff]
        %v710 = vld [vmem:[#allocation2 + $0x6a] sm:$0xff]
        %v711 = vld [vmem:[#allocation2 + $0x72] sm:$0xff]
        %v712 = vld [vmem:[#allocation2 + $0x7a] sm:$0xff]
        %v713 = vld [vmem:[#allocation2 + $0x82] sm:$0xff]
        %v714 = vld [vmem:[#allocation2 + $0x8a] sm:$0xff]
        %v715 = vld [vmem:[#allocation2 + $0x92] sm:$0xff]
        %v716 = vld [vmem:[#allocation2 + $0x9a] sm:$0xff]
        %v717 = vld [vmem:[#allocation2 + $0xa2] sm:$0xff]
        %v718 = vld [vmem:[#allocation2 + $0xaa] sm:$0xff]
        %v719 = vld [vmem:[#allocation2 + $0xb2] sm:$0xff]
        %v720 = vld [vmem:[#allocation2 + $0xba] sm:$0xff]
        %v721 = vld [vmem:[#allocation2 + $0xc2] sm:$0xff]
        %v722 = vld [vmem:[#allocation2 + $0xca] sm:$0xff]
        %v723 = vld [vmem:[#allocation2 + $0xd2] sm:$0xff]
        %v724 = vld [vmem:[#allocation2 + $0xda] sm:$0xff]
        %v725 = vld [vmem:[#allocation2 + $0xe2] sm:$0xff]
        %v726 = vld [vmem:[#allocation2 + $0xea] sm:$0xff]
        %v727 = vld [vmem:[#allocation2 + $0xf2] sm:$0xff]
        %v728 = vld [vmem:[#allocation2 + $0xfa] sm:$0xff]
        %v729 = vld [vmem:[#allocation2 + $0x102] sm:$0xff]
        %v730 = vld [vmem:[#allocation2 + $0x10a] sm:$0xff]
        %v731 = vld [vmem:[#allocation2 + $0x112] sm:$0xff]
        %v732 = vld [vmem:[#allocation2 + $0x11a] sm:$0xff]
        %v733 = vld [vmem:[#allocation2 + $0x122] sm:$0xff]
        %v734 = vld [vmem:[#allocation2 + $0x12a] sm:$0xff]
        %v735 = vpack.c.bf16 %v700, %v699
        %v736 = vpack.c.bf16 %v702, %v701
        %v737 = vpack.c.bf16 %v704, %v703
        %v738 = vpack.c.bf16 %v706, %v705
        %v739 = vpack.c.bf16 %v708, %v707
        %v740 = vpack.c.bf16 %v710, %v709
        %v741 = vpack.c.bf16 %v712, %v711
        %v742 = vpack.c.bf16 %v714, %v713
        %v743 = vpack.c.bf16 %v716, %v715
        %v744 = vpack.c.bf16 %v718, %v717
        %v745 = vpack.c.bf16 %v720, %v719
        %v746 = vpack.c.bf16 %v722, %v721
        %v747 = vpack.c.bf16 %v724, %v723
        %v748 = vpack.c.bf16 %v726, %v725
        %v749 = vpack.c.bf16 %v728, %v727
        %v750 = vpack.c.bf16 %v730, %v729
        %v751 = vpack.c.bf16 %v732, %v731
        %v752 = vpack.c.bf16 %v734, %v733
        %753 = vst [vmem:[#allocation3 + $0x18] sm:$0xff] %v735
        %754 = vst [vmem:[#allocation3 + $0x60] sm:$0xff] %v736
        %755 = vst [vmem:[#allocation3 + $0xa8] sm:$0xff] %v737
        %756 = vst [vmem:[#allocation3 + $0xf0] sm:$0xff] %v738
        %757 = vst [vmem:[#allocation3 + $0x138] sm:$0xff] %v739
        %758 = vst [vmem:[#allocation3 + $0x180] sm:$0xff] %v740
        %759 = vst [vmem:[#allocation3 + $0x1c8] sm:$0xff] %v741
        %760 = vst [vmem:[#allocation3 + $0x210] sm:$0xff] %v742
        %761 = vst [vmem:[#allocation3 + $0x258] sm:$0xff] %v743
        %762 = vst [vmem:[#allocation3 + $0x2a0] sm:$0xff] %v744
        %763 = vst [vmem:[#allocation3 + $0x2e8] sm:$0xff] %v745
        %764 = vst [vmem:[#allocation3 + $0x330] sm:$0xff] %v746
        %765 = vst [vmem:[#allocation3 + $0x378] sm:$0xff] %v747
        %766 = vst [vmem:[#allocation3 + $0x3c0] sm:$0xff] %v748
        %767 = vst [vmem:[#allocation3 + $0x408] sm:$0xff] %v749
        %768 = vst [vmem:[#allocation3 + $0x450] sm:$0xff] %v750
        %769 = vst [vmem:[#allocation3 + $0x498] sm:$0xff] %v751
        %770 = vst [vmem:[#allocation3 + $0x4e0] sm:$0xff] %v752
        %v771 = vld [vmem:[#allocation2 + $0x13] sm:$0xff]
        %v772 = vld [vmem:[#allocation2 + $0x1b] sm:$0xff]
        %v773 = vld [vmem:[#allocation2 + $0x23] sm:$0xff]
        %v774 = vld [vmem:[#allocation2 + $0x2b] sm:$0xff]
        %v775 = vld [vmem:[#allocation2 + $0x33] sm:$0xff]
        %v776 = vld [vmem:[#allocation2 + $0x3b] sm:$0xff]
        %v777 = vld [vmem:[#allocation2 + $0x43] sm:$0xff]
        %v778 = vld [vmem:[#allocation2 + $0x4b] sm:$0xff]
        %v779 = vld [vmem:[#allocation2 + $0x53] sm:$0xff]
        %v780 = vld [vmem:[#allocation2 + $0x5b] sm:$0xff]
        %v781 = vld [vmem:[#allocation2 + $0x63] sm:$0xff]
        %v782 = vld [vmem:[#allocation2 + $0x6b] sm:$0xff]
        %v783 = vld [vmem:[#allocation2 + $0x73] sm:$0xff]
        %v784 = vld [vmem:[#allocation2 + $0x7b] sm:$0xff]
        %v785 = vld [vmem:[#allocation2 + $0x83] sm:$0xff]
        %v786 = vld [vmem:[#allocation2 + $0x8b] sm:$0xff]
        %v787 = vld [vmem:[#allocation2 + $0x93] sm:$0xff]
        %v788 = vld [vmem:[#allocation2 + $0x9b] sm:$0xff]
        %v789 = vld [vmem:[#allocation2 + $0xa3] sm:$0xff]
        %v790 = vld [vmem:[#allocation2 + $0xab] sm:$0xff]
        %v791 = vld [vmem:[#allocation2 + $0xb3] sm:$0xff]
        %v792 = vld [vmem:[#allocation2 + $0xbb] sm:$0xff]
        %v793 = vld [vmem:[#allocation2 + $0xc3] sm:$0xff]
        %v794 = vld [vmem:[#allocation2 + $0xcb] sm:$0xff]
        %v795 = vld [vmem:[#allocation2 + $0xd3] sm:$0xff]
        %v796 = vld [vmem:[#allocation2 + $0xdb] sm:$0xff]
        %v797 = vld [vmem:[#allocation2 + $0xe3] sm:$0xff]
        %v798 = vld [vmem:[#allocation2 + $0xeb] sm:$0xff]
        %v799 = vld [vmem:[#allocation2 + $0xf3] sm:$0xff]
        %v800 = vld [vmem:[#allocation2 + $0xfb] sm:$0xff]
        %v801 = vld [vmem:[#allocation2 + $0x103] sm:$0xff]
        %v802 = vld [vmem:[#allocation2 + $0x10b] sm:$0xff]
        %v803 = vld [vmem:[#allocation2 + $0x113] sm:$0xff]
        %v804 = vld [vmem:[#allocation2 + $0x11b] sm:$0xff]
        %v805 = vld [vmem:[#allocation2 + $0x123] sm:$0xff]
        %v806 = vld [vmem:[#allocation2 + $0x12b] sm:$0xff]
        %v807 = vpack.c.bf16 %v772, %v771
        %v808 = vpack.c.bf16 %v774, %v773
        %v809 = vpack.c.bf16 %v776, %v775
        %v810 = vpack.c.bf16 %v778, %v777
        %v811 = vpack.c.bf16 %v780, %v779
        %v812 = vpack.c.bf16 %v782, %v781
        %v813 = vpack.c.bf16 %v784, %v783
        %v814 = vpack.c.bf16 %v786, %v785
        %v815 = vpack.c.bf16 %v788, %v787
        %v816 = vpack.c.bf16 %v790, %v789
        %v817 = vpack.c.bf16 %v792, %v791
        %v818 = vpack.c.bf16 %v794, %v793
        %v819 = vpack.c.bf16 %v796, %v795
        %v820 = vpack.c.bf16 %v798, %v797
        %v821 = vpack.c.bf16 %v800, %v799
        %v822 = vpack.c.bf16 %v802, %v801
        %v823 = vpack.c.bf16 %v804, %v803
        %v824 = vpack.c.bf16 %v806, %v805
        %825 = vst [vmem:[#allocation3 + $0x20] sm:$0xff] %v807
        %826 = vst [vmem:[#allocation3 + $0x68] sm:$0xff] %v808
        %827 = vst [vmem:[#allocation3 + $0xb0] sm:$0xff] %v809
        %828 = vst [vmem:[#allocation3 + $0xf8] sm:$0xff] %v810
        %829 = vst [vmem:[#allocation3 + $0x140] sm:$0xff] %v811
        %830 = vst [vmem:[#allocation3 + $0x188] sm:$0xff] %v812
        %831 = vst [vmem:[#allocation3 + $0x1d0] sm:$0xff] %v813
        %832 = vst [vmem:[#allocation3 + $0x218] sm:$0xff] %v814
        %833 = vst [vmem:[#allocation3 + $0x260] sm:$0xff] %v815
        %834 = vst [vmem:[#allocation3 + $0x2a8] sm:$0xff] %v816
        %835 = vst [vmem:[#allocation3 + $0x2f0] sm:$0xff] %v817
        %836 = vst [vmem:[#allocation3 + $0x338] sm:$0xff] %v818
        %837 = vst [vmem:[#allocation3 + $0x380] sm:$0xff] %v819
        %838 = vst [vmem:[#allocation3 + $0x3c8] sm:$0xff] %v820
        %839 = vst [vmem:[#allocation3 + $0x410] sm:$0xff] %v821
        %840 = vst [vmem:[#allocation3 + $0x458] sm:$0xff] %v822
        %841 = vst [vmem:[#allocation3 + $0x4a0] sm:$0xff] %v823
        %842 = vst [vmem:[#allocation3 + $0x4e8] sm:$0xff] %v824
        %v843 = vld [vmem:[#allocation2 + $0x14] sm:$0xff]
        %v844 = vld [vmem:[#allocation2 + $0x1c] sm:$0xff]
        %v845 = vld [vmem:[#allocation2 + $0x24] sm:$0xff]
        %v846 = vld [vmem:[#allocation2 + $0x2c] sm:$0xff]
        %v847 = vld [vmem:[#allocation2 + $0x34] sm:$0xff]
        %v848 = vld [vmem:[#allocation2 + $0x3c] sm:$0xff]
        %v849 = vld [vmem:[#allocation2 + $0x44] sm:$0xff]
        %v850 = vld [vmem:[#allocation2 + $0x4c] sm:$0xff]
        %v851 = vld [vmem:[#allocation2 + $0x54] sm:$0xff]
        %v852 = vld [vmem:[#allocation2 + $0x5c] sm:$0xff]
        %v853 = vld [vmem:[#allocation2 + $0x64] sm:$0xff]
        %v854 = vld [vmem:[#allocation2 + $0x6c] sm:$0xff]
        %v855 = vld [vmem:[#allocation2 + $0x74] sm:$0xff]
        %v856 = vld [vmem:[#allocation2 + $0x7c] sm:$0xff]
        %v857 = vld [vmem:[#allocation2 + $0x84] sm:$0xff]
        %v858 = vld [vmem:[#allocation2 + $0x8c] sm:$0xff]
        %v859 = vld [vmem:[#allocation2 + $0x94] sm:$0xff]
        %v860 = vld [vmem:[#allocation2 + $0x9c] sm:$0xff]
        %v861 = vld [vmem:[#allocation2 + $0xa4] sm:$0xff]
        %v862 = vld [vmem:[#allocation2 + $0xac] sm:$0xff]
        %v863 = vld [vmem:[#allocation2 + $0xb4] sm:$0xff]
        %v864 = vld [vmem:[#allocation2 + $0xbc] sm:$0xff]
        %v865 = vld [vmem:[#allocation2 + $0xc4] sm:$0xff]
        %v866 = vld [vmem:[#allocation2 + $0xcc] sm:$0xff]
        %v867 = vld [vmem:[#allocation2 + $0xd4] sm:$0xff]
        %v868 = vld [vmem:[#allocation2 + $0xdc] sm:$0xff]
        %v869 = vld [vmem:[#allocation2 + $0xe4] sm:$0xff]
        %v870 = vld [vmem:[#allocation2 + $0xec] sm:$0xff]
        %v871 = vld [vmem:[#allocation2 + $0xf4] sm:$0xff]
        %v872 = vld [vmem:[#allocation2 + $0xfc] sm:$0xff]
        %v873 = vld [vmem:[#allocation2 + $0x104] sm:$0xff]
        %v874 = vld [vmem:[#allocation2 + $0x10c] sm:$0xff]
        %v875 = vld [vmem:[#allocation2 + $0x114] sm:$0xff]
        %v876 = vld [vmem:[#allocation2 + $0x11c] sm:$0xff]
        %v877 = vld [vmem:[#allocation2 + $0x124] sm:$0xff]
        %v878 = vld [vmem:[#allocation2 + $0x12c] sm:$0xff]
        %v879 = vpack.c.bf16 %v844, %v843
        %v880 = vpack.c.bf16 %v846, %v845
        %v881 = vpack.c.bf16 %v848, %v847
        %v882 = vpack.c.bf16 %v850, %v849
        %v883 = vpack.c.bf16 %v852, %v851
        %v884 = vpack.c.bf16 %v854, %v853
        %v885 = vpack.c.bf16 %v856, %v855
        %v886 = vpack.c.bf16 %v858, %v857
        %v887 = vpack.c.bf16 %v860, %v859
        %v888 = vpack.c.bf16 %v862, %v861
        %v889 = vpack.c.bf16 %v864, %v863
        %v890 = vpack.c.bf16 %v866, %v865
        %v891 = vpack.c.bf16 %v868, %v867
        %v892 = vpack.c.bf16 %v870, %v869
        %v893 = vpack.c.bf16 %v872, %v871
        %v894 = vpack.c.bf16 %v874, %v873
        %v895 = vpack.c.bf16 %v876, %v875
        %v896 = vpack.c.bf16 %v878, %v877
        %897 = vst [vmem:[#allocation3 + $0x28] sm:$0xff] %v879
        %898 = vst [vmem:[#allocation3 + $0x70] sm:$0xff] %v880
        %899 = vst [vmem:[#allocation3 + $0xb8] sm:$0xff] %v881
        %900 = vst [vmem:[#allocation3 + $0x100] sm:$0xff] %v882
        %901 = vst [vmem:[#allocation3 + $0x148] sm:$0xff] %v883
        %902 = vst [vmem:[#allocation3 + $0x190] sm:$0xff] %v884
        %903 = vst [vmem:[#allocation3 + $0x1d8] sm:$0xff] %v885
        %904 = vst [vmem:[#allocation3 + $0x220] sm:$0xff] %v886
        %905 = vst [vmem:[#allocation3 + $0x268] sm:$0xff] %v887
        %906 = vst [vmem:[#allocation3 + $0x2b0] sm:$0xff] %v888
        %907 = vst [vmem:[#allocation3 + $0x2f8] sm:$0xff] %v889
        %908 = vst [vmem:[#allocation3 + $0x340] sm:$0xff] %v890
        %909 = vst [vmem:[#allocation3 + $0x388] sm:$0xff] %v891
        %910 = vst [vmem:[#allocation3 + $0x3d0] sm:$0xff] %v892
        %911 = vst [vmem:[#allocation3 + $0x418] sm:$0xff] %v893
        %912 = vst [vmem:[#allocation3 + $0x460] sm:$0xff] %v894
        %913 = vst [vmem:[#allocation3 + $0x4a8] sm:$0xff] %v895
        %914 = vst [vmem:[#allocation3 + $0x4f0] sm:$0xff] %v896
        %v915 = vld [vmem:[#allocation2 + $0x24] sm:$0xff]
        %v916 = vld [vmem:[#allocation2 + $0x2c] sm:$0xff]
        %v917 = vld [vmem:[#allocation2 + $0x34] sm:$0xff]
        %v918 = vld [vmem:[#allocation2 + $0x3c] sm:$0xff]
        %v919 = vld [vmem:[#allocation2 + $0x44] sm:$0xff]
        %v920 = vld [vmem:[#allocation2 + $0x4c] sm:$0xff]
        %v921 = vld [vmem:[#allocation2 + $0x54] sm:$0xff]
        %v922 = vld [vmem:[#allocation2 + $0x5c] sm:$0xff]
        %v923 = vld [vmem:[#allocation2 + $0x64] sm:$0xff]
        %v924 = vld [vmem:[#allocation2 + $0x6c] sm:$0xff]
        %v925 = vld [vmem:[#allocation2 + $0x74] sm:$0xff]
        %v926 = vld [vmem:[#allocation2 + $0x7c] sm:$0xff]
        %v927 = vld [vmem:[#allocation2 + $0x84] sm:$0xff]
        %v928 = vld [vmem:[#allocation2 + $0x8c] sm:$0xff]
        %v929 = vld [vmem:[#allocation2 + $0x94] sm:$0xff]
        %v930 = vld [vmem:[#allocation2 + $0x9c] sm:$0xff]
        %v931 = vld [vmem:[#allocation2 + $0xa4] sm:$0xff]
        %v932 = vld [vmem:[#allocation2 + $0xac] sm:$0xff]
        %v933 = vld [vmem:[#allocation2 + $0xb4] sm:$0xff]
        %v934 = vld [vmem:[#allocation2 + $0xbc] sm:$0xff]
        %v935 = vld [vmem:[#allocation2 + $0xc4] sm:$0xff]
        %v936 = vld [vmem:[#allocation2 + $0xcc] sm:$0xff]
        %v937 = vld [vmem:[#allocation2 + $0xd4] sm:$0xff]
        %v938 = vld [vmem:[#allocation2 + $0xdc] sm:$0xff]
        %v939 = vld [vmem:[#allocation2 + $0xe4] sm:$0xff]
        %v940 = vld [vmem:[#allocation2 + $0xec] sm:$0xff]
        %v941 = vld [vmem:[#allocation2 + $0xf4] sm:$0xff]
        %v942 = vld [vmem:[#allocation2 + $0xfc] sm:$0xff]
        %v943 = vld [vmem:[#allocation2 + $0x104] sm:$0xff]
        %v944 = vld [vmem:[#allocation2 + $0x10c] sm:$0xff]
        %v945 = vld [vmem:[#allocation2 + $0x114] sm:$0xff]
        %v946 = vld [vmem:[#allocation2 + $0x11c] sm:$0xff]
        %v947 = vld [vmem:[#allocation2 + $0x124] sm:$0xff]
        %v948 = vld [vmem:[#allocation2 + $0x12c] sm:$0xff]
        %v949 = vld [vmem:[#allocation2 + $0x134] sm:$0xff]
        %v950 = vld [vmem:[#allocation2 + $0x13c] sm:$0xff]
        %v951 = vpack.c.bf16 %v916, %v915
        %v952 = vpack.c.bf16 %v918, %v917
        %v953 = vpack.c.bf16 %v920, %v919
        %v954 = vpack.c.bf16 %v922, %v921
        %v955 = vpack.c.bf16 %v924, %v923
        %v956 = vpack.c.bf16 %v926, %v925
        %v957 = vpack.c.bf16 %v928, %v927
        %v958 = vpack.c.bf16 %v930, %v929
        %v959 = vpack.c.bf16 %v932, %v931
        %v960 = vpack.c.bf16 %v934, %v933
        %v961 = vpack.c.bf16 %v936, %v935
        %v962 = vpack.c.bf16 %v938, %v937
        %v963 = vpack.c.bf16 %v940, %v939
        %v964 = vpack.c.bf16 %v942, %v941
        %v965 = vpack.c.bf16 %v944, %v943
        %v966 = vpack.c.bf16 %v946, %v945
        %v967 = vpack.c.bf16 %v948, %v947
        %v968 = vpack.c.bf16 %v950, %v949
        %969 = vst [vmem:[#allocation3 + $0x30] sm:$0xff] %v951
        %970 = vst [vmem:[#allocation3 + $0x78] sm:$0xff] %v952
        %971 = vst [vmem:[#allocation3 + $0xc0] sm:$0xff] %v953
        %972 = vst [vmem:[#allocation3 + $0x108] sm:$0xff] %v954
        %973 = vst [vmem:[#allocation3 + $0x150] sm:$0xff] %v955
        %974 = vst [vmem:[#allocation3 + $0x198] sm:$0xff] %v956
        %975 = vst [vmem:[#allocation3 + $0x1e0] sm:$0xff] %v957
        %976 = vst [vmem:[#allocation3 + $0x228] sm:$0xff] %v958
        %977 = vst [vmem:[#allocation3 + $0x270] sm:$0xff] %v959
        %978 = vst [vmem:[#allocation3 + $0x2b8] sm:$0xff] %v960
        %979 = vst [vmem:[#allocation3 + $0x300] sm:$0xff] %v961
        %980 = vst [vmem:[#allocation3 + $0x348] sm:$0xff] %v962
        %981 = vst [vmem:[#allocation3 + $0x390] sm:$0xff] %v963
        %982 = vst [vmem:[#allocation3 + $0x3d8] sm:$0xff] %v964
        %983 = vst [vmem:[#allocation3 + $0x420] sm:$0xff] %v965
        %984 = vst [vmem:[#allocation3 + $0x468] sm:$0xff] %v966
        %985 = vst [vmem:[#allocation3 + $0x4b0] sm:$0xff] %v967
        %986 = vst [vmem:[#allocation3 + $0x4f8] sm:$0xff] %v968
        %v987 = vld [vmem:[#allocation2 + $0x25] sm:$0xff]
        %v988 = vld [vmem:[#allocation2 + $0x2d] sm:$0xff]
        %v989 = vld [vmem:[#allocation2 + $0x35] sm:$0xff]
        %v990 = vld [vmem:[#allocation2 + $0x3d] sm:$0xff]
        %v991 = vld [vmem:[#allocation2 + $0x45] sm:$0xff]
        %v992 = vld [vmem:[#allocation2 + $0x4d] sm:$0xff]
        %v993 = vld [vmem:[#allocation2 + $0x55] sm:$0xff]
        %v994 = vld [vmem:[#allocation2 + $0x5d] sm:$0xff]
        %v995 = vld [vmem:[#allocation2 + $0x65] sm:$0xff]
        %v996 = vld [vmem:[#allocation2 + $0x6d] sm:$0xff]
        %v997 = vld [vmem:[#allocation2 + $0x75] sm:$0xff]
        %v998 = vld [vmem:[#allocation2 + $0x7d] sm:$0xff]
        %v999 = vld [vmem:[#allocation2 + $0x85] sm:$0xff]
        %v1000 = vld [vmem:[#allocation2 + $0x8d] sm:$0xff]
        %v1001 = vld [vmem:[#allocation2 + $0x95] sm:$0xff]
        %v1002 = vld [vmem:[#allocation2 + $0x9d] sm:$0xff]
        %v1003 = vld [vmem:[#allocation2 + $0xa5] sm:$0xff]
        %v1004 = vld [vmem:[#allocation2 + $0xad] sm:$0xff]
        %v1005 = vld [vmem:[#allocation2 + $0xb5] sm:$0xff]
        %v1006 = vld [vmem:[#allocation2 + $0xbd] sm:$0xff]
        %v1007 = vld [vmem:[#allocation2 + $0xc5] sm:$0xff]
        %v1008 = vld [vmem:[#allocation2 + $0xcd] sm:$0xff]
        %v1009 = vld [vmem:[#allocation2 + $0xd5] sm:$0xff]
        %v1010 = vld [vmem:[#allocation2 + $0xdd] sm:$0xff]
        %v1011 = vld [vmem:[#allocation2 + $0xe5] sm:$0xff]
        %v1012 = vld [vmem:[#allocation2 + $0xed] sm:$0xff]
        %v1013 = vld [vmem:[#allocation2 + $0xf5] sm:$0xff]
        %v1014 = vld [vmem:[#allocation2 + $0xfd] sm:$0xff]
        %v1015 = vld [vmem:[#allocation2 + $0x105] sm:$0xff]
        %v1016 = vld [vmem:[#allocation2 + $0x10d] sm:$0xff]
        %v1017 = vld [vmem:[#allocation2 + $0x115] sm:$0xff]
        %v1018 = vld [vmem:[#allocation2 + $0x11d] sm:$0xff]
        %v1019 = vld [vmem:[#allocation2 + $0x125] sm:$0xff]
        %v1020 = vld [vmem:[#allocation2 + $0x12d] sm:$0xff]
        %v1021 = vld [vmem:[#allocation2 + $0x135] sm:$0xff]
        %v1022 = vld [vmem:[#allocation2 + $0x13d] sm:$0xff]
        %v1023 = vpack.c.bf16 %v988, %v987
        %v1024 = vpack.c.bf16 %v990, %v989
        %v1025 = vpack.c.bf16 %v992, %v991
        %v1026 = vpack.c.bf16 %v994, %v993
        %v1027 = vpack.c.bf16 %v996, %v995
        %v1028 = vpack.c.bf16 %v998, %v997
        %v1029 = vpack.c.bf16 %v1000, %v999
        %v1030 = vpack.c.bf16 %v1002, %v1001
        %v1031 = vpack.c.bf16 %v1004, %v1003
        %v1032 = vpack.c.bf16 %v1006, %v1005
        %v1033 = vpack.c.bf16 %v1008, %v1007
        %v1034 = vpack.c.bf16 %v1010, %v1009
        %v1035 = vpack.c.bf16 %v1012, %v1011
        %v1036 = vpack.c.bf16 %v1014, %v1013
        %v1037 = vpack.c.bf16 %v1016, %v1015
        %v1038 = vpack.c.bf16 %v1018, %v1017
        %v1039 = vpack.c.bf16 %v1020, %v1019
        %v1040 = vpack.c.bf16 %v1022, %v1021
        %1041 = vst [vmem:[#allocation3 + $0x38] sm:$0xff] %v1023
        %1042 = vst [vmem:[#allocation3 + $0x80] sm:$0xff] %v1024
        %1043 = vst [vmem:[#allocation3 + $0xc8] sm:$0xff] %v1025
        %1044 = vst [vmem:[#allocation3 + $0x110] sm:$0xff] %v1026
        %1045 = vst [vmem:[#allocation3 + $0x158] sm:$0xff] %v1027
        %1046 = vst [vmem:[#allocation3 + $0x1a0] sm:$0xff] %v1028
        %1047 = vst [vmem:[#allocation3 + $0x1e8] sm:$0xff] %v1029
        %1048 = vst [vmem:[#allocation3 + $0x230] sm:$0xff] %v1030
        %1049 = vst [vmem:[#allocation3 + $0x278] sm:$0xff] %v1031
        %1050 = vst [vmem:[#allocation3 + $0x2c0] sm:$0xff] %v1032
        %1051 = vst [vmem:[#allocation3 + $0x308] sm:$0xff] %v1033
        %1052 = vst [vmem:[#allocation3 + $0x350] sm:$0xff] %v1034
        %1053 = vst [vmem:[#allocation3 + $0x398] sm:$0xff] %v1035
        %1054 = vst [vmem:[#allocation3 + $0x3e0] sm:$0xff] %v1036
        %1055 = vst [vmem:[#allocation3 + $0x428] sm:$0xff] %v1037
        %1056 = vst [vmem:[#allocation3 + $0x470] sm:$0xff] %v1038
        %1057 = vst [vmem:[#allocation3 + $0x4b8] sm:$0xff] %v1039
        %1058 = vst [vmem:[#allocation3 + $0x500] sm:$0xff] %v1040
        %v1059 = vld [vmem:[#allocation2 + $0x26] sm:$0xff]
        %v1060 = vld [vmem:[#allocation2 + $0x2e] sm:$0xff]
        %v1061 = vld [vmem:[#allocation2 + $0x36] sm:$0xff]
        %v1062 = vld [vmem:[#allocation2 + $0x3e] sm:$0xff]
        %v1063 = vld [vmem:[#allocation2 + $0x46] sm:$0xff]
        %v1064 = vld [vmem:[#allocation2 + $0x4e] sm:$0xff]
        %v1065 = vld [vmem:[#allocation2 + $0x56] sm:$0xff]
        %v1066 = vld [vmem:[#allocation2 + $0x5e] sm:$0xff]
        %v1067 = vld [vmem:[#allocation2 + $0x66] sm:$0xff]
        %v1068 = vld [vmem:[#allocation2 + $0x6e] sm:$0xff]
        %v1069 = vld [vmem:[#allocation2 + $0x76] sm:$0xff]
        %v1070 = vld [vmem:[#allocation2 + $0x7e] sm:$0xff]
        %v1071 = vld [vmem:[#allocation2 + $0x86] sm:$0xff]
        %v1072 = vld [vmem:[#allocation2 + $0x8e] sm:$0xff]
        %v1073 = vld [vmem:[#allocation2 + $0x96] sm:$0xff]
        %v1074 = vld [vmem:[#allocation2 + $0x9e] sm:$0xff]
        %v1075 = vld [vmem:[#allocation2 + $0xa6] sm:$0xff]
        %v1076 = vld [vmem:[#allocation2 + $0xae] sm:$0xff]
        %v1077 = vld [vmem:[#allocation2 + $0xb6] sm:$0xff]
        %v1078 = vld [vmem:[#allocation2 + $0xbe] sm:$0xff]
        %v1079 = vld [vmem:[#allocation2 + $0xc6] sm:$0xff]
        %v1080 = vld [vmem:[#allocation2 + $0xce] sm:$0xff]
        %v1081 = vld [vmem:[#allocation2 + $0xd6] sm:$0xff]
        %v1082 = vld [vmem:[#allocation2 + $0xde] sm:$0xff]
        %v1083 = vld [vmem:[#allocation2 + $0xe6] sm:$0xff]
        %v1084 = vld [vmem:[#allocation2 + $0xee] sm:$0xff]
        %v1085 = vld [vmem:[#allocation2 + $0xf6] sm:$0xff]
        %v1086 = vld [vmem:[#allocation2 + $0xfe] sm:$0xff]
        %v1087 = vld [vmem:[#allocation2 + $0x106] sm:$0xff]
        %v1088 = vld [vmem:[#allocation2 + $0x10e] sm:$0xff]
        %v1089 = vld [vmem:[#allocation2 + $0x116] sm:$0xff]
        %v1090 = vld [vmem:[#allocation2 + $0x11e] sm:$0xff]
        %v1091 = vld [vmem:[#allocation2 + $0x126] sm:$0xff]
        %v1092 = vld [vmem:[#allocation2 + $0x12e] sm:$0xff]
        %v1093 = vld [vmem:[#allocation2 + $0x136] sm:$0xff]
        %v1094 = vld [vmem:[#allocation2 + $0x13e] sm:$0xff]
        %v1095 = vpack.c.bf16 %v1060, %v1059
        %v1096 = vpack.c.bf16 %v1062, %v1061
        %v1097 = vpack.c.bf16 %v1064, %v1063
        %v1098 = vpack.c.bf16 %v1066, %v1065
        %v1099 = vpack.c.bf16 %v1068, %v1067
        %v1100 = vpack.c.bf16 %v1070, %v1069
        %v1101 = vpack.c.bf16 %v1072, %v1071
        %v1102 = vpack.c.bf16 %v1074, %v1073
        %v1103 = vpack.c.bf16 %v1076, %v1075
        %v1104 = vpack.c.bf16 %v1078, %v1077
        %v1105 = vpack.c.bf16 %v1080, %v1079
        %v1106 = vpack.c.bf16 %v1082, %v1081
        %v1107 = vpack.c.bf16 %v1084, %v1083
        %v1108 = vpack.c.bf16 %v1086, %v1085
        %v1109 = vpack.c.bf16 %v1088, %v1087
        %v1110 = vpack.c.bf16 %v1090, %v1089
        %v1111 = vpack.c.bf16 %v1092, %v1091
        %v1112 = vpack.c.bf16 %v1094, %v1093
        %1113 = vst [vmem:[#allocation3 + $0x40] sm:$0xff] %v1095
        %1114 = vst [vmem:[#allocation3 + $0x88] sm:$0xff] %v1096
        %1115 = vst [vmem:[#allocation3 + $0xd0] sm:$0xff] %v1097
        %1116 = vst [vmem:[#allocation3 + $0x118] sm:$0xff] %v1098
        %1117 = vst [vmem:[#allocation3 + $0x160] sm:$0xff] %v1099
        %1118 = vst [vmem:[#allocation3 + $0x1a8] sm:$0xff] %v1100
        %1119 = vst [vmem:[#allocation3 + $0x1f0] sm:$0xff] %v1101
        %1120 = vst [vmem:[#allocation3 + $0x238] sm:$0xff] %v1102
        %1121 = vst [vmem:[#allocation3 + $0x280] sm:$0xff] %v1103
        %1122 = vst [vmem:[#allocation3 + $0x2c8] sm:$0xff] %v1104
        %1123 = vst [vmem:[#allocation3 + $0x310] sm:$0xff] %v1105
        %1124 = vst [vmem:[#allocation3 + $0x358] sm:$0xff] %v1106
        %1125 = vst [vmem:[#allocation3 + $0x3a0] sm:$0xff] %v1107
        %1126 = vst [vmem:[#allocation3 + $0x3e8] sm:$0xff] %v1108
        %1127 = vst [vmem:[#allocation3 + $0x430] sm:$0xff] %v1109
        %1128 = vst [vmem:[#allocation3 + $0x478] sm:$0xff] %v1110
        %1129 = vst [vmem:[#allocation3 + $0x4c0] sm:$0xff] %v1111
        %1130 = vst [vmem:[#allocation3 + $0x508] sm:$0xff] %v1112
        %v1131 = vld [vmem:[#allocation3] sm:$0xff]
        %v1132 = vld [vmem:[#allocation3 + $0x8] sm:$0xff]
        %v1133 = vld [vmem:[#allocation3 + $0x10] sm:$0xff]
        %v1134 = vld [vmem:[#allocation3 + $0x18] sm:$0xff]
        %v1135 = vld [vmem:[#allocation3 + $0x20] sm:$0xff]
        %v1136 = vld [vmem:[#allocation3 + $0x28] sm:$0xff]
        %v1137 = vld [vmem:[#allocation3 + $0x30] sm:$0xff]
        %v1138 = vld [vmem:[#allocation3 + $0x38] sm:$0xff]
        %v1139 = vld [vmem:[#allocation3 + $0x40] sm:$0xff]
        %v1140 = vld [vmem:[#allocation3 + $0x48] sm:$0xff]
        %v1141 = vld [vmem:[#allocation3 + $0x50] sm:$0xff]
        %v1142 = vld [vmem:[#allocation3 + $0x58] sm:$0xff]
        %v1143 = vld [vmem:[#allocation3 + $0x60] sm:$0xff]
        %v1144 = vld [vmem:[#allocation3 + $0x68] sm:$0xff]
        %v1145 = vld [vmem:[#allocation3 + $0x70] sm:$0xff]
        %v1146 = vld [vmem:[#allocation3 + $0x78] sm:$0xff]
        %v1147 = vld [vmem:[#allocation3 + $0x80] sm:$0xff]
        %v1148 = vld [vmem:[#allocation3 + $0x88] sm:$0xff]
        %v1149 = vld [vmem:[#allocation3 + $0x90] sm:$0xff]
        %v1150 = vld [vmem:[#allocation3 + $0x98] sm:$0xff]
        %v1151 = vld [vmem:[#allocation3 + $0xa0] sm:$0xff]
        %v1152 = vld [vmem:[#allocation3 + $0xa8] sm:$0xff]
        %v1153 = vld [vmem:[#allocation3 + $0xb0] sm:$0xff]
        %v1154 = vld [vmem:[#allocation3 + $0xb8] sm:$0xff]
        %v1155 = vld [vmem:[#allocation3 + $0xc0] sm:$0xff]
        %v1156 = vld [vmem:[#allocation3 + $0xc8] sm:$0xff]
        %v1157 = vld [vmem:[#allocation3 + $0xd0] sm:$0xff]
        %v1158 = vld [vmem:[#allocation3 + $0xd8] sm:$0xff]
        %v1159 = vld [vmem:[#allocation3 + $0xe0] sm:$0xff]
        %v1160 = vld [vmem:[#allocation3 + $0xe8] sm:$0xff]
        %v1161 = vld [vmem:[#allocation3 + $0xf0] sm:$0xff]
        %v1162 = vld [vmem:[#allocation3 + $0xf8] sm:$0xff]
        %v1163 = vld [vmem:[#allocation3 + $0x100] sm:$0xff]
        %v1164 = vld [vmem:[#allocation3 + $0x108] sm:$0xff]
        %v1165 = vld [vmem:[#allocation3 + $0x110] sm:$0xff]
        %v1166 = vld [vmem:[#allocation3 + $0x118] sm:$0xff]
        %v1167 = vld [vmem:[#allocation3 + $0x120] sm:$0xff]
        %v1168 = vld [vmem:[#allocation3 + $0x128] sm:$0xff]
        %v1169 = vld [vmem:[#allocation3 + $0x130] sm:$0xff]
        %v1170 = vld [vmem:[#allocation3 + $0x138] sm:$0xff]
        %v1171 = vld [vmem:[#allocation3 + $0x140] sm:$0xff]
        %v1172 = vld [vmem:[#allocation3 + $0x148] sm:$0xff]
        %v1173 = vld [vmem:[#allocation3 + $0x150] sm:$0xff]
        %v1174 = vld [vmem:[#allocation3 + $0x158] sm:$0xff]
        %v1175 = vld [vmem:[#allocation3 + $0x160] sm:$0xff]
        %v1176 = vld [vmem:[#allocation3 + $0x168] sm:$0xff]
        %v1177 = vld [vmem:[#allocation3 + $0x170] sm:$0xff]
        %v1178 = vld [vmem:[#allocation3 + $0x178] sm:$0xff]
        %v1179 = vld [vmem:[#allocation3 + $0x180] sm:$0xff]
        %v1180 = vld [vmem:[#allocation3 + $0x188] sm:$0xff]
        %v1181 = vld [vmem:[#allocation3 + $0x190] sm:$0xff]
        %v1182 = vld [vmem:[#allocation3 + $0x198] sm:$0xff]
        %v1183 = vld [vmem:[#allocation3 + $0x1a0] sm:$0xff]
        %v1184 = vld [vmem:[#allocation3 + $0x1a8] sm:$0xff]
        %v1185 = vld [vmem:[#allocation3 + $0x1b0] sm:$0xff]
        %v1186 = vld [vmem:[#allocation3 + $0x1b8] sm:$0xff]
        %v1187 = vld [vmem:[#allocation3 + $0x1c0] sm:$0xff]
        %v1188 = vld [vmem:[#allocation3 + $0x1c8] sm:$0xff]
        %v1189 = vld [vmem:[#allocation3 + $0x1d0] sm:$0xff]
        %v1190 = vld [vmem:[#allocation3 + $0x1d8] sm:$0xff]
        %v1191 = vld [vmem:[#allocation3 + $0x1e0] sm:$0xff]
        %v1192 = vld [vmem:[#allocation3 + $0x1e8] sm:$0xff]
        %v1193 = vld [vmem:[#allocation3 + $0x1f0] sm:$0xff]
        %v1194 = vld [vmem:[#allocation3 + $0x1f8] sm:$0xff]
        %v1195 = vld [vmem:[#allocation3 + $0x200] sm:$0xff]
        %v1196 = vld [vmem:[#allocation3 + $0x208] sm:$0xff]
        %v1197 = vld [vmem:[#allocation3 + $0x210] sm:$0xff]
        %v1198 = vld [vmem:[#allocation3 + $0x218] sm:$0xff]
        %v1199 = vld [vmem:[#allocation3 + $0x220] sm:$0xff]
        %v1200 = vld [vmem:[#allocation3 + $0x228] sm:$0xff]
        %v1201 = vld [vmem:[#allocation3 + $0x230] sm:$0xff]
        %v1202 = vld [vmem:[#allocation3 + $0x238] sm:$0xff]
        %v1203 = vld [vmem:[#allocation3 + $0x240] sm:$0xff]
        %v1204 = vld [vmem:[#allocation3 + $0x248] sm:$0xff]
        %v1205 = vld [vmem:[#allocation3 + $0x250] sm:$0xff]
        %v1206 = vld [vmem:[#allocation3 + $0x258] sm:$0xff]
        %v1207 = vld [vmem:[#allocation3 + $0x260] sm:$0xff]
        %v1208 = vld [vmem:[#allocation3 + $0x268] sm:$0xff]
        %v1209 = vld [vmem:[#allocation3 + $0x270] sm:$0xff]
        %v1210 = vld [vmem:[#allocation3 + $0x278] sm:$0xff]
        %v1211 = vld [vmem:[#allocation3 + $0x280] sm:$0xff]
        %v1212 = vld [vmem:[#allocation3 + $0x288] sm:$0xff]
        %v1213 = vld [vmem:[#allocation3 + $0x290] sm:$0xff]
        %v1214 = vld [vmem:[#allocation3 + $0x298] sm:$0xff]
        %v1215 = vld [vmem:[#allocation3 + $0x2a0] sm:$0xff]
        %v1216 = vld [vmem:[#allocation3 + $0x2a8] sm:$0xff]
        %v1217 = vld [vmem:[#allocation3 + $0x2b0] sm:$0xff]
        %v1218 = vld [vmem:[#allocation3 + $0x2b8] sm:$0xff]
        %v1219 = vld [vmem:[#allocation3 + $0x2c0] sm:$0xff]
        %v1220 = vld [vmem:[#allocation3 + $0x2c8] sm:$0xff]
        %v1221 = vld [vmem:[#allocation3 + $0x2d0] sm:$0xff]
        %v1222 = vld [vmem:[#allocation3 + $0x2d8] sm:$0xff]
        %v1223 = vld [vmem:[#allocation3 + $0x2e0] sm:$0xff]
        %v1224 = vld [vmem:[#allocation3 + $0x2e8] sm:$0xff]
        %v1225 = vld [vmem:[#allocation3 + $0x2f0] sm:$0xff]
        %v1226 = vld [vmem:[#allocation3 + $0x2f8] sm:$0xff]
        %v1227 = vld [vmem:[#allocation3 + $0x300] sm:$0xff]
        %v1228 = vld [vmem:[#allocation3 + $0x308] sm:$0xff]
        %v1229 = vld [vmem:[#allocation3 + $0x310] sm:$0xff]
        %v1230 = vld [vmem:[#allocation3 + $0x318] sm:$0xff]
        %v1231 = vld [vmem:[#allocation3 + $0x320] sm:$0xff]
        %v1232 = vld [vmem:[#allocation3 + $0x328] sm:$0xff]
        %v1233 = vld [vmem:[#allocation3 + $0x330] sm:$0xff]
        %v1234 = vld [vmem:[#allocation3 + $0x338] sm:$0xff]
        %v1235 = vld [vmem:[#allocation3 + $0x340] sm:$0xff]
        %v1236 = vld [vmem:[#allocation3 + $0x348] sm:$0xff]
        %v1237 = vld [vmem:[#allocation3 + $0x350] sm:$0xff]
        %v1238 = vld [vmem:[#allocation3 + $0x358] sm:$0xff]
        %v1239 = vld [vmem:[#allocation3 + $0x360] sm:$0xff]
        %v1240 = vld [vmem:[#allocation3 + $0x368] sm:$0xff]
        %v1241 = vld [vmem:[#allocation3 + $0x370] sm:$0xff]
        %v1242 = vld [vmem:[#allocation3 + $0x378] sm:$0xff]
        %v1243 = vld [vmem:[#allocation3 + $0x380] sm:$0xff]
        %v1244 = vld [vmem:[#allocation3 + $0x388] sm:$0xff]
        %v1245 = vld [vmem:[#allocation3 + $0x390] sm:$0xff]
        %v1246 = vld [vmem:[#allocation3 + $0x398] sm:$0xff]
        %v1247 = vld [vmem:[#allocation3 + $0x3a0] sm:$0xff]
        %v1248 = vld [vmem:[#allocation3 + $0x3a8] sm:$0xff]
        %v1249 = vld [vmem:[#allocation3 + $0x3b0] sm:$0xff]
        %v1250 = vld [vmem:[#allocation3 + $0x3b8] sm:$0xff]
        %v1251 = vld [vmem:[#allocation3 + $0x3c0] sm:$0xff]
        %v1252 = vld [vmem:[#allocation3 + $0x3c8] sm:$0xff]
        %v1253 = vld [vmem:[#allocation3 + $0x3d0] sm:$0xff]
        %v1254 = vld [vmem:[#allocation3 + $0x3d8] sm:$0xff]
        %v1255 = vld [vmem:[#allocation3 + $0x3e0] sm:$0xff]
        %v1256 = vld [vmem:[#allocation3 + $0x3e8] sm:$0xff]
        %v1257 = vld [vmem:[#allocation3 + $0x3f0] sm:$0xff]
        %v1258 = vld [vmem:[#allocation3 + $0x3f8] sm:$0xff]
        %v1259 = vld [vmem:[#allocation3 + $0x400] sm:$0xff]
        %v1260 = vld [vmem:[#allocation3 + $0x408] sm:$0xff]
        %v1261 = vld [vmem:[#allocation3 + $0x410] sm:$0xff]
        %v1262 = vld [vmem:[#allocation3 + $0x418] sm:$0xff]
        %v1263 = vld [vmem:[#allocation3 + $0x420] sm:$0xff]
        %v1264 = vld [vmem:[#allocation3 + $0x428] sm:$0xff]
        %v1265 = vld [vmem:[#allocation3 + $0x430] sm:$0xff]
        %v1266 = vld [vmem:[#allocation3 + $0x438] sm:$0xff]
        %v1267 = vld [vmem:[#allocation3 + $0x440] sm:$0xff]
        %v1268 = vld [vmem:[#allocation3 + $0x448] sm:$0xff]
        %v1269 = vld [vmem:[#allocation3 + $0x450] sm:$0xff]
        %v1270 = vld [vmem:[#allocation3 + $0x458] sm:$0xff]
        %v1271 = vld [vmem:[#allocation3 + $0x460] sm:$0xff]
        %v1272 = vld [vmem:[#allocation3 + $0x468] sm:$0xff]
        %v1273 = vld [vmem:[#allocation3 + $0x470] sm:$0xff]
        %v1274 = vld [vmem:[#allocation3 + $0x478] sm:$0xff]
        %v1275 = vld [vmem:[#allocation3 + $0x480] sm:$0xff]
        %v1276 = vld [vmem:[#allocation3 + $0x488] sm:$0xff]
        %v1277 = vld [vmem:[#allocation3 + $0x490] sm:$0xff]
        %v1278 = vld [vmem:[#allocation3 + $0x498] sm:$0xff]
        %v1279 = vld [vmem:[#allocation3 + $0x4a0] sm:$0xff]
        %v1280 = vld [vmem:[#allocation3 + $0x4a8] sm:$0xff]
        %v1281 = vld [vmem:[#allocation3 + $0x4b0] sm:$0xff]
        %v1282 = vld [vmem:[#allocation3 + $0x4b8] sm:$0xff]
        %v1283 = vld [vmem:[#allocation3 + $0x4c0] sm:$0xff]
        %v1284 = vld [vmem:[#allocation3 + $0x4c8] sm:$0xff]
        %v1285 = vld [vmem:[#allocation3 + $0x4d0] sm:$0xff]
        %v1286 = vld [vmem:[#allocation3 + $0x4d8] sm:$0xff]
        %v1287 = vld [vmem:[#allocation3 + $0x4e0] sm:$0xff]
        %v1288 = vld [vmem:[#allocation3 + $0x4e8] sm:$0xff]
        %v1289 = vld [vmem:[#allocation3 + $0x4f0] sm:$0xff]
        %v1290 = vld [vmem:[#allocation3 + $0x4f8] sm:$0xff]
        %v1291 = vld [vmem:[#allocation3 + $0x500] sm:$0xff]
        %v1292 = vld [vmem:[#allocation3 + $0x508] sm:$0xff]
        %v1293 = vld [vmem:[#allocation4] sm:$0xf]
        %v1294 = vld [vmem:[#allocation4 + $0x4] sm:$0xf]
        %v1295 = vld [vmem:[#allocation4 + $0x8] sm:$0xf]
        %v1296 = vld [vmem:[#allocation4 + $0xc] sm:$0xf]
        %v1297 = vld [vmem:[#allocation4 + $0x10] sm:$0xf]
        %v1298 = vld [vmem:[#allocation4 + $0x14] sm:$0xf]
        %v1299 = vld [vmem:[#allocation4 + $0x18] sm:$0xf]
        %v1300 = vld [vmem:[#allocation4 + $0x1c] sm:$0xf]
        %v1301 = vld [vmem:[#allocation4 + $0x20] sm:$0xf]
        %v1302 = vld [vmem:[#allocation4 + $0x24] sm:$0xf]
        %v1303 = vld [vmem:[#allocation4 + $0x28] sm:$0xf]
        %v1304 = vld [vmem:[#allocation4 + $0x2c] sm:$0xf]
        %v1305 = vld [vmem:[#allocation4 + $0x30] sm:$0xf]
        %v1306 = vld [vmem:[#allocation4 + $0x34] sm:$0xf]
        %v1307 = vld [vmem:[#allocation4 + $0x38] sm:$0xf]
        %v1308 = vld [vmem:[#allocation4 + $0x3c] sm:$0xf]
        %v1309 = vld [vmem:[#allocation4 + $0x40] sm:$0xf]
        %v1310 = vld [vmem:[#allocation4 + $0x44] sm:$0xf]
        %v1311 = vld [vmem:[#allocation4 + $0x48] sm:$0xf]
        %v1312 = vld [vmem:[#allocation4 + $0x4c] sm:$0xf]
        %v1313 = vld [vmem:[#allocation4 + $0x50] sm:$0xf]
        %v1314 = vld [vmem:[#allocation4 + $0x54] sm:$0xf]
        %v1315 = vld [vmem:[#allocation4 + $0x58] sm:$0xf]
        %v1316 = vld [vmem:[#allocation4 + $0x5c] sm:$0xf]
        %v1317 = vld [vmem:[#allocation4 + $0x60] sm:$0xf]
        %v1318 = vld [vmem:[#allocation4 + $0x64] sm:$0xf]
        %v1319 = vld [vmem:[#allocation4 + $0x68] sm:$0xf]
        %v1320 = vld [vmem:[#allocation4 + $0x6c] sm:$0xf]
        %v1321 = vld [vmem:[#allocation4 + $0x70] sm:$0xf]
        %v1322 = vld [vmem:[#allocation4 + $0x74] sm:$0xf]
        %v1323 = vld [vmem:[#allocation4 + $0x78] sm:$0xf]
        %v1324 = vld [vmem:[#allocation4 + $0x7c] sm:$0xf]
        %v1325 = vld [vmem:[#allocation4 + $0x80] sm:$0xf]
        %v1326 = vld [vmem:[#allocation4 + $0x84] sm:$0xf]
        %v1327 = vld [vmem:[#allocation4 + $0x88] sm:$0xf]
        %v1328 = vld [vmem:[#allocation4 + $0x8c] sm:$0xf]
        %v1329 = vld [vmem:[#allocation4 + $0x90] sm:$0xf]
        %v1330 = vld [vmem:[#allocation4 + $0x94] sm:$0xf]
        %v1331 = vld [vmem:[#allocation4 + $0x98] sm:$0xf]
        %v1332 = vld [vmem:[#allocation4 + $0x9c] sm:$0xf]
        %v1333 = vld [vmem:[#allocation4 + $0xa0] sm:$0xf]
        %v1334 = vld [vmem:[#allocation4 + $0xa4] sm:$0xf]
        %v1335 = vld [vmem:[#allocation4 + $0xa8] sm:$0xf]
        %v1336 = vld [vmem:[#allocation4 + $0xac] sm:$0xf]
        %v1337 = vld [vmem:[#allocation4 + $0xb0] sm:$0xf]
        %v1338 = vld [vmem:[#allocation4 + $0xb4] sm:$0xf]
        %v1339 = vld [vmem:[#allocation4 + $0xb8] sm:$0xf]
        %v1340 = vld [vmem:[#allocation4 + $0xbc] sm:$0xf]
        %v1341 = vld [vmem:[#allocation4 + $0xc0] sm:$0xf]
        %v1342 = vld [vmem:[#allocation4 + $0xc4] sm:$0xf]
        %v1343 = vld [vmem:[#allocation4 + $0xc8] sm:$0xf]
        %v1344 = vld [vmem:[#allocation4 + $0xcc] sm:$0xf]
        %v1345 = vld [vmem:[#allocation4 + $0xd0] sm:$0xf]
        %v1346 = vld [vmem:[#allocation4 + $0xd4] sm:$0xf]
        %v1347 = vld [vmem:[#allocation4 + $0xd8] sm:$0xf]
        %v1348 = vld [vmem:[#allocation4 + $0xdc] sm:$0xf]
        %v1349 = vld [vmem:[#allocation4 + $0xe0] sm:$0xf]
        %v1350 = vld [vmem:[#allocation4 + $0xe4] sm:$0xf]
        %v1351 = vld [vmem:[#allocation4 + $0xe8] sm:$0xf]
        %v1352 = vld [vmem:[#allocation4 + $0xec] sm:$0xf]
        %v1353 = vld [vmem:[#allocation4 + $0xf0] sm:$0xf]
        %v1354 = vld [vmem:[#allocation4 + $0xf4] sm:$0xf]
        %v1355 = vld [vmem:[#allocation4 + $0xf8] sm:$0xf]
        %v1356 = vld [vmem:[#allocation4 + $0xfc] sm:$0xf]
        %v1357 = vld [vmem:[#allocation4 + $0x100] sm:$0xf]
        %v1358 = vld [vmem:[#allocation4 + $0x104] sm:$0xf]
        %v1359 = vld [vmem:[#allocation4 + $0x108] sm:$0xf]
        %v1360 = vld [vmem:[#allocation4 + $0x10c] sm:$0xf]
        %v1361 = vld [vmem:[#allocation4 + $0x110] sm:$0xf]
        %v1362 = vld [vmem:[#allocation4 + $0x114] sm:$0xf]
        %v1363 = vld [vmem:[#allocation4 + $0x118] sm:$0xf]
        %v1364 = vld [vmem:[#allocation4 + $0x11c] sm:$0xf]
        %v1365 = vld [vmem:[#allocation4 + $0x120] sm:$0xf]
        %v1366 = vld [vmem:[#allocation4 + $0x124] sm:$0xf]
        %v1367 = vld [vmem:[#allocation4 + $0x128] sm:$0xf]
        %v1368 = vld [vmem:[#allocation4 + $0x12c] sm:$0xf]
        %v1369 = vld [vmem:[#allocation4 + $0x130] sm:$0xf]
        %v1370 = vld [vmem:[#allocation4 + $0x134] sm:$0xf]
        %v1371 = vld [vmem:[#allocation4 + $0x138] sm:$0xf]
        %v1372 = vld [vmem:[#allocation4 + $0x13c] sm:$0xf]
        %v1373 = vld [vmem:[#allocation4 + $0x140] sm:$0xf]
        %v1374 = vld [vmem:[#allocation4 + $0x144] sm:$0xf]
        %v1375 = vld [vmem:[#allocation4 + $0x148] sm:$0xf]
        %v1376 = vld [vmem:[#allocation4 + $0x14c] sm:$0xf]
        %v1377 = vld [vmem:[#allocation4 + $0x150] sm:$0xf]
        %v1378 = vld [vmem:[#allocation4 + $0x154] sm:$0xf]
        %v1379 = vld [vmem:[#allocation4 + $0x158] sm:$0xf]
        %v1380 = vld [vmem:[#allocation4 + $0x15c] sm:$0xf]
        %v1381 = vld [vmem:[#allocation4 + $0x160] sm:$0xf]
        %v1382 = vld [vmem:[#allocation4 + $0x164] sm:$0xf]
        %v1383 = vld [vmem:[#allocation4 + $0x168] sm:$0xf]
        %v1384 = vld [vmem:[#allocation4 + $0x16c] sm:$0xf]
        %v1385 = vld [vmem:[#allocation4 + $0x170] sm:$0xf]
        %v1386 = vld [vmem:[#allocation4 + $0x174] sm:$0xf]
        %v1387 = vld [vmem:[#allocation4 + $0x178] sm:$0xf]
        %v1388 = vld [vmem:[#allocation4 + $0x17c] sm:$0xf]
        %v1389 = vld [vmem:[#allocation4 + $0x180] sm:$0xf]
        %v1390 = vld [vmem:[#allocation4 + $0x184] sm:$0xf]
        %v1391 = vld [vmem:[#allocation4 + $0x188] sm:$0xf]
        %v1392 = vld [vmem:[#allocation4 + $0x18c] sm:$0xf]
        %v1393 = vld [vmem:[#allocation4 + $0x190] sm:$0xf]
        %v1394 = vld [vmem:[#allocation4 + $0x194] sm:$0xf]
        %v1395 = vld [vmem:[#allocation4 + $0x198] sm:$0xf]
        %v1396 = vld [vmem:[#allocation4 + $0x19c] sm:$0xf]
        %v1397 = vld [vmem:[#allocation4 + $0x1a0] sm:$0xf]
        %v1398 = vld [vmem:[#allocation4 + $0x1a4] sm:$0xf]
        %v1399 = vld [vmem:[#allocation4 + $0x1a8] sm:$0xf]
        %v1400 = vld [vmem:[#allocation4 + $0x1ac] sm:$0xf]
        %v1401 = vld [vmem:[#allocation4 + $0x1b0] sm:$0xf]
        %v1402 = vld [vmem:[#allocation4 + $0x1b4] sm:$0xf]
        %v1403 = vld [vmem:[#allocation4 + $0x1b8] sm:$0xf]
        %v1404 = vld [vmem:[#allocation4 + $0x1bc] sm:$0xf]
        %v1405 = vld [vmem:[#allocation4 + $0x1c0] sm:$0xf]
        %v1406 = vld [vmem:[#allocation4 + $0x1c4] sm:$0xf]
        %v1407 = vld [vmem:[#allocation4 + $0x1c8] sm:$0xf]
        %v1408 = vld [vmem:[#allocation4 + $0x1cc] sm:$0xf]
        %v1409 = vld [vmem:[#allocation4 + $0x1d0] sm:$0xf]
        %v1410 = vld [vmem:[#allocation4 + $0x1d4] sm:$0xf]
        %v1411 = vld [vmem:[#allocation4 + $0x1d8] sm:$0xf]
        %v1412 = vld [vmem:[#allocation4 + $0x1dc] sm:$0xf]
        %v1413 = vld [vmem:[#allocation4 + $0x1e0] sm:$0xf]
        %v1414 = vld [vmem:[#allocation4 + $0x1e4] sm:$0xf]
        %v1415 = vld [vmem:[#allocation4 + $0x1e8] sm:$0xf]
        %v1416 = vld [vmem:[#allocation4 + $0x1ec] sm:$0xf]
        %v1417 = vld [vmem:[#allocation4 + $0x1f0] sm:$0xf]
        %v1418 = vld [vmem:[#allocation4 + $0x1f4] sm:$0xf]
        %v1419 = vld [vmem:[#allocation4 + $0x1f8] sm:$0xf]
        %v1420 = vld [vmem:[#allocation4 + $0x1fc] sm:$0xf]
        %v1421 = vld [vmem:[#allocation4 + $0x200] sm:$0xf]
        %v1422 = vld [vmem:[#allocation4 + $0x204] sm:$0xf]
        %v1423 = vld [vmem:[#allocation4 + $0x208] sm:$0xf]
        %v1424 = vld [vmem:[#allocation4 + $0x20c] sm:$0xf]
        %v1425 = vld [vmem:[#allocation4 + $0x210] sm:$0xf]
        %v1426 = vld [vmem:[#allocation4 + $0x214] sm:$0xf]
        %v1427 = vld [vmem:[#allocation4 + $0x218] sm:$0xf]
        %v1428 = vld [vmem:[#allocation4 + $0x21c] sm:$0xf]
        %v1429 = vld [vmem:[#allocation4 + $0x220] sm:$0xf]
        %v1430 = vld [vmem:[#allocation4 + $0x224] sm:$0xf]
        %v1431 = vld [vmem:[#allocation4 + $0x228] sm:$0xf]
        %v1432 = vld [vmem:[#allocation4 + $0x22c] sm:$0xf]
        %v1433 = vld [vmem:[#allocation4 + $0x230] sm:$0xf]
        %v1434 = vld [vmem:[#allocation4 + $0x234] sm:$0xf]
        %v1435 = vld [vmem:[#allocation4 + $0x238] sm:$0xf]
        %v1436 = vld [vmem:[#allocation4 + $0x23c] sm:$0xf]
        %v1437 = vld [vmem:[%s321] sm:$0x1]
        %v1439 = vlaneseq
        %v1440 = vshrl.u32 %v1439, 7
        %v1441 = vsub.s32 0, %v1440
        %v1442 = vrot.slane %v1437, %v1441
        %v1588 = vunpack.c.l.b16 %v1293
        %v1589 = vunpack.c.l.b16 %v1294
        %v1590 = vunpack.c.l.b16 %v1295
        %v1591 = vunpack.c.l.b16 %v1296
        %v1592 = vunpack.c.l.b16 %v1297
        %v1593 = vunpack.c.l.b16 %v1298
        %v1594 = vunpack.c.l.b16 %v1299
        %v1595 = vunpack.c.l.b16 %v1300
        %v1596 = vunpack.c.l.b16 %v1301
        %v1597 = vunpack.c.l.b16 %v1302
        %v1598 = vunpack.c.l.b16 %v1303
        %v1599 = vunpack.c.l.b16 %v1304
        %v1600 = vunpack.c.l.b16 %v1305
        %v1601 = vunpack.c.l.b16 %v1306
        %v1602 = vunpack.c.l.b16 %v1307
        %v1603 = vunpack.c.l.b16 %v1308
        %v1604 = vunpack.c.l.b16 %v1309
        %v1605 = vunpack.c.l.b16 %v1310
        %v1606 = vunpack.c.l.b16 %v1311
        %v1607 = vunpack.c.l.b16 %v1312
        %v1608 = vunpack.c.l.b16 %v1313
        %v1609 = vunpack.c.l.b16 %v1314
        %v1610 = vunpack.c.l.b16 %v1315
        %v1611 = vunpack.c.l.b16 %v1316
        %v1612 = vunpack.c.l.b16 %v1317
        %v1613 = vunpack.c.l.b16 %v1318
        %v1614 = vunpack.c.l.b16 %v1319
        %v1615 = vunpack.c.l.b16 %v1320
        %v1616 = vunpack.c.l.b16 %v1321
        %v1617 = vunpack.c.l.b16 %v1322
        %v1618 = vunpack.c.l.b16 %v1323
        %v1619 = vunpack.c.l.b16 %v1324
        %v1620 = vunpack.c.l.b16 %v1325
        %v1621 = vunpack.c.l.b16 %v1326
        %v1622 = vunpack.c.l.b16 %v1327
        %v1623 = vunpack.c.l.b16 %v1328
        %v1624 = vunpack.c.l.b16 %v1329
        %v1625 = vunpack.c.l.b16 %v1330
        %v1626 = vunpack.c.l.b16 %v1331
        %v1627 = vunpack.c.l.b16 %v1332
        %v1628 = vunpack.c.l.b16 %v1333
        %v1629 = vunpack.c.l.b16 %v1334
        %v1630 = vunpack.c.l.b16 %v1335
        %v1631 = vunpack.c.l.b16 %v1336
        %v1632 = vunpack.c.l.b16 %v1337
        %v1633 = vunpack.c.l.b16 %v1338
        %v1634 = vunpack.c.l.b16 %v1339
        %v1635 = vunpack.c.l.b16 %v1340
        %v1636 = vunpack.c.l.b16 %v1341
        %v1637 = vunpack.c.l.b16 %v1342
        %v1638 = vunpack.c.l.b16 %v1343
        %v1639 = vunpack.c.l.b16 %v1344
        %v1640 = vunpack.c.l.b16 %v1345
        %v1641 = vunpack.c.l.b16 %v1346
        %v1642 = vunpack.c.l.b16 %v1347
        %v1643 = vunpack.c.l.b16 %v1348
        %v1644 = vunpack.c.l.b16 %v1349
        %v1645 = vunpack.c.l.b16 %v1350
        %v1646 = vunpack.c.l.b16 %v1351
        %v1647 = vunpack.c.l.b16 %v1352
        %v1648 = vunpack.c.l.b16 %v1353
        %v1649 = vunpack.c.l.b16 %v1354
        %v1650 = vunpack.c.l.b16 %v1355
        %v1651 = vunpack.c.l.b16 %v1356
        %v1652 = vunpack.c.l.b16 %v1357
        %v1653 = vunpack.c.l.b16 %v1358
        %v1654 = vunpack.c.l.b16 %v1359
        %v1655 = vunpack.c.l.b16 %v1360
        %v1656 = vunpack.c.l.b16 %v1361
        %v1657 = vunpack.c.l.b16 %v1362
        %v1658 = vunpack.c.l.b16 %v1363
        %v1659 = vunpack.c.l.b16 %v1364
        %v1660 = vunpack.c.l.b16 %v1365
        %v1661 = vunpack.c.l.b16 %v1366
        %v1662 = vunpack.c.l.b16 %v1367
        %v1663 = vunpack.c.l.b16 %v1368
        %v1664 = vunpack.c.l.b16 %v1369
        %v1665 = vunpack.c.l.b16 %v1370
        %v1666 = vunpack.c.l.b16 %v1371
        %v1667 = vunpack.c.l.b16 %v1372
        %v1668 = vunpack.c.l.b16 %v1373
        %v1669 = vunpack.c.l.b16 %v1374
        %v1670 = vunpack.c.l.b16 %v1375
        %v1671 = vunpack.c.l.b16 %v1376
        %v1672 = vunpack.c.l.b16 %v1377
        %v1673 = vunpack.c.l.b16 %v1378
        %v1674 = vunpack.c.l.b16 %v1379
        %v1675 = vunpack.c.l.b16 %v1380
        %v1676 = vunpack.c.l.b16 %v1381
        %v1677 = vunpack.c.l.b16 %v1382
        %v1678 = vunpack.c.l.b16 %v1383
        %v1679 = vunpack.c.l.b16 %v1384
        %v1680 = vunpack.c.l.b16 %v1385
        %v1681 = vunpack.c.l.b16 %v1386
        %v1682 = vunpack.c.l.b16 %v1387
        %v1683 = vunpack.c.l.b16 %v1388
        %v1684 = vunpack.c.l.b16 %v1389
        %v1685 = vunpack.c.l.b16 %v1390
        %v1686 = vunpack.c.l.b16 %v1391
        %v1687 = vunpack.c.l.b16 %v1392
        %v1688 = vunpack.c.l.b16 %v1393
        %v1689 = vunpack.c.l.b16 %v1394
        %v1690 = vunpack.c.l.b16 %v1395
        %v1691 = vunpack.c.l.b16 %v1396
        %v1692 = vunpack.c.l.b16 %v1397
        %v1693 = vunpack.c.l.b16 %v1398
        %v1694 = vunpack.c.l.b16 %v1399
        %v1695 = vunpack.c.l.b16 %v1400
        %v1696 = vunpack.c.l.b16 %v1401
        %v1697 = vunpack.c.l.b16 %v1402
        %v1698 = vunpack.c.l.b16 %v1403
        %v1699 = vunpack.c.l.b16 %v1404
        %v1700 = vunpack.c.l.b16 %v1405
        %v1701 = vunpack.c.l.b16 %v1406
        %v1702 = vunpack.c.l.b16 %v1407
        %v1703 = vunpack.c.l.b16 %v1408
        %v1704 = vunpack.c.l.b16 %v1409
        %v1705 = vunpack.c.l.b16 %v1410
        %v1706 = vunpack.c.l.b16 %v1411
        %v1707 = vunpack.c.l.b16 %v1412
        %v1708 = vunpack.c.l.b16 %v1413
        %v1709 = vunpack.c.l.b16 %v1414
        %v1710 = vunpack.c.l.b16 %v1415
        %v1711 = vunpack.c.l.b16 %v1416
        %v1712 = vunpack.c.l.b16 %v1417
        %v1713 = vunpack.c.l.b16 %v1418
        %v1714 = vunpack.c.l.b16 %v1419
        %v1715 = vunpack.c.l.b16 %v1420
        %v1716 = vunpack.c.l.b16 %v1421
        %v1717 = vunpack.c.l.b16 %v1422
        %v1718 = vunpack.c.l.b16 %v1423
        %v1719 = vunpack.c.l.b16 %v1424
        %v1720 = vunpack.c.l.b16 %v1425
        %v1721 = vunpack.c.l.b16 %v1426
        %v1722 = vunpack.c.l.b16 %v1427
        %v1723 = vunpack.c.l.b16 %v1428
        %v1724 = vunpack.c.l.b16 %v1429
        %v1725 = vunpack.c.l.b16 %v1430
        %v1726 = vunpack.c.l.b16 %v1431
        %v1727 = vunpack.c.l.b16 %v1432
        %v1728 = vunpack.c.l.b16 %v1433
        %v1729 = vunpack.c.l.b16 %v1434
        %v1730 = vunpack.c.l.b16 %v1435
        %v1731 = vunpack.c.l.b16 %v1436
        %v1732 = vpack.c.b16 %v1589, %v1588
        %v1733 = vpack.c.b16 %v1591, %v1590
        %v1734 = vpack.c.b16 %v1593, %v1592
        %v1735 = vpack.c.b16 %v1595, %v1594
        %v1736 = vpack.c.b16 %v1597, %v1596
        %v1737 = vpack.c.b16 %v1599, %v1598
        %v1738 = vpack.c.b16 %v1601, %v1600
        %v1739 = vpack.c.b16 %v1603, %v1602
        %v1740 = vpack.c.b16 %v1605, %v1604
        %v1741 = vpack.c.b16 %v1607, %v1606
        %v1742 = vpack.c.b16 %v1609, %v1608
        %v1743 = vpack.c.b16 %v1611, %v1610
        %v1744 = vpack.c.b16 %v1613, %v1612
        %v1745 = vpack.c.b16 %v1615, %v1614
        %v1746 = vpack.c.b16 %v1617, %v1616
        %v1747 = vpack.c.b16 %v1619, %v1618
        %v1748 = vpack.c.b16 %v1621, %v1620
        %v1749 = vpack.c.b16 %v1623, %v1622
        %v1750 = vpack.c.b16 %v1625, %v1624
        %v1751 = vpack.c.b16 %v1627, %v1626
        %v1752 = vpack.c.b16 %v1629, %v1628
        %v1753 = vpack.c.b16 %v1631, %v1630
        %v1754 = vpack.c.b16 %v1633, %v1632
        %v1755 = vpack.c.b16 %v1635, %v1634
        %v1756 = vpack.c.b16 %v1637, %v1636
        %v1757 = vpack.c.b16 %v1639, %v1638
        %v1758 = vpack.c.b16 %v1641, %v1640
        %v1759 = vpack.c.b16 %v1643, %v1642
        %v1760 = vpack.c.b16 %v1645, %v1644
        %v1761 = vpack.c.b16 %v1647, %v1646
        %v1762 = vpack.c.b16 %v1649, %v1648
        %v1763 = vpack.c.b16 %v1651, %v1650
        %v1764 = vpack.c.b16 %v1653, %v1652
        %v1765 = vpack.c.b16 %v1655, %v1654
        %v1766 = vpack.c.b16 %v1657, %v1656
        %v1767 = vpack.c.b16 %v1659, %v1658
        %v1768 = vpack.c.b16 %v1661, %v1660
        %v1769 = vpack.c.b16 %v1663, %v1662
        %v1770 = vpack.c.b16 %v1665, %v1664
        %v1771 = vpack.c.b16 %v1667, %v1666
        %v1772 = vpack.c.b16 %v1669, %v1668
        %v1773 = vpack.c.b16 %v1671, %v1670
        %v1774 = vpack.c.b16 %v1673, %v1672
        %v1775 = vpack.c.b16 %v1675, %v1674
        %v1776 = vpack.c.b16 %v1677, %v1676
        %v1777 = vpack.c.b16 %v1679, %v1678
        %v1778 = vpack.c.b16 %v1681, %v1680
        %v1779 = vpack.c.b16 %v1683, %v1682
        %v1780 = vpack.c.b16 %v1685, %v1684
        %v1781 = vpack.c.b16 %v1687, %v1686
        %v1782 = vpack.c.b16 %v1689, %v1688
        %v1783 = vpack.c.b16 %v1691, %v1690
        %v1784 = vpack.c.b16 %v1693, %v1692
        %v1785 = vpack.c.b16 %v1695, %v1694
        %v1786 = vpack.c.b16 %v1697, %v1696
        %v1787 = vpack.c.b16 %v1699, %v1698
        %v1788 = vpack.c.b16 %v1701, %v1700
        %v1789 = vpack.c.b16 %v1703, %v1702
        %v1790 = vpack.c.b16 %v1705, %v1704
        %v1791 = vpack.c.b16 %v1707, %v1706
        %v1792 = vpack.c.b16 %v1709, %v1708
        %v1793 = vpack.c.b16 %v1711, %v1710
        %v1794 = vpack.c.b16 %v1713, %v1712
        %v1795 = vpack.c.b16 %v1715, %v1714
        %v1796 = vpack.c.b16 %v1717, %v1716
        %v1797 = vpack.c.b16 %v1719, %v1718
        %v1798 = vpack.c.b16 %v1721, %v1720
        %v1799 = vpack.c.b16 %v1723, %v1722
        %v1800 = vpack.c.b16 %v1725, %v1724
        %v1801 = vpack.c.b16 %v1727, %v1726
        %v1802 = vpack.c.b16 %v1729, %v1728
        %v1803 = vpack.c.b16 %v1731, %v1730
        %1876 = vmatprep.subr.bf16.mxu0 0
        %1877 = vmatpush1.bf16.msra.mxu0 %v1732
        %1878 = vmatprep.subr.bf16.mxu0 0
        %1879 = vmatpush1.bf16.msra.mxu0 %v1733
        %1880 = vmatprep.subr.bf16.mxu0 0
        %1881 = vmatpush1.bf16.msra.mxu0 %v1734
        %1882 = vmatprep.subr.bf16.mxu0 0
        %1883 = vmatpush1.bf16.msra.mxu0 %v1735
        %1884 = vmatprep.subr.bf16.mxu0 0
        %1885 = vmatpush1.bf16.msra.mxu0 %v1736
        %1886 = vmatprep.subr.bf16.mxu0 0
        %1887 = vmatpush1.bf16.msra.mxu0 %v1737
        %1888 = vmatprep.subr.bf16.mxu0 0
        %1889 = vmatpush1.bf16.msra.mxu0 %v1738
        %1890 = vmatprep.subr.bf16.mxu0 0
        %1891 = vmatpush1.bf16.msra.mxu0 %v1739
        %1892 = vmatprep.subr.bf16.mxu0 0
        %1893 = vmatpush1.bf16.msra.mxu0 %v1740
        %1894 = vmatprep.subr.bf16.mxu0 0
        %1895 = vmatpush1.bf16.msra.mxu0 %v1741
        %1896 = vmatprep.subr.bf16.mxu0 0
        %1897 = vmatpush1.bf16.msra.mxu0 %v1742
        %1898 = vmatprep.subr.bf16.mxu0 0
        %1899 = vmatpush1.bf16.msra.mxu0 %v1743
        %1900 = vmatprep.subr.bf16.mxu0 0
        %1901 = vmatpush1.bf16.msra.mxu0 %v1744
        %1902 = vmatprep.subr.bf16.mxu0 0
        %1903 = vmatpush1.bf16.msra.mxu0 %v1745
        %1904 = vmatprep.subr.bf16.mxu0 0
        %1905 = vmatpush1.bf16.msra.mxu0 %v1746
        %1906 = vmatprep.subr.bf16.mxu0 0
        %1907 = vmatpush1.bf16.msra.mxu0 %v1747
        %1908 = vmatprep.mubr.bf16.mxu0 %v1132
        %1909 = vmatmul.mubr.bf16.gmra.mrb[0].mxu0 %v1131
        %v1910 = vpop.f32.mrb[0].mxu0
        %v1911 = vadd.f32 %v1442, %v1910
        %v1912 = vpop.f32.mrb[0].mxu0
        %v1913 = vpop.f32.mrb[0].mxu0
        %v1914 = vadd.f32 %v1442, %v1913
        %v1915 = vpop.f32.mrb[0].mxu0
        %1916 = vmatprep.mubr.bf16.mxu0 %v1141
        %1917 = vmatmul.mubr.bf16.gmra.mrb[0].mxu0 %v1140
        %v1918 = vpop.f32.mrb[0].mxu0
        %v1919 = vadd.f32 %v1442, %v1918
        %v1920 = vpop.f32.mrb[0].mxu0
        %v1921 = vpop.f32.mrb[0].mxu0
        %v1922 = vadd.f32 %v1442, %v1921
        %v1923 = vpop.f32.mrb[0].mxu0
        %1924 = vmatprep.mubr.bf16.mxu0 %v1150
        %1925 = vmatmul.mubr.bf16.gmra.mrb[0].mxu0 %v1149
        %v1926 = vpop.f32.mrb[0].mxu0
        %v1927 = vadd.f32 %v1442, %v1926
        %v1928 = vpop.f32.mrb[0].mxu0
        %v1929 = vpop.f32.mrb[0].mxu0
        %v1930 = vadd.f32 %v1442, %v1929
        %v1931 = vpop.f32.mrb[0].mxu0
        %1932 = vmatprep.mubr.bf16.mxu0 %v1159
        %1933 = vmatmul.mubr.bf16.gmra.mrb[0].mxu0 %v1158
        %v1934 = vpop.f32.mrb[0].mxu0
        %v1935 = vadd.f32 %v1442, %v1934
        %v1936 = vpop.f32.mrb[0].mxu0
        %v1937 = vpop.f32.mrb[0].mxu0
        %v1938 = vadd.f32 %v1442, %v1937
        %v1939 = vpop.f32.mrb[0].mxu0
        %1940 = vmatprep.mubr.bf16.mxu0 %v1168
        %1941 = vmatmul.mubr.bf16.gmra.mrb[0].mxu0 %v1167
        %v1942 = vpop.f32.mrb[0].mxu0
        %v1943 = vadd.f32 %v1442, %v1942
        %v1944 = vpop.f32.mrb[0].mxu0
        %v1945 = vpop.f32.mrb[0].mxu0
        %v1946 = vadd.f32 %v1442, %v1945
        %v1947 = vpop.f32.mrb[0].mxu0
        %1948 = vmatprep.mubr.bf16.mxu0 %v1177
        %1949 = vmatmul.mubr.bf16.gmra.mrb[0].mxu0 %v1176
        %v1950 = vpop.f32.mrb[0].mxu0
        %v1951 = vadd.f32 %v1442, %v1950
        %v1952 = vpop.f32.mrb[0].mxu0
        %v1953 = vpop.f32.mrb[0].mxu0
        %v1954 = vadd.f32 %v1442, %v1953
        %v1955 = vpop.f32.mrb[0].mxu0
        %1956 = vmatprep.mubr.bf16.mxu0 %v1186
        %1957 = vmatmul.mubr.bf16.gmra.mrb[0].mxu0 %v1185
        %v1958 = vpop.f32.mrb[0].mxu0
        %v1959 = vadd.f32 %v1442, %v1958
        %v1960 = vpop.f32.mrb[0].mxu0
        %v1961 = vpop.f32.mrb[0].mxu0
        %v1962 = vadd.f32 %v1442, %v1961
        %v1963 = vpop.f32.mrb[0].mxu0
        %1964 = vmatprep.mubr.bf16.mxu0 %v1195
        %1965 = vmatmul.mubr.bf16.gmra.mrb[0].mxu0 %v1194
        %v1966 = vpop.f32.mrb[0].mxu0
        %v1967 = vadd.f32 %v1442, %v1966
        %v1968 = vpop.f32.mrb[0].mxu0
        %v1969 = vpop.f32.mrb[0].mxu0
        %v1970 = vadd.f32 %v1442, %v1969
        %v1971 = vpop.f32.mrb[0].mxu0
        %1972 = vmatprep.mubr.bf16.mxu0 %v1204
        %1973 = vmatmul.mubr.bf16.gmra.mrb[0].mxu0 %v1203
        %v1974 = vpop.f32.mrb[0].mxu0
        %v1975 = vadd.f32 %v1442, %v1974
        %v1976 = vpop.f32.mrb[0].mxu0
        %v1977 = vpop.f32.mrb[0].mxu0
        %v1978 = vadd.f32 %v1442, %v1977
        %v1979 = vpop.f32.mrb[0].mxu0
        %1980 = vmatprep.mubr.bf16.mxu0 %v1213
        %1981 = vmatmul.mubr.bf16.gmra.mrb[0].mxu0 %v1212
        %v1982 = vpop.f32.mrb[0].mxu0
        %v1983 = vadd.f32 %v1442, %v1982
        %v1984 = vpop.f32.mrb[0].mxu0
        %v1985 = vpop.f32.mrb[0].mxu0
        %v1986 = vadd.f32 %v1442, %v1985
        %v1987 = vpop.f32.mrb[0].mxu0
        %1988 = vmatprep.mubr.bf16.mxu0 %v1222
        %1989 = vmatmul.mubr.bf16.gmra.mrb[0].mxu0 %v1221
        %v1990 = vpop.f32.mrb[0].mxu0
        %v1991 = vadd.f32 %v1442, %v1990
        %v1992 = vpop.f32.mrb[0].mxu0
        %v1993 = vpop.f32.mrb[0].mxu0
        %v1994 = vadd.f32 %v1442, %v1993
        %v1995 = vpop.f32.mrb[0].mxu0
        %1996 = vmatprep.mubr.bf16.mxu0 %v1231
        %1997 = vmatmul.mubr.bf16.gmra.mrb[0].mxu0 %v1230
        %v1998 = vpop.f32.mrb[0].mxu0
        %v1999 = vadd.f32 %v1442, %v1998
        %v2000 = vpop.f32.mrb[0].mxu0
        %v2001 = vpop.f32.mrb[0].mxu0
        %v2002 = vadd.f32 %v1442, %v2001
        %v2003 = vpop.f32.mrb[0].mxu0
        %2004 = vmatprep.mubr.bf16.mxu0 %v1240
        %2005 = vmatmul.mubr.bf16.gmra.mrb[0].mxu0 %v1239
        %v2006 = vpop.f32.mrb[0].mxu0
        %v2007 = vadd.f32 %v1442, %v2006
        %v2008 = vpop.f32.mrb[0].mxu0
        %v2009 = vpop.f32.mrb[0].mxu0
        %v2010 = vadd.f32 %v1442, %v2009
        %v2011 = vpop.f32.mrb[0].mxu0
        %2012 = vmatprep.mubr.bf16.mxu0 %v1249
        %2013 = vmatmul.mubr.bf16.gmra.mrb[0].mxu0 %v1248
        %v2014 = vpop.f32.mrb[0].mxu0
        %v2015 = vadd.f32 %v1442, %v2014
        %v2016 = vpop.f32.mrb[0].mxu0
        %v2017 = vpop.f32.mrb[0].mxu0
        %v2018 = vadd.f32 %v1442, %v2017
        %v2019 = vpop.f32.mrb[0].mxu0
        %2020 = vmatprep.mubr.bf16.mxu0 %v1258
        %2021 = vmatmul.mubr.bf16.gmra.mrb[0].mxu0 %v1257
        %v2022 = vpop.f32.mrb[0].mxu0
        %v2023 = vadd.f32 %v1442, %v2022
        %v2024 = vpop.f32.mrb[0].mxu0
        %v2025 = vpop.f32.mrb[0].mxu0
        %v2026 = vadd.f32 %v1442, %v2025
        %v2027 = vpop.f32.mrb[0].mxu0
        %2028 = vmatprep.mubr.bf16.mxu0 %v1267
        %2029 = vmatmul.mubr.bf16.gmra.mrb[0].mxu0 %v1266
        %v2030 = vpop.f32.mrb[0].mxu0
        %v2031 = vadd.f32 %v1442, %v2030
        %v2032 = vpop.f32.mrb[0].mxu0
        %v2033 = vpop.f32.mrb[0].mxu0
        %v2034 = vadd.f32 %v1442, %v2033
        %v2035 = vpop.f32.mrb[0].mxu0
        %2036 = vmatprep.mubr.bf16.mxu0 %v1276
        %2037 = vmatmul.mubr.bf16.gmra.mrb[0].mxu0 %v1275
        %v2038 = vpop.f32.mrb[0].mxu0
        %v2039 = vadd.f32 %v1442, %v2038
        %v2040 = vpop.f32.mrb[0].mxu0
        %v2041 = vpop.f32.mrb[0].mxu0
        %v2042 = vadd.f32 %v1442, %v2041
        %v2043 = vpop.f32.mrb[0].mxu0
        %2044 = vmatprep.mubr.bf16.mxu0 %v1285
        %2045 = vmatmul.mubr.bf16.gmra.mrb[0].mxu0 %v1284
        %v2046 = vpop.f32.mrb[0].mxu0
        %v2047 = vadd.f32 %v1442, %v2046
        %v2048 = vpop.f32.mrb[0].mxu0
        %v2049 = vpop.f32.mrb[0].mxu0
        %v2050 = vadd.f32 %v1442, %v2049
        %v2051 = vpop.f32.mrb[0].mxu0
        %2052 = vdwg.mxu0
        %2053 = vmatprep.subr.bf16.mxu0 0
        %2054 = vmatpush1.bf16.msra.mxu0 %v1748
        %2055 = vmatprep.subr.bf16.mxu0 0
        %2056 = vmatpush1.bf16.msra.mxu0 %v1749
        %2057 = vmatprep.subr.bf16.mxu0 0
        %2058 = vmatpush1.bf16.msra.mxu0 %v1750
        %2059 = vmatprep.subr.bf16.mxu0 0
        %2060 = vmatpush1.bf16.msra.mxu0 %v1751
        %2061 = vmatprep.subr.bf16.mxu0 0
        %2062 = vmatpush1.bf16.msra.mxu0 %v1752
        %2063 = vmatprep.subr.bf16.mxu0 0
        %2064 = vmatpush1.bf16.msra.mxu0 %v1753
        %2065 = vmatprep.subr.bf16.mxu0 0
        %2066 = vmatpush1.bf16.msra.mxu0 %v1754
        %2067 = vmatprep.subr.bf16.mxu0 0
        %2068 = vmatpush1.bf16.msra.mxu0 %v1755
        %2069 = vmatprep.subr.bf16.mxu0 0
        %2070 = vmatpush1.bf16.msra.mxu0 %v1756
        %2071 = vmatprep.subr.bf16.mxu0 0
        %2072 = vmatpush1.bf16.msra.mxu0 %v1757
        %2073 = vmatprep.subr.bf16.mxu0 0
        %2074 = vmatpush1.bf16.msra.mxu0 %v1758
        %2075 = vmatprep.subr.bf16.mxu0 0
        %2076 = vmatpush1.bf16.msra.mxu0 %v1759
        %2077 = vmatprep.subr.bf16.mxu0 0
        %2078 = vmatpush1.bf16.msra.mxu0 %v1760
        %2079 = vmatprep.subr.bf16.mxu0 0
        %2080 = vmatpush1.bf16.msra.mxu0 %v1761
        %2081 = vmatprep.subr.bf16.mxu0 0
        %2082 = vmatpush1.bf16.msra.mxu0 %v1762
        %2083 = vmatprep.subr.bf16.mxu0 0
        %2084 = vmatpush1.bf16.msra.mxu0 %v1763
        %2085 = vmatprep.mubr.bf16.mxu0 %v1134
        %2086 = vmatmul.mubr.bf16.gmra.mrb[0].mxu0 %v1133
        %v2087 = vpop.f32.mrb[0].mxu0
        %v2088 = vadd.f32 %v1911, %v2087
        %v2089 = vpop.f32.mrb[0].mxu0
        %v2090 = vpop.f32.mrb[0].mxu0
        %v2091 = vadd.f32 %v1914, %v2090
        %v2092 = vpop.f32.mrb[0].mxu0
        %2093 = vmatprep.mubr.bf16.mxu0 %v1143
        %2094 = vmatmul.mubr.bf16.gmra.mrb[0].mxu0 %v1142
        %v2095 = vpop.f32.mrb[0].mxu0
        %v2096 = vadd.f32 %v1919, %v2095
        %v2097 = vpop.f32.mrb[0].mxu0
        %v2098 = vpop.f32.mrb[0].mxu0
        %v2099 = vadd.f32 %v1922, %v2098
        %v2100 = vpop.f32.mrb[0].mxu0
        %2101 = vmatprep.mubr.bf16.mxu0 %v1152
        %2102 = vmatmul.mubr.bf16.gmra.mrb[0].mxu0 %v1151
        %v2103 = vpop.f32.mrb[0].mxu0
        %v2104 = vadd.f32 %v1927, %v2103
        %v2105 = vpop.f32.mrb[0].mxu0
        %v2106 = vpop.f32.mrb[0].mxu0
        %v2107 = vadd.f32 %v1930, %v2106
        %v2108 = vpop.f32.mrb[0].mxu0
        %2109 = vmatprep.mubr.bf16.mxu0 %v1161
        %2110 = vmatmul.mubr.bf16.gmra.mrb[0].mxu0 %v1160
        %v2111 = vpop.f32.mrb[0].mxu0
        %v2112 = vadd.f32 %v1935, %v2111
        %v2113 = vpop.f32.mrb[0].mxu0
        %v2114 = vpop.f32.mrb[0].mxu0
        %v2115 = vadd.f32 %v1938, %v2114
        %v2116 = vpop.f32.mrb[0].mxu0
        %2117 = vmatprep.mubr.bf16.mxu0 %v1170
        %2118 = vmatmul.mubr.bf16.gmra.mrb[0].mxu0 %v1169
        %v2119 = vpop.f32.mrb[0].mxu0
        %v2120 = vadd.f32 %v1943, %v2119
        %v2121 = vpop.f32.mrb[0].mxu0
        %v2122 = vpop.f32.mrb[0].mxu0
        %v2123 = vadd.f32 %v1946, %v2122
        %v2124 = vpop.f32.mrb[0].mxu0
        %2125 = vmatprep.mubr.bf16.mxu0 %v1179
        %2126 = vmatmul.mubr.bf16.gmra.mrb[0].mxu0 %v1178
        %v2127 = vpop.f32.mrb[0].mxu0
        %v2128 = vadd.f32 %v1951, %v2127
        %v2129 = vpop.f32.mrb[0].mxu0
        %v2130 = vpop.f32.mrb[0].mxu0
        %v2131 = vadd.f32 %v1954, %v2130
        %v2132 = vpop.f32.mrb[0].mxu0
        %2133 = vmatprep.mubr.bf16.mxu0 %v1188
        %2134 = vmatmul.mubr.bf16.gmra.mrb[0].mxu0 %v1187
        %v2135 = vpop.f32.mrb[0].mxu0
        %v2136 = vadd.f32 %v1959, %v2135
        %v2137 = vpop.f32.mrb[0].mxu0
        %v2138 = vpop.f32.mrb[0].mxu0
        %v2139 = vadd.f32 %v1962, %v2138
        %v2140 = vpop.f32.mrb[0].mxu0
        %2141 = vmatprep.mubr.bf16.mxu0 %v1197
        %2142 = vmatmul.mubr.bf16.gmra.mrb[0].mxu0 %v1196
        %v2143 = vpop.f32.mrb[0].mxu0
        %v2144 = vadd.f32 %v1967, %v2143
        %v2145 = vpop.f32.mrb[0].mxu0
        %v2146 = vpop.f32.mrb[0].mxu0
        %v2147 = vadd.f32 %v1970, %v2146
        %v2148 = vpop.f32.mrb[0].mxu0
        %2149 = vmatprep.mubr.bf16.mxu0 %v1206
        %2150 = vmatmul.mubr.bf16.gmra.mrb[0].mxu0 %v1205
        %v2151 = vpop.f32.mrb[0].mxu0
        %v2152 = vadd.f32 %v1975, %v2151
        %v2153 = vpop.f32.mrb[0].mxu0
        %v2154 = vpop.f32.mrb[0].mxu0
        %v2155 = vadd.f32 %v1978, %v2154
        %v2156 = vpop.f32.mrb[0].mxu0
        %2157 = vmatprep.mubr.bf16.mxu0 %v1215
        %2158 = vmatmul.mubr.bf16.gmra.mrb[0].mxu0 %v1214
        %v2159 = vpop.f32.mrb[0].mxu0
        %v2160 = vadd.f32 %v1983, %v2159
        %v2161 = vpop.f32.mrb[0].mxu0
        %v2162 = vpop.f32.mrb[0].mxu0
        %v2163 = vadd.f32 %v1986, %v2162
        %v2164 = vpop.f32.mrb[0].mxu0
        %2165 = vmatprep.mubr.bf16.mxu0 %v1224
        %2166 = vmatmul.mubr.bf16.gmra.mrb[0].mxu0 %v1223
        %v2167 = vpop.f32.mrb[0].mxu0
        %v2168 = vadd.f32 %v1991, %v2167
        %v2169 = vpop.f32.mrb[0].mxu0
        %v2170 = vpop.f32.mrb[0].mxu0
        %v2171 = vadd.f32 %v1994, %v2170
        %v2172 = vpop.f32.mrb[0].mxu0
        %2173 = vmatprep.mubr.bf16.mxu0 %v1233
        %2174 = vmatmul.mubr.bf16.gmra.mrb[0].mxu0 %v1232
        %v2175 = vpop.f32.mrb[0].mxu0
        %v2176 = vadd.f32 %v1999, %v2175
        %v2177 = vpop.f32.mrb[0].mxu0
        %v2178 = vpop.f32.mrb[0].mxu0
        %v2179 = vadd.f32 %v2002, %v2178
        %v2180 = vpop.f32.mrb[0].mxu0
        %2181 = vmatprep.mubr.bf16.mxu0 %v1242
        %2182 = vmatmul.mubr.bf16.gmra.mrb[0].mxu0 %v1241
        %v2183 = vpop.f32.mrb[0].mxu0
        %v2184 = vadd.f32 %v2007, %v2183
        %v2185 = vpop.f32.mrb[0].mxu0
        %v2186 = vpop.f32.mrb[0].mxu0
        %v2187 = vadd.f32 %v2010, %v2186
        %v2188 = vpop.f32.mrb[0].mxu0
        %2189 = vmatprep.mubr.bf16.mxu0 %v1251
        %2190 = vmatmul.mubr.bf16.gmra.mrb[0].mxu0 %v1250
        %v2191 = vpop.f32.mrb[0].mxu0
        %v2192 = vadd.f32 %v2015, %v2191
        %v2193 = vpop.f32.mrb[0].mxu0
        %v2194 = vpop.f32.mrb[0].mxu0
        %v2195 = vadd.f32 %v2018, %v2194
        %v2196 = vpop.f32.mrb[0].mxu0
        %2197 = vmatprep.mubr.bf16.mxu0 %v1260
        %2198 = vmatmul.mubr.bf16.gmra.mrb[0].mxu0 %v1259
        %v2199 = vpop.f32.mrb[0].mxu0
        %v2200 = vadd.f32 %v2023, %v2199
        %v2201 = vpop.f32.mrb[0].mxu0
        %v2202 = vpop.f32.mrb[0].mxu0
        %v2203 = vadd.f32 %v2026, %v2202
        %v2204 = vpop.f32.mrb[0].mxu0
        %2205 = vmatprep.mubr.bf16.mxu0 %v1269
        %2206 = vmatmul.mubr.bf16.gmra.mrb[0].mxu0 %v1268
        %v2207 = vpop.f32.mrb[0].mxu0
        %v2208 = vadd.f32 %v2031, %v2207
        %v2209 = vpop.f32.mrb[0].mxu0
        %v2210 = vpop.f32.mrb[0].mxu0
        %v2211 = vadd.f32 %v2034, %v2210
        %v2212 = vpop.f32.mrb[0].mxu0
        %2213 = vmatprep.mubr.bf16.mxu0 %v1278
        %2214 = vmatmul.mubr.bf16.gmra.mrb[0].mxu0 %v1277
        %v2215 = vpop.f32.mrb[0].mxu0
        %v2216 = vadd.f32 %v2039, %v2215
        %v2217 = vpop.f32.mrb[0].mxu0
        %v2218 = vpop.f32.mrb[0].mxu0
        %v2219 = vadd.f32 %v2042, %v2218
        %v2220 = vpop.f32.mrb[0].mxu0
        %2221 = vmatprep.mubr.bf16.mxu0 %v1287
        %2222 = vmatmul.mubr.bf16.gmra.mrb[0].mxu0 %v1286
        %v2223 = vpop.f32.mrb[0].mxu0
        %v2224 = vadd.f32 %v2047, %v2223
        %v2225 = vpop.f32.mrb[0].mxu0
        %v2226 = vpop.f32.mrb[0].mxu0
        %v2227 = vadd.f32 %v2050, %v2226
        %v2228 = vpop.f32.mrb[0].mxu0
        %2229 = vdwg.mxu0
        %2230 = vmatprep.subr.bf16.mxu0 0
        %2231 = vmatpush1.bf16.msra.mxu0 %v1764
        %2232 = vmatprep.subr.bf16.mxu0 0
        %2233 = vmatpush1.bf16.msra.mxu0 %v1765
        %2234 = vmatprep.subr.bf16.mxu0 0
        %2235 = vmatpush1.bf16.msra.mxu0 %v1766
        %2236 = vmatprep.subr.bf16.mxu0 0
        %2237 = vmatpush1.bf16.msra.mxu0 %v1767
        %2238 = vmatprep.subr.bf16.mxu0 0
        %2239 = vmatpush1.bf16.msra.mxu0 %v1768
        %2240 = vmatprep.subr.bf16.mxu0 0
        %2241 = vmatpush1.bf16.msra.mxu0 %v1769
        %2242 = vmatprep.subr.bf16.mxu0 0
        %2243 = vmatpush1.bf16.msra.mxu0 %v1770
        %2244 = vmatprep.subr.bf16.mxu0 0
        %2245 = vmatpush1.bf16.msra.mxu0 %v1771
        %2246 = vmatprep.subr.bf16.mxu0 0
        %2247 = vmatpush1.bf16.msra.mxu0 %v1772
        %2248 = vmatprep.subr.bf16.mxu0 0
        %2249 = vmatpush1.bf16.msra.mxu0 %v1773
        %2250 = vmatprep.subr.bf16.mxu0 0
        %2251 = vmatpush1.bf16.msra.mxu0 %v1774
        %2252 = vmatprep.subr.bf16.mxu0 0
        %2253 = vmatpush1.bf16.msra.mxu0 %v1775
        %2254 = vmatprep.subr.bf16.mxu0 0
        %2255 = vmatpush1.bf16.msra.mxu0 %v1776
        %2256 = vmatprep.subr.bf16.mxu0 0
        %2257 = vmatpush1.bf16.msra.mxu0 %v1777
        %2258 = vmatprep.subr.bf16.mxu0 0
        %2259 = vmatpush1.bf16.msra.mxu0 %v1778
        %2260 = vmatprep.subr.bf16.mxu0 0
        %2261 = vmatpush1.bf16.msra.mxu0 %v1779
        %2262 = vmatprep.mubr.bf16.mxu0 %v1136
        %2263 = vmatmul.mubr.bf16.gmra.mrb[0].mxu0 %v1135
        %v2264 = vpop.f32.mrb[0].mxu0
        %v2265 = vadd.f32 %v2088, %v2264
        %v2266 = vpop.f32.mrb[0].mxu0
        %v2267 = vpop.f32.mrb[0].mxu0
        %v2268 = vadd.f32 %v2091, %v2267
        %v2269 = vpop.f32.mrb[0].mxu0
        %2270 = vmatprep.mubr.bf16.mxu0 %v1145
        %2271 = vmatmul.mubr.bf16.gmra.mrb[0].mxu0 %v1144
        %v2272 = vpop.f32.mrb[0].mxu0
        %v2273 = vadd.f32 %v2096, %v2272
        %v2274 = vpop.f32.mrb[0].mxu0
        %v2275 = vpop.f32.mrb[0].mxu0
        %v2276 = vadd.f32 %v2099, %v2275
        %v2277 = vpop.f32.mrb[0].mxu0
        %2278 = vmatprep.mubr.bf16.mxu0 %v1154
        %2279 = vmatmul.mubr.bf16.gmra.mrb[0].mxu0 %v1153
        %v2280 = vpop.f32.mrb[0].mxu0
        %v2281 = vadd.f32 %v2104, %v2280
        %v2282 = vpop.f32.mrb[0].mxu0
        %v2283 = vpop.f32.mrb[0].mxu0
        %v2284 = vadd.f32 %v2107, %v2283
        %v2285 = vpop.f32.mrb[0].mxu0
        %2286 = vmatprep.mubr.bf16.mxu0 %v1163
        %2287 = vmatmul.mubr.bf16.gmra.mrb[0].mxu0 %v1162
        %v2288 = vpop.f32.mrb[0].mxu0
        %v2289 = vadd.f32 %v2112, %v2288
        %v2290 = vpop.f32.mrb[0].mxu0
        %v2291 = vpop.f32.mrb[0].mxu0
        %v2292 = vadd.f32 %v2115, %v2291
        %v2293 = vpop.f32.mrb[0].mxu0
        %2294 = vmatprep.mubr.bf16.mxu0 %v1172
        %2295 = vmatmul.mubr.bf16.gmra.mrb[0].mxu0 %v1171
        %v2296 = vpop.f32.mrb[0].mxu0
        %v2297 = vadd.f32 %v2120, %v2296
        %v2298 = vpop.f32.mrb[0].mxu0
        %v2299 = vpop.f32.mrb[0].mxu0
        %v2300 = vadd.f32 %v2123, %v2299
        %v2301 = vpop.f32.mrb[0].mxu0
        %2302 = vmatprep.mubr.bf16.mxu0 %v1181
        %2303 = vmatmul.mubr.bf16.gmra.mrb[0].mxu0 %v1180
        %v2304 = vpop.f32.mrb[0].mxu0
        %v2305 = vadd.f32 %v2128, %v2304
        %v2306 = vpop.f32.mrb[0].mxu0
        %v2307 = vpop.f32.mrb[0].mxu0
        %v2308 = vadd.f32 %v2131, %v2307
        %v2309 = vpop.f32.mrb[0].mxu0
        %2310 = vmatprep.mubr.bf16.mxu0 %v1190
        %2311 = vmatmul.mubr.bf16.gmra.mrb[0].mxu0 %v1189
        %v2312 = vpop.f32.mrb[0].mxu0
        %v2313 = vadd.f32 %v2136, %v2312
        %v2314 = vpop.f32.mrb[0].mxu0
        %v2315 = vpop.f32.mrb[0].mxu0
        %v2316 = vadd.f32 %v2139, %v2315
        %v2317 = vpop.f32.mrb[0].mxu0
        %2318 = vmatprep.mubr.bf16.mxu0 %v1199
        %2319 = vmatmul.mubr.bf16.gmra.mrb[0].mxu0 %v1198
        %v2320 = vpop.f32.mrb[0].mxu0
        %v2321 = vadd.f32 %v2144, %v2320
        %v2322 = vpop.f32.mrb[0].mxu0
        %v2323 = vpop.f32.mrb[0].mxu0
        %v2324 = vadd.f32 %v2147, %v2323
        %v2325 = vpop.f32.mrb[0].mxu0
        %2326 = vmatprep.mubr.bf16.mxu0 %v1208
        %2327 = vmatmul.mubr.bf16.gmra.mrb[0].mxu0 %v1207
        %v2328 = vpop.f32.mrb[0].mxu0
        %v2329 = vadd.f32 %v2152, %v2328
        %v2330 = vpop.f32.mrb[0].mxu0
        %v2331 = vpop.f32.mrb[0].mxu0
        %v2332 = vadd.f32 %v2155, %v2331
        %v2333 = vpop.f32.mrb[0].mxu0
        %2334 = vmatprep.mubr.bf16.mxu0 %v1217
        %2335 = vmatmul.mubr.bf16.gmra.mrb[0].mxu0 %v1216
        %v2336 = vpop.f32.mrb[0].mxu0
        %v2337 = vadd.f32 %v2160, %v2336
        %v2338 = vpop.f32.mrb[0].mxu0
        %v2339 = vpop.f32.mrb[0].mxu0
        %v2340 = vadd.f32 %v2163, %v2339
        %v2341 = vpop.f32.mrb[0].mxu0
        %2342 = vmatprep.mubr.bf16.mxu0 %v1226
        %2343 = vmatmul.mubr.bf16.gmra.mrb[0].mxu0 %v1225
        %v2344 = vpop.f32.mrb[0].mxu0
        %v2345 = vadd.f32 %v2168, %v2344
        %v2346 = vpop.f32.mrb[0].mxu0
        %v2347 = vpop.f32.mrb[0].mxu0
        %v2348 = vadd.f32 %v2171, %v2347
        %v2349 = vpop.f32.mrb[0].mxu0
        %2350 = vmatprep.mubr.bf16.mxu0 %v1235
        %2351 = vmatmul.mubr.bf16.gmra.mrb[0].mxu0 %v1234
        %v2352 = vpop.f32.mrb[0].mxu0
        %v2353 = vadd.f32 %v2176, %v2352
        %v2354 = vpop.f32.mrb[0].mxu0
        %v2355 = vpop.f32.mrb[0].mxu0
        %v2356 = vadd.f32 %v2179, %v2355
        %v2357 = vpop.f32.mrb[0].mxu0
        %2358 = vmatprep.mubr.bf16.mxu0 %v1244
        %2359 = vmatmul.mubr.bf16.gmra.mrb[0].mxu0 %v1243
        %v2360 = vpop.f32.mrb[0].mxu0
        %v2361 = vadd.f32 %v2184, %v2360
        %v2362 = vpop.f32.mrb[0].mxu0
        %v2363 = vpop.f32.mrb[0].mxu0
        %v2364 = vadd.f32 %v2187, %v2363
        %v2365 = vpop.f32.mrb[0].mxu0
        %2366 = vmatprep.mubr.bf16.mxu0 %v1253
        %2367 = vmatmul.mubr.bf16.gmra.mrb[0].mxu0 %v1252
        %v2368 = vpop.f32.mrb[0].mxu0
        %v2369 = vadd.f32 %v2192, %v2368
        %v2370 = vpop.f32.mrb[0].mxu0
        %v2371 = vpop.f32.mrb[0].mxu0
        %v2372 = vadd.f32 %v2195, %v2371
        %v2373 = vpop.f32.mrb[0].mxu0
        %2374 = vmatprep.mubr.bf16.mxu0 %v1262
        %2375 = vmatmul.mubr.bf16.gmra.mrb[0].mxu0 %v1261
        %v2376 = vpop.f32.mrb[0].mxu0
        %v2377 = vadd.f32 %v2200, %v2376
        %v2378 = vpop.f32.mrb[0].mxu0
        %v2379 = vpop.f32.mrb[0].mxu0
        %v2380 = vadd.f32 %v2203, %v2379
        %v2381 = vpop.f32.mrb[0].mxu0
        %2382 = vmatprep.mubr.bf16.mxu0 %v1271
        %2383 = vmatmul.mubr.bf16.gmra.mrb[0].mxu0 %v1270
        %v2384 = vpop.f32.mrb[0].mxu0
        %v2385 = vadd.f32 %v2208, %v2384
        %v2386 = vpop.f32.mrb[0].mxu0
        %v2387 = vpop.f32.mrb[0].mxu0
        %v2388 = vadd.f32 %v2211, %v2387
        %v2389 = vpop.f32.mrb[0].mxu0
        %2390 = vmatprep.mubr.bf16.mxu0 %v1280
        %2391 = vmatmul.mubr.bf16.gmra.mrb[0].mxu0 %v1279
        %v2392 = vpop.f32.mrb[0].mxu0
        %v2393 = vadd.f32 %v2216, %v2392
        %v2394 = vpop.f32.mrb[0].mxu0
        %v2395 = vpop.f32.mrb[0].mxu0
        %v2396 = vadd.f32 %v2219, %v2395
        %v2397 = vpop.f32.mrb[0].mxu0
        %2398 = vmatprep.mubr.bf16.mxu0 %v1289
        %2399 = vmatmul.mubr.bf16.gmra.mrb[0].mxu0 %v1288
        %v2400 = vpop.f32.mrb[0].mxu0
        %v2401 = vadd.f32 %v2224, %v2400
        %v2402 = vpop.f32.mrb[0].mxu0
        %v2403 = vpop.f32.mrb[0].mxu0
        %v2404 = vadd.f32 %v2227, %v2403
        %v2405 = vpop.f32.mrb[0].mxu0
        %2406 = vdwg.mxu0
        %2407 = vmatprep.subr.bf16.mxu0 0
        %2408 = vmatpush1.bf16.msra.mxu0 %v1780
        %2409 = vmatprep.subr.bf16.mxu0 0
        %2410 = vmatpush1.bf16.msra.mxu0 %v1781
        %2411 = vmatprep.subr.bf16.mxu0 0
        %2412 = vmatpush1.bf16.msra.mxu0 %v1782
        %2413 = vmatprep.subr.bf16.mxu0 0
        %2414 = vmatpush1.bf16.msra.mxu0 %v1783
        %2415 = vmatprep.subr.bf16.mxu0 0
        %2416 = vmatpush1.bf16.msra.mxu0 %v1784
        %2417 = vmatprep.subr.bf16.mxu0 0
        %2418 = vmatpush1.bf16.msra.mxu0 %v1785
        %2419 = vmatprep.subr.bf16.mxu0 0
        %2420 = vmatpush1.bf16.msra.mxu0 %v1786
        %2421 = vmatprep.subr.bf16.mxu0 0
        %2422 = vmatpush1.bf16.msra.mxu0 %v1787
        %2423 = vmatprep.subr.bf16.mxu0 0
        %2424 = vmatpush1.bf16.msra.mxu0 %v1788
        %2425 = vmatprep.subr.bf16.mxu0 0
        %2426 = vmatpush1.bf16.msra.mxu0 %v1789
        %2427 = vmatprep.subr.bf16.mxu0 0
        %2428 = vmatpush1.bf16.msra.mxu0 %v1790
        %2429 = vmatprep.subr.bf16.mxu0 0
        %2430 = vmatpush1.bf16.msra.mxu0 %v1791
        %2431 = vmatprep.subr.bf16.mxu0 0
        %2432 = vmatpush1.bf16.msra.mxu0 %v1792
        %2433 = vmatprep.subr.bf16.mxu0 0
        %2434 = vmatpush1.bf16.msra.mxu0 %v1793
        %2435 = vmatprep.subr.bf16.mxu0 0
        %2436 = vmatpush1.bf16.msra.mxu0 %v1794
        %2437 = vmatprep.subr.bf16.mxu0 0
        %2438 = vmatpush1.bf16.msra.mxu0 %v1795
        %2439 = vmatprep.mubr.bf16.mxu0 %v1138
        %2440 = vmatmul.mubr.bf16.gmra.mrb[0].mxu0 %v1137
        %v2441 = vpop.f32.mrb[0].mxu0
        %v2442 = vadd.f32 %v2265, %v2441
        %v2443 = vpop.f32.mrb[0].mxu0
        %v2444 = vpop.f32.mrb[0].mxu0
        %v2445 = vadd.f32 %v2268, %v2444
        %v2446 = vpop.f32.mrb[0].mxu0
        %2447 = vmatprep.mubr.bf16.mxu0 %v1147
        %2448 = vmatmul.mubr.bf16.gmra.mrb[0].mxu0 %v1146
        %v2449 = vpop.f32.mrb[0].mxu0
        %v2450 = vadd.f32 %v2273, %v2449
        %v2451 = vpop.f32.mrb[0].mxu0
        %v2452 = vpop.f32.mrb[0].mxu0
        %v2453 = vadd.f32 %v2276, %v2452
        %v2454 = vpop.f32.mrb[0].mxu0
        %2455 = vmatprep.mubr.bf16.mxu0 %v1156
        %2456 = vmatmul.mubr.bf16.gmra.mrb[0].mxu0 %v1155
        %v2457 = vpop.f32.mrb[0].mxu0
        %v2458 = vadd.f32 %v2281, %v2457
        %v2459 = vpop.f32.mrb[0].mxu0
        %v2460 = vpop.f32.mrb[0].mxu0
        %v2461 = vadd.f32 %v2284, %v2460
        %v2462 = vpop.f32.mrb[0].mxu0
        %2463 = vmatprep.mubr.bf16.mxu0 %v1165
        %2464 = vmatmul.mubr.bf16.gmra.mrb[0].mxu0 %v1164
        %v2465 = vpop.f32.mrb[0].mxu0
        %v2466 = vadd.f32 %v2289, %v2465
        %v2467 = vpop.f32.mrb[0].mxu0
        %v2468 = vpop.f32.mrb[0].mxu0
        %v2469 = vadd.f32 %v2292, %v2468
        %v2470 = vpop.f32.mrb[0].mxu0
        %2471 = vmatprep.mubr.bf16.mxu0 %v1174
        %2472 = vmatmul.mubr.bf16.gmra.mrb[0].mxu0 %v1173
        %v2473 = vpop.f32.mrb[0].mxu0
        %v2474 = vadd.f32 %v2297, %v2473
        %v2475 = vpop.f32.mrb[0].mxu0
        %v2476 = vpop.f32.mrb[0].mxu0
        %v2477 = vadd.f32 %v2300, %v2476
        %v2478 = vpop.f32.mrb[0].mxu0
        %2479 = vmatprep.mubr.bf16.mxu0 %v1183
        %2480 = vmatmul.mubr.bf16.gmra.mrb[0].mxu0 %v1182
        %v2481 = vpop.f32.mrb[0].mxu0
        %v2482 = vadd.f32 %v2305, %v2481
        %v2483 = vpop.f32.mrb[0].mxu0
        %v2484 = vpop.f32.mrb[0].mxu0
        %v2485 = vadd.f32 %v2308, %v2484
        %v2486 = vpop.f32.mrb[0].mxu0
        %2487 = vmatprep.mubr.bf16.mxu0 %v1192
        %2488 = vmatmul.mubr.bf16.gmra.mrb[0].mxu0 %v1191
        %v2489 = vpop.f32.mrb[0].mxu0
        %v2490 = vadd.f32 %v2313, %v2489
        %v2491 = vpop.f32.mrb[0].mxu0
        %v2492 = vpop.f32.mrb[0].mxu0
        %v2493 = vadd.f32 %v2316, %v2492
        %v2494 = vpop.f32.mrb[0].mxu0
        %2495 = vmatprep.mubr.bf16.mxu0 %v1201
        %2496 = vmatmul.mubr.bf16.gmra.mrb[0].mxu0 %v1200
        %v2497 = vpop.f32.mrb[0].mxu0
        %v2498 = vadd.f32 %v2321, %v2497
        %v2499 = vpop.f32.mrb[0].mxu0
        %v2500 = vpop.f32.mrb[0].mxu0
        %v2501 = vadd.f32 %v2324, %v2500
        %v2502 = vpop.f32.mrb[0].mxu0
        %2503 = vmatprep.mubr.bf16.mxu0 %v1210
        %2504 = vmatmul.mubr.bf16.gmra.mrb[0].mxu0 %v1209
        %v2505 = vpop.f32.mrb[0].mxu0
        %v2506 = vadd.f32 %v2329, %v2505
        %v2507 = vpop.f32.mrb[0].mxu0
        %v2508 = vpop.f32.mrb[0].mxu0
        %v2509 = vadd.f32 %v2332, %v2508
        %v2510 = vpop.f32.mrb[0].mxu0
        %2511 = vmatprep.mubr.bf16.mxu0 %v1219
        %2512 = vmatmul.mubr.bf16.gmra.mrb[0].mxu0 %v1218
        %v2513 = vpop.f32.mrb[0].mxu0
        %v2514 = vadd.f32 %v2337, %v2513
        %v2515 = vpop.f32.mrb[0].mxu0
        %v2516 = vpop.f32.mrb[0].mxu0
        %v2517 = vadd.f32 %v2340, %v2516
        %v2518 = vpop.f32.mrb[0].mxu0
        %2519 = vmatprep.mubr.bf16.mxu0 %v1228
        %2520 = vmatmul.mubr.bf16.gmra.mrb[0].mxu0 %v1227
        %v2521 = vpop.f32.mrb[0].mxu0
        %v2522 = vadd.f32 %v2345, %v2521
        %v2523 = vpop.f32.mrb[0].mxu0
        %v2524 = vpop.f32.mrb[0].mxu0
        %v2525 = vadd.f32 %v2348, %v2524
        %v2526 = vpop.f32.mrb[0].mxu0
        %2527 = vmatprep.mubr.bf16.mxu0 %v1237
        %2528 = vmatmul.mubr.bf16.gmra.mrb[0].mxu0 %v1236
        %v2529 = vpop.f32.mrb[0].mxu0
        %v2530 = vadd.f32 %v2353, %v2529
        %v2531 = vpop.f32.mrb[0].mxu0
        %v2532 = vpop.f32.mrb[0].mxu0
        %v2533 = vadd.f32 %v2356, %v2532
        %v2534 = vpop.f32.mrb[0].mxu0
        %2535 = vmatprep.mubr.bf16.mxu0 %v1246
        %2536 = vmatmul.mubr.bf16.gmra.mrb[0].mxu0 %v1245
        %v2537 = vpop.f32.mrb[0].mxu0
        %v2538 = vadd.f32 %v2361, %v2537
        %v2539 = vpop.f32.mrb[0].mxu0
        %v2540 = vpop.f32.mrb[0].mxu0
        %v2541 = vadd.f32 %v2364, %v2540
        %v2542 = vpop.f32.mrb[0].mxu0
        %2543 = vmatprep.mubr.bf16.mxu0 %v1255
        %2544 = vmatmul.mubr.bf16.gmra.mrb[0].mxu0 %v1254
        %v2545 = vpop.f32.mrb[0].mxu0
        %v2546 = vadd.f32 %v2369, %v2545
        %v2547 = vpop.f32.mrb[0].mxu0
        %v2548 = vpop.f32.mrb[0].mxu0
        %v2549 = vadd.f32 %v2372, %v2548
        %v2550 = vpop.f32.mrb[0].mxu0
        %2551 = vmatprep.mubr.bf16.mxu0 %v1264
        %2552 = vmatmul.mubr.bf16.gmra.mrb[0].mxu0 %v1263
        %v2553 = vpop.f32.mrb[0].mxu0
        %v2554 = vadd.f32 %v2377, %v2553
        %v2555 = vpop.f32.mrb[0].mxu0
        %v2556 = vpop.f32.mrb[0].mxu0
        %v2557 = vadd.f32 %v2380, %v2556
        %v2558 = vpop.f32.mrb[0].mxu0
        %2559 = vmatprep.mubr.bf16.mxu0 %v1273
        %2560 = vmatmul.mubr.bf16.gmra.mrb[0].mxu0 %v1272
        %v2561 = vpop.f32.mrb[0].mxu0
        %v2562 = vadd.f32 %v2385, %v2561
        %v2563 = vpop.f32.mrb[0].mxu0
        %v2564 = vpop.f32.mrb[0].mxu0
        %v2565 = vadd.f32 %v2388, %v2564
        %v2566 = vpop.f32.mrb[0].mxu0
        %2567 = vmatprep.mubr.bf16.mxu0 %v1282
        %2568 = vmatmul.mubr.bf16.gmra.mrb[0].mxu0 %v1281
        %v2569 = vpop.f32.mrb[0].mxu0
        %v2570 = vadd.f32 %v2393, %v2569
        %v2571 = vpop.f32.mrb[0].mxu0
        %v2572 = vpop.f32.mrb[0].mxu0
        %v2573 = vadd.f32 %v2396, %v2572
        %v2574 = vpop.f32.mrb[0].mxu0
        %2575 = vmatprep.mubr.bf16.mxu0 %v1291
        %2576 = vmatmul.mubr.bf16.gmra.mrb[0].mxu0 %v1290
        %v2577 = vpop.f32.mrb[0].mxu0
        %v2578 = vadd.f32 %v2401, %v2577
        %v2579 = vpop.f32.mrb[0].mxu0
        %v2580 = vpop.f32.mrb[0].mxu0
        %v2581 = vadd.f32 %v2404, %v2580
        %v2582 = vpop.f32.mrb[0].mxu0
        %2583 = vdwg.mxu0
        %2584 = vmatprep.subr.bf16.mxu0 0
        %2585 = vmatpush1.bf16.msra.mxu0 %v1796
        %2586 = vmatprep.subr.bf16.mxu0 0
        %2587 = vmatpush1.bf16.msra.mxu0 %v1797
        %2588 = vmatprep.subr.bf16.mxu0 0
        %2589 = vmatpush1.bf16.msra.mxu0 %v1798
        %2590 = vmatprep.subr.bf16.mxu0 0
        %2591 = vmatpush1.bf16.msra.mxu0 %v1799
        %2592 = vmatprep.subr.bf16.mxu0 0
        %2593 = vmatpush1.bf16.msra.mxu0 %v1800
        %2594 = vmatprep.subr.bf16.mxu0 0
        %2595 = vmatpush1.bf16.msra.mxu0 %v1801
        %2596 = vmatprep.subr.bf16.mxu0 0
        %2597 = vmatpush1.bf16.msra.mxu0 %v1802
        %2598 = vmatprep.subr.bf16.mxu0 0
        %2599 = vmatpush1.bf16.msra.mxu0 %v1803
        %2600 = vmatprep.subr.bf16.mxu0 0
        %2601 = vmatpush1.bf16.msra.mxu0 0
        %2602 = vmatprep.subr.bf16.mxu0 0
        %2603 = vmatpush1.bf16.msra.mxu0 0
        %2604 = vmatprep.subr.bf16.mxu0 0
        %2605 = vmatpush1.bf16.msra.mxu0 0
        %2606 = vmatprep.subr.bf16.mxu0 0
        %2607 = vmatpush1.bf16.msra.mxu0 0
        %2608 = vmatprep.subr.bf16.mxu0 0
        %2609 = vmatpush1.bf16.msra.mxu0 0
        %2610 = vmatprep.subr.bf16.mxu0 0
        %2611 = vmatpush1.bf16.msra.mxu0 0
        %2612 = vmatprep.subr.bf16.mxu0 0
        %2613 = vmatpush1.bf16.msra.mxu0 0
        %2614 = vmatprep.subr.bf16.mxu0 0
        %2615 = vmatpush1.bf16.msra.mxu0 0
        %2616 = vmatprep.mubr.bf16.mxu0 0
        %2617 = vmatmul.mubr.bf16.gmra.mrb[0].mxu0 %v1139
        %v2618 = vpop.f32.mrb[0].mxu0
        %v2619 = vadd.f32 %v2442, %v2618
        %v2620 = vpop.f32.mrb[0].mxu0
        %v2621 = vpop.f32.mrb[0].mxu0
        %v2622 = vadd.f32 %v2445, %v2621
        %v2623 = vpop.f32.mrb[0].mxu0
        %2624 = vmatprep.mubr.bf16.mxu0 0
        %2625 = vmatmul.mubr.bf16.gmra.mrb[0].mxu0 %v1148
        %v2626 = vpop.f32.mrb[0].mxu0
        %v2627 = vadd.f32 %v2450, %v2626
        %v2628 = vpop.f32.mrb[0].mxu0
        %v2629 = vpop.f32.mrb[0].mxu0
        %v2630 = vadd.f32 %v2453, %v2629
        %v2631 = vpop.f32.mrb[0].mxu0
        %2632 = vmatprep.mubr.bf16.mxu0 0
        %2633 = vmatmul.mubr.bf16.gmra.mrb[0].mxu0 %v1157
        %v2634 = vpop.f32.mrb[0].mxu0
        %v2635 = vadd.f32 %v2458, %v2634
        %v2636 = vpop.f32.mrb[0].mxu0
        %v2637 = vpop.f32.mrb[0].mxu0
        %v2638 = vadd.f32 %v2461, %v2637
        %v2639 = vpop.f32.mrb[0].mxu0
        %2640 = vmatprep.mubr.bf16.mxu0 0
        %2641 = vmatmul.mubr.bf16.gmra.mrb[0].mxu0 %v1166
        %v2642 = vpop.f32.mrb[0].mxu0
        %v2643 = vadd.f32 %v2466, %v2642
        %v2644 = vpop.f32.mrb[0].mxu0
        %v2645 = vpop.f32.mrb[0].mxu0
        %v2646 = vadd.f32 %v2469, %v2645
        %v2647 = vpop.f32.mrb[0].mxu0
        %2648 = vmatprep.mubr.bf16.mxu0 0
        %2649 = vmatmul.mubr.bf16.gmra.mrb[0].mxu0 %v1175
        %v2650 = vpop.f32.mrb[0].mxu0
        %v2651 = vadd.f32 %v2474, %v2650
        %v2652 = vpop.f32.mrb[0].mxu0
        %v2653 = vpop.f32.mrb[0].mxu0
        %v2654 = vadd.f32 %v2477, %v2653
        %v2655 = vpop.f32.mrb[0].mxu0
        %2656 = vmatprep.mubr.bf16.mxu0 0
        %2657 = vmatmul.mubr.bf16.gmra.mrb[0].mxu0 %v1184
        %v2658 = vpop.f32.mrb[0].mxu0
        %v2659 = vadd.f32 %v2482, %v2658
        %v2660 = vpop.f32.mrb[0].mxu0
        %v2661 = vpop.f32.mrb[0].mxu0
        %v2662 = vadd.f32 %v2485, %v2661
        %v2663 = vpop.f32.mrb[0].mxu0
        %2664 = vmatprep.mubr.bf16.mxu0 0
        %2665 = vmatmul.mubr.bf16.gmra.mrb[0].mxu0 %v1193
        %v2666 = vpop.f32.mrb[0].mxu0
        %v2667 = vadd.f32 %v2490, %v2666
        %v2668 = vpop.f32.mrb[0].mxu0
        %v2669 = vpop.f32.mrb[0].mxu0
        %v2670 = vadd.f32 %v2493, %v2669
        %v2671 = vpop.f32.mrb[0].mxu0
        %2672 = vmatprep.mubr.bf16.mxu0 0
        %2673 = vmatmul.mubr.bf16.gmra.mrb[0].mxu0 %v1202
        %v2674 = vpop.f32.mrb[0].mxu0
        %v2675 = vadd.f32 %v2498, %v2674
        %v2676 = vpop.f32.mrb[0].mxu0
        %v2677 = vpop.f32.mrb[0].mxu0
        %v2678 = vadd.f32 %v2501, %v2677
        %v2679 = vpop.f32.mrb[0].mxu0
        %2680 = vmatprep.mubr.bf16.mxu0 0
        %2681 = vmatmul.mubr.bf16.gmra.mrb[0].mxu0 %v1211
        %v2682 = vpop.f32.mrb[0].mxu0
        %v2683 = vadd.f32 %v2506, %v2682
        %v2684 = vpop.f32.mrb[0].mxu0
        %v2685 = vpop.f32.mrb[0].mxu0
        %v2686 = vadd.f32 %v2509, %v2685
        %v2687 = vpop.f32.mrb[0].mxu0
        %2688 = vmatprep.mubr.bf16.mxu0 0
        %2689 = vmatmul.mubr.bf16.gmra.mrb[0].mxu0 %v1220
        %v2690 = vpop.f32.mrb[0].mxu0
        %v2691 = vadd.f32 %v2514, %v2690
        %v2692 = vpop.f32.mrb[0].mxu0
        %v2693 = vpop.f32.mrb[0].mxu0
        %v2694 = vadd.f32 %v2517, %v2693
        %v2695 = vpop.f32.mrb[0].mxu0
        %2696 = vmatprep.mubr.bf16.mxu0 0
        %2697 = vmatmul.mubr.bf16.gmra.mrb[0].mxu0 %v1229
        %v2698 = vpop.f32.mrb[0].mxu0
        %v2699 = vadd.f32 %v2522, %v2698
        %v2700 = vpop.f32.mrb[0].mxu0
        %v2701 = vpop.f32.mrb[0].mxu0
        %v2702 = vadd.f32 %v2525, %v2701
        %v2703 = vpop.f32.mrb[0].mxu0
        %2704 = vmatprep.mubr.bf16.mxu0 0
        %2705 = vmatmul.mubr.bf16.gmra.mrb[0].mxu0 %v1238
        %v2706 = vpop.f32.mrb[0].mxu0
        %v2707 = vadd.f32 %v2530, %v2706
        %v2708 = vpop.f32.mrb[0].mxu0
        %v2709 = vpop.f32.mrb[0].mxu0
        %v2710 = vadd.f32 %v2533, %v2709
        %v2711 = vpop.f32.mrb[0].mxu0
        %2712 = vmatprep.mubr.bf16.mxu0 0
        %2713 = vmatmul.mubr.bf16.gmra.mrb[0].mxu0 %v1247
        %v2714 = vpop.f32.mrb[0].mxu0
        %v2715 = vadd.f32 %v2538, %v2714
        %v2716 = vpop.f32.mrb[0].mxu0
        %v2717 = vpop.f32.mrb[0].mxu0
        %v2718 = vadd.f32 %v2541, %v2717
        %v2719 = vpop.f32.mrb[0].mxu0
        %2720 = vmatprep.mubr.bf16.mxu0 0
        %2721 = vmatmul.mubr.bf16.gmra.mrb[0].mxu0 %v1256
        %v2722 = vpop.f32.mrb[0].mxu0
        %v2723 = vadd.f32 %v2546, %v2722
        %v2724 = vpop.f32.mrb[0].mxu0
        %v2725 = vpop.f32.mrb[0].mxu0
        %v2726 = vadd.f32 %v2549, %v2725
        %v2727 = vpop.f32.mrb[0].mxu0
        %2728 = vmatprep.mubr.bf16.mxu0 0
        %2729 = vmatmul.mubr.bf16.gmra.mrb[0].mxu0 %v1265
        %v2730 = vpop.f32.mrb[0].mxu0
        %v2731 = vadd.f32 %v2554, %v2730
        %v2732 = vpop.f32.mrb[0].mxu0
        %v2733 = vpop.f32.mrb[0].mxu0
        %v2734 = vadd.f32 %v2557, %v2733
        %v2735 = vpop.f32.mrb[0].mxu0
        %2736 = vmatprep.mubr.bf16.mxu0 0
        %2737 = vmatmul.mubr.bf16.gmra.mrb[0].mxu0 %v1274
        %v2738 = vpop.f32.mrb[0].mxu0
        %v2739 = vadd.f32 %v2562, %v2738
        %v2740 = vpop.f32.mrb[0].mxu0
        %v2741 = vpop.f32.mrb[0].mxu0
        %v2742 = vadd.f32 %v2565, %v2741
        %v2743 = vpop.f32.mrb[0].mxu0
        %2744 = vmatprep.mubr.bf16.mxu0 0
        %2745 = vmatmul.mubr.bf16.gmra.mrb[0].mxu0 %v1283
        %v2746 = vpop.f32.mrb[0].mxu0
        %v2747 = vadd.f32 %v2570, %v2746
        %v2748 = vpop.f32.mrb[0].mxu0
        %v2749 = vpop.f32.mrb[0].mxu0
        %v2750 = vadd.f32 %v2573, %v2749
        %v2751 = vpop.f32.mrb[0].mxu0
        %2752 = vmatprep.mubr.bf16.mxu0 0
        %2753 = vmatmul.mubr.bf16.gmra.mrb[0].mxu0 %v1292
        %v2754 = vpop.f32.mrb[0].mxu0
        %v2755 = vadd.f32 %v2578, %v2754
        %v2756 = vpop.f32.mrb[0].mxu0
        %v2757 = vpop.f32.mrb[0].mxu0
        %v2758 = vadd.f32 %v2581, %v2757
        %v2759 = vpop.f32.mrb[0].mxu0
        %2760 = vdwg.mxu0
        %v2761 = vld [vmem:[%s5] sm:$0xff]
        %v2762 = vld [vmem:[%s5 + $0x8] sm:$0xff]
        %v2763 = vld [vmem:[%s5 + $0x10] sm:$0xff]
        %v2764 = vld [vmem:[%s5 + $0x18] sm:$0xff]
        %v2765 = vld [vmem:[%s5 + $0x20] sm:$0xff]
        %v2766 = vld [vmem:[%s5 + $0x28] sm:$0xff]
        %v2767 = vld [vmem:[%s5 + $0x30] sm:$0xff]
        %v2768 = vld [vmem:[%s5 + $0x38] sm:$0xff]
        %v2769 = vld [vmem:[%s5 + $0x40] sm:$0xff]
        %v2770 = vld [vmem:[%s5 + $0x48] sm:$0xff]
        %v2771 = vld [vmem:[%s5 + $0x50] sm:$0xff]
        %v2772 = vld [vmem:[%s5 + $0x58] sm:$0xff]
        %v2773 = vld [vmem:[%s5 + $0x60] sm:$0xff]
        %v2774 = vld [vmem:[%s5 + $0x68] sm:$0xff]
        %v2775 = vld [vmem:[%s5 + $0x70] sm:$0xff]
        %v2776 = vld [vmem:[%s5 + $0x78] sm:$0xff]
        %v2777 = vld [vmem:[%s5 + $0x80] sm:$0xff]
        %v2778 = vld [vmem:[%s5 + $0x88] sm:$0xff]
        %v2779 = vld [vmem:[%s5 + $0x90] sm:$0xff]
        %v2780 = vld [vmem:[%s5 + $0x98] sm:$0xff]
        %v2781 = vld [vmem:[%s5 + $0xa0] sm:$0xff]
        %v2782 = vld [vmem:[%s5 + $0xa8] sm:$0xff]
        %v2783 = vld [vmem:[%s5 + $0xb0] sm:$0xff]
        %v2784 = vld [vmem:[%s5 + $0xb8] sm:$0xff]
        %v2785 = vld [vmem:[%s5 + $0xc0] sm:$0xff]
        %v2786 = vld [vmem:[%s5 + $0xc8] sm:$0xff]
        %v2787 = vld [vmem:[%s5 + $0xd0] sm:$0xff]
        %v2788 = vld [vmem:[%s5 + $0xd8] sm:$0xff]
        %v2789 = vld [vmem:[%s5 + $0xe0] sm:$0xff]
        %v2790 = vld [vmem:[%s5 + $0xe8] sm:$0xff]
        %v2791 = vld [vmem:[%s5 + $0xf0] sm:$0xff]
        %v2792 = vld [vmem:[%s5 + $0xf8] sm:$0xff]
        %v2793 = vld [vmem:[%s5 + $0x100] sm:$0xff]
        %v2794 = vld [vmem:[%s5 + $0x108] sm:$0xff]
        %v2795 = vld [vmem:[%s5 + $0x110] sm:$0xff]
        %v2796 = vld [vmem:[%s5 + $0x118] sm:$0xff]
        %2798 = vset.pattern.permute.xlu0 0
        %2799 = vperm.xlu0 %2798, %v2761
        %v2800 = vpop.permute.xlu0 %2799
        %2803 = vset.pattern.permute.xlu0 0
        %2804 = vperm.xlu0 %2803, %v2762
        %v2805 = vpop.permute.xlu0 %2804
        %2808 = vset.pattern.permute.xlu0 0
        %2809 = vperm.xlu0 %2808, %v2763
        %v2810 = vpop.permute.xlu0 %2809
        %2813 = vset.pattern.permute.xlu0 0
        %2814 = vperm.xlu0 %2813, %v2764
        %v2815 = vpop.permute.xlu0 %2814
        %2818 = vset.pattern.permute.xlu0 0
        %2819 = vperm.xlu0 %2818, %v2765
        %v2820 = vpop.permute.xlu0 %2819
        %2823 = vset.pattern.permute.xlu0 0
        %2824 = vperm.xlu0 %2823, %v2766
        %v2825 = vpop.permute.xlu0 %2824
        %2828 = vset.pattern.permute.xlu0 0
        %2829 = vperm.xlu0 %2828, %v2767
        %v2830 = vpop.permute.xlu0 %2829
        %2833 = vset.pattern.permute.xlu0 0
        %2834 = vperm.xlu0 %2833, %v2768
        %v2835 = vpop.permute.xlu0 %2834
        %2838 = vset.pattern.permute.xlu0 0
        %2839 = vperm.xlu0 %2838, %v2769
        %v2840 = vpop.permute.xlu0 %2839
        %2843 = vset.pattern.permute.xlu0 0
        %2844 = vperm.xlu0 %2843, %v2770
        %v2845 = vpop.permute.xlu0 %2844
        %2848 = vset.pattern.permute.xlu0 0
        %2849 = vperm.xlu0 %2848, %v2771
        %v2850 = vpop.permute.xlu0 %2849
        %2853 = vset.pattern.permute.xlu0 0
        %2854 = vperm.xlu0 %2853, %v2772
        %v2855 = vpop.permute.xlu0 %2854
        %2858 = vset.pattern.permute.xlu0 0
        %2859 = vperm.xlu0 %2858, %v2773
        %v2860 = vpop.permute.xlu0 %2859
        %2863 = vset.pattern.permute.xlu0 0
        %2864 = vperm.xlu0 %2863, %v2774
        %v2865 = vpop.permute.xlu0 %2864
        %2868 = vset.pattern.permute.xlu0 0
        %2869 = vperm.xlu0 %2868, %v2775
        %v2870 = vpop.permute.xlu0 %2869
        %2873 = vset.pattern.permute.xlu0 0
        %2874 = vperm.xlu0 %2873, %v2776
        %v2875 = vpop.permute.xlu0 %2874
        %2878 = vset.pattern.permute.xlu0 0
        %2879 = vperm.xlu0 %2878, %v2777
        %v2880 = vpop.permute.xlu0 %2879
        %2883 = vset.pattern.permute.xlu0 0
        %2884 = vperm.xlu0 %2883, %v2778
        %v2885 = vpop.permute.xlu0 %2884
        %2888 = vset.pattern.permute.xlu0 0
        %2889 = vperm.xlu0 %2888, %v2779
        %v2890 = vpop.permute.xlu0 %2889
        %2893 = vset.pattern.permute.xlu0 0
        %2894 = vperm.xlu0 %2893, %v2780
        %v2895 = vpop.permute.xlu0 %2894
        %2898 = vset.pattern.permute.xlu0 0
        %2899 = vperm.xlu0 %2898, %v2781
        %v2900 = vpop.permute.xlu0 %2899
        %2903 = vset.pattern.permute.xlu0 0
        %2904 = vperm.xlu0 %2903, %v2782
        %v2905 = vpop.permute.xlu0 %2904
        %2908 = vset.pattern.permute.xlu0 0
        %2909 = vperm.xlu0 %2908, %v2783
        %v2910 = vpop.permute.xlu0 %2909
        %2913 = vset.pattern.permute.xlu0 0
        %2914 = vperm.xlu0 %2913, %v2784
        %v2915 = vpop.permute.xlu0 %2914
        %2918 = vset.pattern.permute.xlu0 0
        %2919 = vperm.xlu0 %2918, %v2785
        %v2920 = vpop.permute.xlu0 %2919
        %2923 = vset.pattern.permute.xlu0 0
        %2924 = vperm.xlu0 %2923, %v2786
        %v2925 = vpop.permute.xlu0 %2924
        %2928 = vset.pattern.permute.xlu0 0
        %2929 = vperm.xlu0 %2928, %v2787
        %v2930 = vpop.permute.xlu0 %2929
        %2933 = vset.pattern.permute.xlu0 0
        %2934 = vperm.xlu0 %2933, %v2788
        %v2935 = vpop.permute.xlu0 %2934
        %2938 = vset.pattern.permute.xlu0 0
        %2939 = vperm.xlu0 %2938, %v2789
        %v2940 = vpop.permute.xlu0 %2939
        %2943 = vset.pattern.permute.xlu0 0
        %2944 = vperm.xlu0 %2943, %v2790
        %v2945 = vpop.permute.xlu0 %2944
        %2948 = vset.pattern.permute.xlu0 0
        %2949 = vperm.xlu0 %2948, %v2791
        %v2950 = vpop.permute.xlu0 %2949
        %2953 = vset.pattern.permute.xlu0 0
        %2954 = vperm.xlu0 %2953, %v2792
        %v2955 = vpop.permute.xlu0 %2954
        %2958 = vset.pattern.permute.xlu0 0
        %2959 = vperm.xlu0 %2958, %v2793
        %v2960 = vpop.permute.xlu0 %2959
        %2963 = vset.pattern.permute.xlu0 0
        %2964 = vperm.xlu0 %2963, %v2794
        %v2965 = vpop.permute.xlu0 %2964
        %2968 = vset.pattern.permute.xlu0 0
        %2969 = vperm.xlu0 %2968, %v2795
        %v2970 = vpop.permute.xlu0 %2969
        %2973 = vset.pattern.permute.xlu0 0
        %2974 = vperm.xlu0 %2973, %v2796
        %v2975 = vpop.permute.xlu0 %2974
        %v2977 = vmul.f32 %v2619, %v2800
        %v2978 = vmul.f32 %v2622, %v2805
        %v2979 = vmul.f32 %v2627, %v2810
        %v2980 = vmul.f32 %v2630, %v2815
        %v2981 = vmul.f32 %v2635, %v2820
        %v2982 = vmul.f32 %v2638, %v2825
        %v2983 = vmul.f32 %v2643, %v2830
        %v2984 = vmul.f32 %v2646, %v2835
        %v2985 = vmul.f32 %v2651, %v2840
        %v2986 = vmul.f32 %v2654, %v2845
        %v2987 = vmul.f32 %v2659, %v2850
        %v2988 = vmul.f32 %v2662, %v2855
        %v2989 = vmul.f32 %v2667, %v2860
        %v2990 = vmul.f32 %v2670, %v2865
        %v2991 = vmul.f32 %v2675, %v2870
        %v2992 = vmul.f32 %v2678, %v2875
        %v2993 = vmul.f32 %v2683, %v2880
        %v2994 = vmul.f32 %v2686, %v2885
        %v2995 = vmul.f32 %v2691, %v2890
        %v2996 = vmul.f32 %v2694, %v2895
        %v2997 = vmul.f32 %v2699, %v2900
        %v2998 = vmul.f32 %v2702, %v2905
        %v2999 = vmul.f32 %v2707, %v2910
        %v3000 = vmul.f32 %v2710, %v2915
        %v3001 = vmul.f32 %v2715, %v2920
        %v3002 = vmul.f32 %v2718, %v2925
        %v3003 = vmul.f32 %v2723, %v2930
        %v3004 = vmul.f32 %v2726, %v2935
        %v3005 = vmul.f32 %v2731, %v2940
        %v3006 = vmul.f32 %v2734, %v2945
        %v3007 = vmul.f32 %v2739, %v2950
        %v3008 = vmul.f32 %v2742, %v2955
        %v3009 = vmul.f32 %v2747, %v2960
        %v3010 = vmul.f32 %v2750, %v2965
        %v3011 = vmul.f32 %v2755, %v2970
        %v3012 = vmul.f32 %v2758, %v2975
        %v3013 = vadd.f32 %v2977, %v2978
        %v3014 = vadd.f32 %v3013, %v2979
        %v3015 = vadd.f32 %v3014, %v2980
        %v3016 = vadd.f32 %v3015, %v2981
        %v3017 = vadd.f32 %v3016, %v2982
        %v3018 = vadd.f32 %v3017, %v2983
        %v3019 = vadd.f32 %v3018, %v2984
        %v3020 = vadd.f32 %v3019, %v2985
        %v3021 = vadd.f32 %v3020, %v2986
        %v3022 = vadd.f32 %v3021, %v2987
        %v3023 = vadd.f32 %v3022, %v2988
        %v3024 = vadd.f32 %v3023, %v2989
        %v3025 = vadd.f32 %v3024, %v2990
        %v3026 = vadd.f32 %v3025, %v2991
        %v3027 = vadd.f32 %v3026, %v2992
        %v3028 = vadd.f32 %v3027, %v2993
        %v3029 = vadd.f32 %v3028, %v2994
        %v3030 = vadd.f32 %v3029, %v2995
        %v3031 = vadd.f32 %v3030, %v2996
        %v3032 = vadd.f32 %v3031, %v2997
        %v3033 = vadd.f32 %v3032, %v2998
        %v3034 = vadd.f32 %v3033, %v2999
        %v3035 = vadd.f32 %v3034, %v3000
        %v3036 = vadd.f32 %v3035, %v3001
        %v3037 = vadd.f32 %v3036, %v3002
        %v3038 = vadd.f32 %v3037, %v3003
        %v3039 = vadd.f32 %v3038, %v3004
        %v3040 = vadd.f32 %v3039, %v3005
        %v3041 = vadd.f32 %v3040, %v3006
        %v3042 = vadd.f32 %v3041, %v3007
        %v3043 = vadd.f32 %v3042, %v3008
        %v3044 = vadd.f32 %v3043, %v3009
        %v3045 = vadd.f32 %v3044, %v3010
        %v3046 = vadd.f32 %v3045, %v3011
        %v3047 = vadd.f32 %v3046, %v3012
        %v3048 = vrot.slane %v3047, 4
        %v3049 = vadd.f32 %v3047, %v3048
        %v3050 = vrot.slane %v3049, 2
        %v3051 = vadd.f32 %v3049, %v3050
        %v3052 = vrot.slane %v3051, 1
        %v3053 = vadd.f32 %v3051, %v3052
        %v3054 = vmul.f32 %v3053, 0.00390625
        %v3055 = vmul.f32 %v2977, %v2977
        %v3056 = vmul.f32 %v2978, %v2978
        %v3057 = vmul.f32 %v2979, %v2979
        %v3058 = vmul.f32 %v2980, %v2980
        %v3059 = vmul.f32 %v2981, %v2981
        %v3060 = vmul.f32 %v2982, %v2982
        %v3061 = vmul.f32 %v2983, %v2983
        %v3062 = vmul.f32 %v2984, %v2984
        %v3063 = vmul.f32 %v2985, %v2985
        %v3064 = vmul.f32 %v2986, %v2986
        %v3065 = vmul.f32 %v2987, %v2987
        %v3066 = vmul.f32 %v2988, %v2988
        %v3067 = vmul.f32 %v2989, %v2989
        %v3068 = vmul.f32 %v2990, %v2990
        %v3069 = vmul.f32 %v2991, %v2991
        %v3070 = vmul.f32 %v2992, %v2992
        %v3071 = vmul.f32 %v2993, %v2993
        %v3072 = vmul.f32 %v2994, %v2994
        %v3073 = vmul.f32 %v2995, %v2995
        %v3074 = vmul.f32 %v2996, %v2996
        %v3075 = vmul.f32 %v2997, %v2997
        %v3076 = vmul.f32 %v2998, %v2998
        %v3077 = vmul.f32 %v2999, %v2999
        %v3078 = vmul.f32 %v3000, %v3000
        %v3079 = vmul.f32 %v3001, %v3001
        %v3080 = vmul.f32 %v3002, %v3002
        %v3081 = vmul.f32 %v3003, %v3003
        %v3082 = vmul.f32 %v3004, %v3004
        %v3083 = vmul.f32 %v3005, %v3005
        %v3084 = vmul.f32 %v3006, %v3006
        %v3085 = vmul.f32 %v3007, %v3007
        %v3086 = vmul.f32 %v3008, %v3008
        %v3087 = vmul.f32 %v3009, %v3009
        %v3088 = vmul.f32 %v3010, %v3010
        %v3089 = vmul.f32 %v3011, %v3011
        %v3090 = vmul.f32 %v3012, %v3012
        %v3091 = vadd.f32 %v3055, %v3056
        %v3092 = vadd.f32 %v3091, %v3057
        %v3093 = vadd.f32 %v3092, %v3058
        %v3094 = vadd.f32 %v3093, %v3059
        %v3095 = vadd.f32 %v3094, %v3060
        %v3096 = vadd.f32 %v3095, %v3061
        %v3097 = vadd.f32 %v3096, %v3062
        %v3098 = vadd.f32 %v3097, %v3063
        %v3099 = vadd.f32 %v3098, %v3064
        %v3100 = vadd.f32 %v3099, %v3065
        %v3101 = vadd.f32 %v3100, %v3066
        %v3102 = vadd.f32 %v3101, %v3067
        %v3103 = vadd.f32 %v3102, %v3068
        %v3104 = vadd.f32 %v3103, %v3069
        %v3105 = vadd.f32 %v3104, %v3070
        %v3106 = vadd.f32 %v3105, %v3071
        %v3107 = vadd.f32 %v3106, %v3072
        %v3108 = vadd.f32 %v3107, %v3073
        %v3109 = vadd.f32 %v3108, %v3074
        %v3110 = vadd.f32 %v3109, %v3075
        %v3111 = vadd.f32 %v3110, %v3076
        %v3112 = vadd.f32 %v3111, %v3077
        %v3113 = vadd.f32 %v3112, %v3078
        %v3114 = vadd.f32 %v3113, %v3079
        %v3115 = vadd.f32 %v3114, %v3080
        %v3116 = vadd.f32 %v3115, %v3081
        %v3117 = vadd.f32 %v3116, %v3082
        %v3118 = vadd.f32 %v3117, %v3083
        %v3119 = vadd.f32 %v3118, %v3084
        %v3120 = vadd.f32 %v3119, %v3085
        %v3121 = vadd.f32 %v3120, %v3086
        %v3122 = vadd.f32 %v3121, %v3087
        %v3123 = vadd.f32 %v3122, %v3088
        %v3124 = vadd.f32 %v3123, %v3089
        %v3125 = vadd.f32 %v3124, %v3090
        %v3126 = vrot.slane %v3125, 4
        %v3127 = vadd.f32 %v3125, %v3126
        %v3128 = vrot.slane %v3127, 2
        %v3129 = vadd.f32 %v3127, %v3128
        %v3130 = vrot.slane %v3129, 1
        %v3131 = vadd.f32 %v3129, %v3130
        %v3132 = vmul.f32 %v3131, 0.00390625
        %v3133 = vmul.f32 %v3054, %v3054
        %v3134 = vsub.f32 %v3132, %v3133
        %v3135 = vmax.f32 %v3134, 0.0
        %v3136 = vld [vmem:[%s324] sm:$0x1]
        %v3137 = vadd.f32 %v3135, 1e-05
        %v3138 = vrsqrt.pop %v3137
        %v3139 = vmul.f32 %v3136, %v3138
        %v3140 = vld [vmem:[%s327] sm:$0x1]
        %v3141 = vmul.f32 %v3054, %v3139
        %v3142 = vsub.f32 %v3140, %v3141
        %v3144 = vlaneseq
        %v3145 = vshrl.u32 %v3144, 7
        %v3146 = vsub.s32 0, %v3145
        %v3147 = vrot.slane %v3139, %v3146
        %v3149 = vmul.f32 %v2619, %v3147
        %v3150 = vmul.f32 %v2622, %v3147
        %v3151 = vmul.f32 %v2627, %v3147
        %v3152 = vmul.f32 %v2630, %v3147
        %v3153 = vmul.f32 %v2635, %v3147
        %v3154 = vmul.f32 %v2638, %v3147
        %v3155 = vmul.f32 %v2643, %v3147
        %v3156 = vmul.f32 %v2646, %v3147
        %v3157 = vmul.f32 %v2651, %v3147
        %v3158 = vmul.f32 %v2654, %v3147
        %v3159 = vmul.f32 %v2659, %v3147
        %v3160 = vmul.f32 %v2662, %v3147
        %v3161 = vmul.f32 %v2667, %v3147
        %v3162 = vmul.f32 %v2670, %v3147
        %v3163 = vmul.f32 %v2675, %v3147
        %v3164 = vmul.f32 %v2678, %v3147
        %v3165 = vmul.f32 %v2683, %v3147
        %v3166 = vmul.f32 %v2686, %v3147
        %v3167 = vmul.f32 %v2691, %v3147
        %v3168 = vmul.f32 %v2694, %v3147
        %v3169 = vmul.f32 %v2699, %v3147
        %v3170 = vmul.f32 %v2702, %v3147
        %v3171 = vmul.f32 %v2707, %v3147
        %v3172 = vmul.f32 %v2710, %v3147
        %v3173 = vmul.f32 %v2715, %v3147
        %v3174 = vmul.f32 %v2718, %v3147
        %v3175 = vmul.f32 %v2723, %v3147
        %v3176 = vmul.f32 %v2726, %v3147
        %v3177 = vmul.f32 %v2731, %v3147
        %v3178 = vmul.f32 %v2734, %v3147
        %v3179 = vmul.f32 %v2739, %v3147
        %v3180 = vmul.f32 %v2742, %v3147
        %v3181 = vmul.f32 %v2747, %v3147
        %v3182 = vmul.f32 %v2750, %v3147
        %v3183 = vmul.f32 %v2755, %v3147
        %v3184 = vmul.f32 %v2758, %v3147
        %v3186 = vlaneseq
        %v3187 = vshrl.u32 %v3186, 7
        %v3188 = vsub.s32 0, %v3187
        %v3189 = vrot.slane %v3142, %v3188
        %v3191 = vadd.f32 %v3149, %v3189
        %v3192 = vadd.f32 %v3150, %v3189
        %v3193 = vadd.f32 %v3151, %v3189
        %v3194 = vadd.f32 %v3152, %v3189
        %v3195 = vadd.f32 %v3153, %v3189
        %v3196 = vadd.f32 %v3154, %v3189
        %v3197 = vadd.f32 %v3155, %v3189
        %v3198 = vadd.f32 %v3156, %v3189
        %v3199 = vadd.f32 %v3157, %v3189
        %v3200 = vadd.f32 %v3158, %v3189
        %v3201 = vadd.f32 %v3159, %v3189
        %v3202 = vadd.f32 %v3160, %v3189
        %v3203 = vadd.f32 %v3161, %v3189
        %v3204 = vadd.f32 %v3162, %v3189
        %v3205 = vadd.f32 %v3163, %v3189
        %v3206 = vadd.f32 %v3164, %v3189
        %v3207 = vadd.f32 %v3165, %v3189
        %v3208 = vadd.f32 %v3166, %v3189
        %v3209 = vadd.f32 %v3167, %v3189
        %v3210 = vadd.f32 %v3168, %v3189
        %v3211 = vadd.f32 %v3169, %v3189
        %v3212 = vadd.f32 %v3170, %v3189
        %v3213 = vadd.f32 %v3171, %v3189
        %v3214 = vadd.f32 %v3172, %v3189
        %v3215 = vadd.f32 %v3173, %v3189
        %v3216 = vadd.f32 %v3174, %v3189
        %v3217 = vadd.f32 %v3175, %v3189
        %v3218 = vadd.f32 %v3176, %v3189
        %v3219 = vadd.f32 %v3177, %v3189
        %v3220 = vadd.f32 %v3178, %v3189
        %v3221 = vadd.f32 %v3179, %v3189
        %v3222 = vadd.f32 %v3180, %v3189
        %v3223 = vadd.f32 %v3181, %v3189
        %v3224 = vadd.f32 %v3182, %v3189
        %v3225 = vadd.f32 %v3183, %v3189
        %v3226 = vadd.f32 %v3184, %v3189
        %v3227 = vmax.f32 %v3191, 0.0
        %v3228 = vmax.f32 %v3192, 0.0
        %v3229 = vmax.f32 %v3193, 0.0
        %v3230 = vmax.f32 %v3194, 0.0
        %v3231 = vmax.f32 %v3195, 0.0
        %v3232 = vmax.f32 %v3196, 0.0
        %v3233 = vmax.f32 %v3197, 0.0
        %v3234 = vmax.f32 %v3198, 0.0
        %v3235 = vmax.f32 %v3199, 0.0
        %v3236 = vmax.f32 %v3200, 0.0
        %v3237 = vmax.f32 %v3201, 0.0
        %v3238 = vmax.f32 %v3202, 0.0
        %v3239 = vmax.f32 %v3203, 0.0
        %v3240 = vmax.f32 %v3204, 0.0
        %v3241 = vmax.f32 %v3205, 0.0
        %v3242 = vmax.f32 %v3206, 0.0
        %v3243 = vmax.f32 %v3207, 0.0
        %v3244 = vmax.f32 %v3208, 0.0
        %v3245 = vmax.f32 %v3209, 0.0
        %v3246 = vmax.f32 %v3210, 0.0
        %v3247 = vmax.f32 %v3211, 0.0
        %v3248 = vmax.f32 %v3212, 0.0
        %v3249 = vmax.f32 %v3213, 0.0
        %v3250 = vmax.f32 %v3214, 0.0
        %v3251 = vmax.f32 %v3215, 0.0
        %v3252 = vmax.f32 %v3216, 0.0
        %v3253 = vmax.f32 %v3217, 0.0
        %v3254 = vmax.f32 %v3218, 0.0
        %v3255 = vmax.f32 %v3219, 0.0
        %v3256 = vmax.f32 %v3220, 0.0
        %v3257 = vmax.f32 %v3221, 0.0
        %v3258 = vmax.f32 %v3222, 0.0
        %v3259 = vmax.f32 %v3223, 0.0
        %v3260 = vmax.f32 %v3224, 0.0
        %v3261 = vmax.f32 %v3225, 0.0
        %v3262 = vmax.f32 %v3226, 0.0
        %v3263 = vpack.c.bf16 %v3228, %v3227
        %v3265 = vunpack.c.l.b16 %v3263
        %v3266 = vunpack.c.h.b16 %v3263
        %v3267 = vpack.c.b16 %v3265, %v3265
        %v3268 = vpack.c.b16 %v3266, %v3266
        %3271 = vst [vmem:[%s313] sm:$0xf] %v3267
        %3272 = vst [vmem:[%s313 + $0x4] sm:$0xf] %v3268
        %v3273 = vpack.c.bf16 %v3230, %v3229
        %v3274 = vpack.c.bf16 %v3231, %v3231
        %v3277 = vunpack.c.l.b16 %v3273
        %v3278 = vunpack.c.h.b16 %v3273
        %v3279 = vunpack.c.l.b16 %v3274
        %v3280 = vpack.c.b16 %v3277, %v3277
        %v3281 = vpack.c.b16 %v3278, %v3278
        %v3282 = vpack.c.b16 %v3279, %v3279
        %vm3283 = vcmask 1042432
        %vm3284 = vcmask 1046532
        %vm3285 = vmor %vm3283, %vm3284
        %v3286 = vrot.slane %v3280, 5
        %v3287 = vrot.slane %v3286, 4
        %v3288 = vrot.slane %v3281, 5
        %v3289 = vsel %vm3285, %v3287, %v3288
        %v3290 = vrot.slane %v3288, 4
        %v3291 = vrot.slane %v3282, 5
        %v3292 = vsel %vm3285, %v3290, %v3291
        %s3295 = scalar_lea.vmem %s313, 8 [#allocation7]
        %3296 = vst [vmem:[%s3295] sm:$0xf] %v3289
        %3297 = vst [vmem:[%s3295 + $0x4] sm:$0xf] %v3292
        %v3298 = vpack.c.bf16 %v3232, %v3231
        %v3299 = vpack.c.bf16 %v3233, %v3233
        %v3302 = vunpack.c.l.b16 %v3298
        %v3303 = vunpack.c.h.b16 %v3298
        %v3304 = vunpack.c.l.b16 %v3299
        %v3305 = vpack.c.b16 %v3302, %v3302
        %v3306 = vpack.c.b16 %v3303, %v3303
        %v3307 = vpack.c.b16 %v3304, %v3304
        %vm3308 = vcmask 1041408
        %vm3309 = vcmask 1045508
        %vm3310 = vmor %vm3308, %vm3309
        %v3311 = vrot.slane %v3305, 6
        %v3312 = vrot.slane %v3311, 4
        %v3313 = vrot.slane %v3306, 6
        %v3314 = vsel %vm3310, %v3312, %v3313
        %v3315 = vrot.slane %v3313, 4
        %v3316 = vrot.slane %v3307, 6
        %v3317 = vsel %vm3310, %v3315, %v3316
        %s3320 = scalar_lea.vmem %s313, 16 [#allocation7]
        %3321 = vst [vmem:[%s3320] sm:$0xf] %v3314
        %3322 = vst [vmem:[%s3320 + $0x4] sm:$0xf] %v3317
        %v3323 = vpack.c.bf16 %v3234, %v3233
        %v3324 = vpack.c.bf16 %v3235, %v3235
        %v3327 = vunpack.c.l.b16 %v3323
        %v3328 = vunpack.c.h.b16 %v3323
        %v3329 = vunpack.c.l.b16 %v3324
        %v3330 = vpack.c.b16 %v3327, %v3327
        %v3331 = vpack.c.b16 %v3328, %v3328
        %v3332 = vpack.c.b16 %v3329, %v3329
        %vm3333 = vcmask 1040384
        %vm3334 = vcmask 1044484
        %vm3335 = vmor %vm3333, %vm3334
        %v3336 = vrot.slane %v3330, 7
        %v3337 = vrot.slane %v3336, 4
        %v3338 = vrot.slane %v3331, 7
        %v3339 = vsel %vm3335, %v3337, %v3338
        %v3340 = vrot.slane %v3338, 4
        %v3341 = vrot.slane %v3332, 7
        %v3342 = vsel %vm3335, %v3340, %v3341
        %s3345 = scalar_lea.vmem %s313, 24 [#allocation7]
        %3346 = vst [vmem:[%s3345] sm:$0xf] %v3339
        %3347 = vst [vmem:[%s3345 + $0x4] sm:$0xf] %v3342
        %v3348 = vpack.c.bf16 %v3237, %v3236
        %v3350 = vunpack.c.l.b16 %v3348
        %v3351 = vunpack.c.h.b16 %v3348
        %v3352 = vpack.c.b16 %v3350, %v3350
        %v3353 = vpack.c.b16 %v3351, %v3351
        %s3356 = scalar_lea.vmem %s313, 32 [#allocation7]
        %3357 = vst [vmem:[%s3356] sm:$0xf] %v3352
        %3358 = vst [vmem:[%s3356 + $0x4] sm:$0xf] %v3353
        %v3359 = vpack.c.bf16 %v3239, %v3238
        %v3360 = vpack.c.bf16 %v3240, %v3240
        %v3363 = vunpack.c.l.b16 %v3359
        %v3364 = vunpack.c.h.b16 %v3359
        %v3365 = vunpack.c.l.b16 %v3360
        %v3366 = vpack.c.b16 %v3363, %v3363
        %v3367 = vpack.c.b16 %v3364, %v3364
        %v3368 = vpack.c.b16 %v3365, %v3365
        %v3369 = vrot.slane %v3366, 5
        %v3370 = vrot.slane %v3369, 4
        %v3371 = vrot.slane %v3367, 5
        %v3372 = vsel %vm3285, %v3370, %v3371
        %v3373 = vrot.slane %v3371, 4
        %v3374 = vrot.slane %v3368, 5
        %v3375 = vsel %vm3285, %v3373, %v3374
        %s3378 = scalar_lea.vmem %s313, 40 [#allocation7]
        %3379 = vst [vmem:[%s3378] sm:$0xf] %v3372
        %3380 = vst [vmem:[%s3378 + $0x4] sm:$0xf] %v3375
        %v3381 = vpack.c.bf16 %v3241, %v3240
        %v3382 = vpack.c.bf16 %v3242, %v3242
        %v3385 = vunpack.c.l.b16 %v3381
        %v3386 = vunpack.c.h.b16 %v3381
        %v3387 = vunpack.c.l.b16 %v3382
        %v3388 = vpack.c.b16 %v3385, %v3385
        %v3389 = vpack.c.b16 %v3386, %v3386
        %v3390 = vpack.c.b16 %v3387, %v3387
        %v3391 = vrot.slane %v3388, 6
        %v3392 = vrot.slane %v3391, 4
        %v3393 = vrot.slane %v3389, 6
        %v3394 = vsel %vm3310, %v3392, %v3393
        %v3395 = vrot.slane %v3393, 4
        %v3396 = vrot.slane %v3390, 6
        %v3397 = vsel %vm3310, %v3395, %v3396
        %s3400 = scalar_lea.vmem %s313, 48 [#allocation7]
        %3401 = vst [vmem:[%s3400] sm:$0xf] %v3394
        %3402 = vst [vmem:[%s3400 + $0x4] sm:$0xf] %v3397
        %v3403 = vpack.c.bf16 %v3243, %v3242
        %v3404 = vpack.c.bf16 %v3244, %v3244
        %v3407 = vunpack.c.l.b16 %v3403
        %v3408 = vunpack.c.h.b16 %v3403
        %v3409 = vunpack.c.l.b16 %v3404
        %v3410 = vpack.c.b16 %v3407, %v3407
        %v3411 = vpack.c.b16 %v3408, %v3408
        %v3412 = vpack.c.b16 %v3409, %v3409
        %v3413 = vrot.slane %v3410, 7
        %v3414 = vrot.slane %v3413, 4
        %v3415 = vrot.slane %v3411, 7
        %v3416 = vsel %vm3335, %v3414, %v3415
        %v3417 = vrot.slane %v3415, 4
        %v3418 = vrot.slane %v3412, 7
        %v3419 = vsel %vm3335, %v3417, %v3418
        %s3422 = scalar_lea.vmem %s313, 56 [#allocation7]
        %3423 = vst [vmem:[%s3422] sm:$0xf] %v3416
        %3424 = vst [vmem:[%s3422 + $0x4] sm:$0xf] %v3419
        %v3425 = vpack.c.bf16 %v3246, %v3245
        %v3427 = vunpack.c.l.b16 %v3425
        %v3428 = vunpack.c.h.b16 %v3425
        %v3429 = vpack.c.b16 %v3427, %v3427
        %v3430 = vpack.c.b16 %v3428, %v3428
        %s3433 = scalar_lea.vmem %s313, 64 [#allocation7]
        %3434 = vst [vmem:[%s3433] sm:$0xf] %v3429
        %3435 = vst [vmem:[%s3433 + $0x4] sm:$0xf] %v3430
        %v3436 = vpack.c.bf16 %v3248, %v3247
        %v3437 = vpack.c.bf16 %v3249, %v3249
        %v3440 = vunpack.c.l.b16 %v3436
        %v3441 = vunpack.c.h.b16 %v3436
        %v3442 = vunpack.c.l.b16 %v3437
        %v3443 = vpack.c.b16 %v3440, %v3440
        %v3444 = vpack.c.b16 %v3441, %v3441
        %v3445 = vpack.c.b16 %v3442, %v3442
        %v3446 = vrot.slane %v3443, 5
        %v3447 = vrot.slane %v3446, 4
        %v3448 = vrot.slane %v3444, 5
        %v3449 = vsel %vm3285, %v3447, %v3448
        %v3450 = vrot.slane %v3448, 4
        %v3451 = vrot.slane %v3445, 5
        %v3452 = vsel %vm3285, %v3450, %v3451
        %s3455 = scalar_lea.vmem %s313, 72 [#allocation7]
        %3456 = vst [vmem:[%s3455] sm:$0xf] %v3449
        %3457 = vst [vmem:[%s3455 + $0x4] sm:$0xf] %v3452
        %v3458 = vpack.c.bf16 %v3250, %v3249
        %v3459 = vpack.c.bf16 %v3251, %v3251
        %v3462 = vunpack.c.l.b16 %v3458
        %v3463 = vunpack.c.h.b16 %v3458
        %v3464 = vunpack.c.l.b16 %v3459
        %v3465 = vpack.c.b16 %v3462, %v3462
        %v3466 = vpack.c.b16 %v3463, %v3463
        %v3467 = vpack.c.b16 %v3464, %v3464
        %v3468 = vrot.slane %v3465, 6
        %v3469 = vrot.slane %v3468, 4
        %v3470 = vrot.slane %v3466, 6
        %v3471 = vsel %vm3310, %v3469, %v3470
        %v3472 = vrot.slane %v3470, 4
        %v3473 = vrot.slane %v3467, 6
        %v3474 = vsel %vm3310, %v3472, %v3473
        %s3477 = scalar_lea.vmem %s313, 80 [#allocation7]
        %3478 = vst [vmem:[%s3477] sm:$0xf] %v3471
        %3479 = vst [vmem:[%s3477 + $0x4] sm:$0xf] %v3474
        %v3480 = vpack.c.bf16 %v3252, %v3251
        %v3481 = vpack.c.bf16 %v3253, %v3253
        %v3484 = vunpack.c.l.b16 %v3480
        %v3485 = vunpack.c.h.b16 %v3480
        %v3486 = vunpack.c.l.b16 %v3481
        %v3487 = vpack.c.b16 %v3484, %v3484
        %v3488 = vpack.c.b16 %v3485, %v3485
        %v3489 = vpack.c.b16 %v3486, %v3486
        %v3490 = vrot.slane %v3487, 7
        %v3491 = vrot.slane %v3490, 4
        %v3492 = vrot.slane %v3488, 7
        %v3493 = vsel %vm3335, %v3491, %v3492
        %v3494 = vrot.slane %v3492, 4
        %v3495 = vrot.slane %v3489, 7
        %v3496 = vsel %vm3335, %v3494, %v3495
        %s3499 = scalar_lea.vmem %s313, 88 [#allocation7]
        %3500 = vst [vmem:[%s3499] sm:$0xf] %v3493
        %3501 = vst [vmem:[%s3499 + $0x4] sm:$0xf] %v3496
        %v3502 = vpack.c.bf16 %v3255, %v3254
        %v3504 = vunpack.c.l.b16 %v3502
        %v3505 = vunpack.c.h.b16 %v3502
        %v3506 = vpack.c.b16 %v3504, %v3504
        %v3507 = vpack.c.b16 %v3505, %v3505
        %s3510 = scalar_lea.vmem %s313, 96 [#allocation7]
        %3511 = vst [vmem:[%s3510] sm:$0xf] %v3506
        %3512 = vst [vmem:[%s3510 + $0x4] sm:$0xf] %v3507
        %v3513 = vpack.c.bf16 %v3257, %v3256
        %v3514 = vpack.c.bf16 %v3258, %v3258
        %v3517 = vunpack.c.l.b16 %v3513
        %v3518 = vunpack.c.h.b16 %v3513
        %v3519 = vunpack.c.l.b16 %v3514
        %v3520 = vpack.c.b16 %v3517, %v3517
        %v3521 = vpack.c.b16 %v3518, %v3518
        %v3522 = vpack.c.b16 %v3519, %v3519
        %v3523 = vrot.slane %v3520, 5
        %v3524 = vrot.slane %v3523, 4
        %v3525 = vrot.slane %v3521, 5
        %v3526 = vsel %vm3285, %v3524, %v3525
        %v3527 = vrot.slane %v3525, 4
        %v3528 = vrot.slane %v3522, 5
        %v3529 = vsel %vm3285, %v3527, %v3528
        %s3532 = scalar_lea.vmem %s313, 104 [#allocation7]
        %3533 = vst [vmem:[%s3532] sm:$0xf] %v3526
        %3534 = vst [vmem:[%s3532 + $0x4] sm:$0xf] %v3529
        %v3535 = vpack.c.bf16 %v3259, %v3258
        %v3536 = vpack.c.bf16 %v3260, %v3260
        %v3539 = vunpack.c.l.b16 %v3535
        %v3540 = vunpack.c.h.b16 %v3535
        %v3541 = vunpack.c.l.b16 %v3536
        %v3542 = vpack.c.b16 %v3539, %v3539
        %v3543 = vpack.c.b16 %v3540, %v3540
        %v3544 = vpack.c.b16 %v3541, %v3541
        %v3545 = vrot.slane %v3542, 6
        %v3546 = vrot.slane %v3545, 4
        %v3547 = vrot.slane %v3543, 6
        %v3548 = vsel %vm3310, %v3546, %v3547
        %v3549 = vrot.slane %v3547, 4
        %v3550 = vrot.slane %v3544, 6
        %v3551 = vsel %vm3310, %v3549, %v3550
        %s3554 = scalar_lea.vmem %s313, 112 [#allocation7]
        %3555 = vst [vmem:[%s3554] sm:$0xf] %v3548
        %3556 = vst [vmem:[%s3554 + $0x4] sm:$0xf] %v3551
        %v3557 = vpack.c.bf16 %v3261, %v3260
        %v3558 = vpack.c.bf16 %v3262, %v3262
        %v3561 = vunpack.c.l.b16 %v3557
        %v3562 = vunpack.c.h.b16 %v3557
        %v3563 = vunpack.c.l.b16 %v3558
        %v3564 = vpack.c.b16 %v3561, %v3561
        %v3565 = vpack.c.b16 %v3562, %v3562
        %v3566 = vpack.c.b16 %v3563, %v3563
        %v3567 = vrot.slane %v3564, 7
        %v3568 = vrot.slane %v3567, 4
        %v3569 = vrot.slane %v3565, 7
        %v3570 = vsel %vm3335, %v3568, %v3569
        %v3571 = vrot.slane %v3569, 4
        %v3572 = vrot.slane %v3566, 7
        %v3573 = vsel %vm3335, %v3571, %v3572
        %s3576 = scalar_lea.vmem %s313, 120 [#allocation7]
        %3577 = vst [vmem:[%s3576] sm:$0xf] %v3570
        %3578 = vst [vmem:[%s3576 + $0x4] sm:$0xf] %v3573
        %s3579 = sand.u32 %s194, 1
        %s3580 = scalar_lea.sflag [#allocation6], %s3579
        %s3581 = sand.u32 %s194, 1
        %s3582 = smul.addr %s3581, 128
        %s3583 = scalar_lea.vmem [#allocation7], %s3582
        // Predicated region
        $region49: #{_conv3x3_in_relu_pallas.1} parent=43 // pred_check
          %p3584 = pneg %p204
        $region50: #{_conv3x3_in_relu_pallas.1} parent=43 // pred_check_branch
          %3586 = sbr.rel (%p3584) target = $region52
        $region51: #{_conv3x3_in_relu_pallas.1} parent=43 // pred_region
          %s3588 = ssub.s32 2048, 2048
          %3589 = vsyncadd %s3580, %s3588
          %s3590 = smul.addr %s25, 32
          %s3591 = sadd.s32 %s26, %s3590
          %s3592 = smul.addr %s3591, 64
          %s3593 = scalar_lea.hbm %s6, %s3592
          %s3594 = sshll.u32 %s3583, 4
          %s3595 = int_to_ptr.vmem [resolvable:$true] %s3594
          %3600 = dma.vmem_to_hbm [thread:$0]  %s3595, 2048, %s3593, %s3580, 64, 64, 4
        $region52: #{_conv3x3_in_relu_pallas.1} parent=43 // pred_fallthru
          _
      $region44: #{_conv3x3_in_relu_pallas.1} parent=5 // pred_fallthru
        _
      %p3601 = scmp.le.s32.totalorder 2, %s16
      // Predicated region
      $region53: #{_conv3x3_in_relu_pallas.1} parent=5 // pred_check
        %p3602 = pneg %p3601
      $region54: #{_conv3x3_in_relu_pallas.1} parent=5 // pred_check_branch
        %3604 = sbr.rel (%p3602) target = $region56
      $region55: #{_conv3x3_in_relu_pallas.1} parent=5 // pred_region
        %s3605 = ssub.s32 %s16, 2
        // Predicated region
        $region57: #{_conv3x3_in_relu_pallas.1} parent=55 // pred_check
          %p3606 = pneg %p210
        $region58: #{_conv3x3_in_relu_pallas.1} parent=55 // pred_check_branch
          %3608 = sbr.rel (%p3606) target = $region60
        $region59: #{_conv3x3_in_relu_pallas.1} parent=55 // pred_region
          %s3609 = sand.u32 %s195, 1
          %s3610 = scalar_lea.sflag [#allocation6], %s3609
          %s3611 = sand.u32 %s195, 1
          %s3612 = smul.addr %s3611, 128
          %s3613 = scalar_lea.vmem [#allocation7], %s3612
          %3614 = dma.done %s3610, 2048
        $region60: #{_conv3x3_in_relu_pallas.1} parent=55 // pred_fallthru
          _
      $region56: #{_conv3x3_in_relu_pallas.1} parent=5 // pred_fallthru
        _
    $region6: #{_conv3x3_in_relu_pallas.1} parent=1 // loop_footer
      %s20 = sadd.s32 1, %s16
    $region7: #{_conv3x3_in_relu_pallas.1} parent=1 // loop_footer_branch
      %15 = sbr.rel target = $region3
    $region8: #{_conv3x3_in_relu_pallas.1} parent=1 // loop_exit
      _
    %3615 = vsyncpa [#allocation5], 1
    %s3616 = scalar_lea.sflag [#allocation5], 1
    %3617 = vsyncpa %s3616, 1
    %3618 = vsyncpa [#allocation6], 1
    %s3619 = scalar_lea.sflag [#allocation6], 1
    %3620 = vsyncpa %s3619, 1

</llo_original>
